<compile_context>
chip_gen: v5e
topology: v5e:2x2
jax: 0.10.0
libtpu: 0.0.40
codegen_flags: <defaults>
</compile_context>

<pallas_src>
import functools

import jax
import jax.numpy as jnp
import numpy as np
from jax import lax
from jax.experimental import pallas as pl
from jax.experimental.pallas import tpu as pltpu


# ----------------------------------------------------------------------------
# Kernel
# ----------------------------------------------------------------------------
def _fluid_layer(src_ref, w_ref, pp_ref, pm_ref, v_in_ref, v_out_ref,
                 pres_ref, dst_ref, *, batch, n, diffusion, viscosity,
                 time_steps, apply_tanh):
    """One FullyFluidLayer, traced inline inside the fused network kernel.

    pressure = src @ W for the whole batch, then a sequential per-sample
    time-step loop; velocity_x / velocity_y (rows 0 / 1 of v_*_ref) carry
    across samples exactly like the in-place-mutated torch nn.Parameters.
    """
    # Batched pressure matmul on the MXU: (B, K) @ (K, N) -> (B, N).
    pres_ref[...] = jnp.dot(src_ref[...], w_ref[...],
                            preferred_element_type=jnp.float32)

    # Working copy of the velocities; the final values are the updated params.
    v_out_ref[...] = v_in_ref[...]

    lane_aligned = (n % 128) == 0
    if not lane_aligned:
        # torch.roll as matmuls with constant permutation matrices (hoisted out
        # of all loops).  The two per-step matmuls are independent of each
        # other, so they pipeline back-to-back through the MXU.
        pplus = pp_ref[...]    # state @ pplus  == torch.roll(state, +1, dim=1)
        pminus = pm_ref[...]   # state @ pminus == torch.roll(state, -1, dim=1)

    def rolls(state):
        if lane_aligned:
            # Lane-aligned widths (e.g. real hidden_size=256): XLU lane
            # rotation, keeps the serial time-step chain off the MXU entirely.
            return (pltpu.roll(state, 1, axis=1),
                    pltpu.roll(state, -1, axis=1))
        r_plus = jnp.dot(state, pplus, preferred_element_type=jnp.float32)
        r_minus = jnp.dot(state, pminus, preferred_element_type=jnp.float32)
        return r_plus, r_minus

    def step(_, carry):
        state, vx, vy = carry
        r_plus, r_minus = rolls(state)
        d_plus = r_plus - state
        d_minus = r_minus - state
        laplacian = d_plus + d_minus          # roll(+1) + roll(-1) - 2 * state
        vx = jnp.clip(vx - diffusion * d_minus, -1.0, 1.0)
        vy = jnp.clip(vy - diffusion * d_plus, -1.0, 1.0)
        state = (state + diffusion * laplacian - viscosity * state
                 - vx * d_minus - vy * d_plus)  # - advection_x - advection_y
        return jnp.clip(state, -10.0, 10.0), vx, vy

    # Batch loop is inherently sequential: velocity carries sample -> sample,
    # exactly as in the PyTorch reference (for i in range(batch_size) with
    # in-place velocity updates).
    @pl.loop(0, batch)
    def _(i):
        state0 = pres_ref[pl.ds(i, 1), :]
        carry = (state0, v_out_ref[0:1, :], v_out_ref[1:2, :])
        # Unrolled: short fixed trip count, gives the scheduler full ILP view.
        state, vx, vy = lax.fori_loop(0, time_steps, step, carry, unroll=True)
        v_out_ref[0:1, :] = vx
        v_out_ref[1:2, :] = vy
        dst_ref[pl.ds(i, 1), :] = jnp.tanh(state) if apply_tanh else state


def _make_network_kernel(batch, hidden, out_size, diffusion, viscosity,
                         time_steps):
    layer = functools.partial(_fluid_layer, batch=batch, diffusion=diffusion,
                              viscosity=viscosity, time_steps=time_steps)

    def kernel(x_ref, w1_ref, w2_ref, w3_ref,
               pp_h_ref, pm_h_ref, pp_o_ref, pm_o_ref,
               v1_ref, v2_ref, v3_ref,
               o_ref, v1o_ref, v2o_ref, v3o_ref,
               h1_ref, h2_ref, pres_h_ref, pres_o_ref, logits_ref):
        # layer1 (input -> hidden) + tanh
        layer(x_ref, w1_ref, pp_h_ref, pm_h_ref, v1_ref, v1o_ref,
              pres_h_ref, h1_ref, n=hidden, apply_tanh=True)
        # layer2 (hidden -> hidden) + tanh
        layer(h1_ref, w2_ref, pp_h_ref, pm_h_ref, v2_ref, v2o_ref,
              pres_h_ref, h2_ref, n=hidden, apply_tanh=True)
        # output layer (hidden -> out), no tanh
        layer(h2_ref, w3_ref, pp_o_ref, pm_o_ref, v3_ref, v3o_ref,
              pres_o_ref, logits_ref, n=out_size, apply_tanh=False)
        # fused log_softmax epilogue
        z = logits_ref[...]
        z = z - jnp.max(z, axis=-1, keepdims=True)
        o_ref[...] = z - jnp.log(jnp.sum(jnp.exp(z), axis=-1, keepdims=True))

    return kernel


def _roll_matrices(n):
    """(pplus, pminus) with state @ pplus == torch.roll(state, +1, dim=1) and
    state @ pminus == torch.roll(state, -1, dim=1).  For lane-aligned widths
    the kernel uses XLU lane rolls instead, so only tiny unused placeholders
    are passed (avoids DMAing useless (n, n) matrices)."""
    if n % 128 == 0:
        z = jnp.zeros((8, 128), jnp.float32)
        return z, z
    eye = jnp.eye(n, dtype=jnp.float32)
    return jnp.roll(eye, 1, axis=1), jnp.roll(eye, -1, axis=1)


# ----------------------------------------------------------------------------
# Wrapper
# ----------------------------------------------------------------------------
def init_params(key, input_size, hidden_size, output_size):
    k1, k2, k3 = jax.random.split(key, 3)
    return {
        "w1": jax.random.normal(k1, (input_size, hidden_size), jnp.float32),
        "w2": jax.random.normal(k2, (hidden_size, hidden_size), jnp.float32),
        "w3": jax.random.normal(k3, (hidden_size, output_size), jnp.float32),
    }


def init_velocities(hidden_size, output_size):
    # Rows: [velocity_x; velocity_y] per layer, zero-initialised like the torch
    # nn.Parameters.  Feed the returned values back in to emulate the in-place
    # parameter mutation across forward calls.
    return (jnp.zeros((2, hidden_size), jnp.float32),
            jnp.zeros((2, hidden_size), jnp.float32),
            jnp.zeros((2, output_size), jnp.float32))


def fully_fluid_network(x, params, velocities, *, diffusion=0.01,
                        viscosity=0.001, time_steps=10):
    """FullyFluidNetwork forward as one fused Pallas TPU kernel.

    Returns (log_probs, updated_velocities)."""
    x = jnp.asarray(x, jnp.float32)
    batch, in_size = x.shape
    w1 = jnp.asarray(params["w1"], jnp.float32)
    w2 = jnp.asarray(params["w2"], jnp.float32)
    w3 = jnp.asarray(params["w3"], jnp.float32)
    hidden = w1.shape[1]
    out_size = w3.shape[1]
    assert w1.shape == (in_size, hidden)
    assert w2.shape == (hidden, hidden)
    assert w3.shape == (hidden, out_size)
    v1, v2, v3 = (jnp.asarray(v, jnp.float32) for v in velocities)

    pp_h, pm_h = _roll_matrices(hidden)
    pp_o, pm_o = _roll_matrices(out_size)

    kernel = _make_network_kernel(batch, hidden, out_size, float(diffusion),
                                  float(viscosity), int(time_steps))

    def full_spec(shape):
        return pl.BlockSpec(shape, lambda i, _n=len(shape): (0,) * _n)

    out_shape = (
        jax.ShapeDtypeStruct((batch, out_size), jnp.float32),  # log-probs
        jax.ShapeDtypeStruct((2, hidden), jnp.float32),        # layer1 velocities
        jax.ShapeDtypeStruct((2, hidden), jnp.float32),        # layer2 velocities
        jax.ShapeDtypeStruct((2, out_size), jnp.float32),      # output velocities
    )

    inputs = (x, w1, w2, w3, pp_h, pm_h, pp_o, pm_o, v1, v2, v3)

    logp, v1n, v2n, v3n = pl.pallas_call(
        kernel,
        out_shape=out_shape,
        # One grid step: the whole network runs fused with every operand,
        # intermediate activation and velocity resident in VMEM.
        grid=(1,),
        in_specs=[full_spec(a.shape) for a in inputs],
        out_specs=tuple(full_spec(s.shape) for s in out_shape),
        scratch_shapes=[
            pltpu.VMEM((batch, hidden), jnp.float32),    # h1 = tanh(layer1)
            pltpu.VMEM((batch, hidden), jnp.float32),    # h2 = tanh(layer2)
            pltpu.VMEM((batch, hidden), jnp.float32),    # pressure, layers 1&2
            pltpu.VMEM((batch, out_size), jnp.float32),  # pressure, out layer
            pltpu.VMEM((batch, out_size), jnp.float32),  # logits
        ],
        compiler_params=pltpu.CompilerParams(
            dimension_semantics=("arbitrary",)),
    )(*inputs)

    return logp, (v1n, v2n, v3n)


# ----------------------------------------------------------------------------
# float64 NumPy reference (line-by-line transcription of the torch module)
# ----------------------------------------------------------------------------
def _reference_forward(x, params, velocities, diffusion, viscosity, time_steps):
    x = np.asarray(x, np.float64)
    ws = [np.asarray(params[k], np.float64) for k in ("w1", "w2", "w3")]
    vels = [np.asarray(v, np.float64).copy() for v in velocities]

    def layer(src, w, vel):
        pressure = src @ w
        vx = vel[0:1, :].copy()
        vy = vel[1:2, :].copy()
        outs = []
        for i in range(src.shape[0]):
            state = pressure[i:i + 1, :].copy()
            for _ in range(time_steps):
                r_plus = np.roll(state, 1, axis=1)
                r_minus = np.roll(state, -1, axis=1)
                laplacian = r_plus + r_minus - 2.0 * state
                vx = np.clip(vx - diffusion * (r_minus - state), -1.0, 1.0)
                vy = np.clip(vy - diffusion * (r_plus - state), -1.0, 1.0)
                advection_x = vx * (r_minus - state)
                advection_y = vy * (r_plus - state)
                state = (state + diffusion * laplacian - viscosity * state
                         - advection_x - advection_y)
                state = np.clip(state, -10.0, 10.0)
            outs.append(state)
        return np.concatenate(outs, 0), np.concatenate([vx, vy], 0)

    h, v1n = layer(x, ws[0], vels[0]); h = np.tanh(h)
    h, v2n = layer(h, ws[1], vels[1]); h = np.tanh(h)
    z, v3n = layer(h, ws[2], vels[2])
    z = z - z.max(-1, keepdims=True)
    logp = z - np.log(np.exp(z).sum(-1, keepdims=True))
    return logp, (v1n, v2n, v3n)


# ----------------------------------------------------------------------------
# Main
# ----------------------------------------------------------------------------
if __name__ == "__main__":
    # Small shapes consistent with the module's (B, in) -> (B, hidden) -> (B, out)
    # fully-connected structure (real model: 784 -> 256 -> 256 -> 10, T=50).
    batch = 2
    input_size = 64
    hidden_size = 32
    output_size = 10
    time_steps = 10
    diffusion = 0.01
    viscosity = 0.001

    key = jax.random.PRNGKey(0)
    kx, kp = jax.random.split(key)
    x = jax.random.normal(kx, (batch, input_size), jnp.float32)
    params = init_params(kp, input_size, hidden_size, output_size)
    velocities = init_velocities(hidden_size, output_size)

    fwd = jax.jit(functools.partial(fully_fluid_network, diffusion=diffusion,
                                    viscosity=viscosity, time_steps=time_steps))
    logp, new_vel = fwd(x, params, velocities)
    logp = jax.block_until_ready(logp)

    # Structural sanity checks: shapes, finiteness, normalised log-softmax,
    # clipped + non-trivially-updated velocities.
    assert logp.shape == (batch, output_size)
    assert bool(jnp.all(jnp.isfinite(logp)))
    row_sums = jnp.sum(jnp.exp(logp), axis=-1)
    assert bool(jnp.all(jnp.abs(row_sums - 1.0) < 1e-3))
    for v in new_vel:
        assert bool(jnp.all(jnp.isfinite(v)))
        assert bool(jnp.all(jnp.abs(v) <= 1.0 + 1e-5))   # clamp(-1, 1)
    assert bool(jnp.any(jnp.abs(new_vel[0]) > 1e-6))     # dynamics actually ran

    # Numerical check against the float64 NumPy transcription of the module.
    ref_logp, ref_vel = _reference_forward(x, params, velocities,
                                           diffusion, viscosity, time_steps)
    assert float(np.max(np.abs(np.asarray(logp) - ref_logp))) < 2e-2
    for got, want in zip(new_vel, ref_vel):
        assert float(np.max(np.abs(np.asarray(got) - want))) < 2e-2

    print("KERNEL_OK")
</pallas_src>

<mosaic_0001>
module attributes {stable_mosaic.version = 11 : i64} {
  func.func @kernel(%arg0: i32, %arg1: memref<2x64xf32, #tpu.memory_space<vmem>>, %arg2: memref<64x32xf32, #tpu.memory_space<vmem>>, %arg3: memref<32x32xf32, #tpu.memory_space<vmem>>, %arg4: memref<32x10xf32, #tpu.memory_space<vmem>>, %arg5: memref<32x32xf32, #tpu.memory_space<vmem>>, %arg6: memref<32x32xf32, #tpu.memory_space<vmem>>, %arg7: memref<10x10xf32, #tpu.memory_space<vmem>>, %arg8: memref<10x10xf32, #tpu.memory_space<vmem>>, %arg9: memref<2x32xf32, #tpu.memory_space<vmem>>, %arg10: memref<2x32xf32, #tpu.memory_space<vmem>>, %arg11: memref<2x10xf32, #tpu.memory_space<vmem>>, %arg12: memref<2x10xf32, #tpu.memory_space<vmem>>, %arg13: memref<2x32xf32, #tpu.memory_space<vmem>>, %arg14: memref<2x32xf32, #tpu.memory_space<vmem>>, %arg15: memref<2x10xf32, #tpu.memory_space<vmem>>, %arg16: memref<2x32xf32, #tpu.memory_space<vmem>>, %arg17: memref<2x32xf32, #tpu.memory_space<vmem>>, %arg18: memref<2x32xf32, #tpu.memory_space<vmem>>, %arg19: memref<2x10xf32, #tpu.memory_space<vmem>>, %arg20: memref<2x10xf32, #tpu.memory_space<vmem>>) attributes {dimension_semantics = [#tpu.dimension_semantics<arbitrary>], iteration_bounds = array<i64: 1>, scalar_prefetch = 0 : i64, scratch_operands = 5 : i64, tpu.core_type = #tpu.core_type<tc>, window_params = [{pipeline_mode = #tpu.pipeline_mode<synchronous>, transform_indices = @transform_0, window_bounds = array<i64: 2, 64>}, {pipeline_mode = #tpu.pipeline_mode<synchronous>, transform_indices = @transform_1, window_bounds = array<i64: 64, 32>}, {pipeline_mode = #tpu.pipeline_mode<synchronous>, transform_indices = @transform_2, window_bounds = array<i64: 32, 32>}, {pipeline_mode = #tpu.pipeline_mode<synchronous>, transform_indices = @transform_3, window_bounds = array<i64: 32, 10>}, {pipeline_mode = #tpu.pipeline_mode<synchronous>, transform_indices = @transform_4, window_bounds = array<i64: 32, 32>}, {pipeline_mode = #tpu.pipeline_mode<synchronous>, transform_indices = @transform_5, window_bounds = array<i64: 32, 32>}, {pipeline_mode = #tpu.pipeline_mode<synchronous>, transform_indices = @transform_6, window_bounds = array<i64: 10, 10>}, {pipeline_mode = #tpu.pipeline_mode<synchronous>, transform_indices = @transform_7, window_bounds = array<i64: 10, 10>}, {pipeline_mode = #tpu.pipeline_mode<synchronous>, transform_indices = @transform_8, window_bounds = array<i64: 2, 32>}, {pipeline_mode = #tpu.pipeline_mode<synchronous>, transform_indices = @transform_9, window_bounds = array<i64: 2, 32>}, {pipeline_mode = #tpu.pipeline_mode<synchronous>, transform_indices = @transform_10, window_bounds = array<i64: 2, 10>}, {pipeline_mode = #tpu.pipeline_mode<synchronous>, transform_indices = @transform_11, window_bounds = array<i64: 2, 10>}, {pipeline_mode = #tpu.pipeline_mode<synchronous>, transform_indices = @transform_12, window_bounds = array<i64: 2, 32>}, {pipeline_mode = #tpu.pipeline_mode<synchronous>, transform_indices = @transform_13, window_bounds = array<i64: 2, 32>}, {pipeline_mode = #tpu.pipeline_mode<synchronous>, transform_indices = @transform_14, window_bounds = array<i64: 2, 10>}]} {
    %c0 = arith.constant 0 : index
    %c0_0 = arith.constant 0 : index
    %0 = vector.load %arg1[%c0, %c0_0] : memref<2x64xf32, #tpu.memory_space<vmem>>, vector<2x64xf32>
    %c0_1 = arith.constant 0 : index
    %c0_2 = arith.constant 0 : index
    %1 = vector.load %arg2[%c0_1, %c0_2] : memref<64x32xf32, #tpu.memory_space<vmem>>, vector<64x32xf32>
    %cst = arith.constant dense<0.000000e+00> : vector<2x32xf32>
    %2 = tpu.matmul %0, %1, %cst {dimension_numbers = #tpu.dot_dimension_numbers<[1], [0], [0], [1], [0, 0, 1, 1], [], []>} : vector<2x64xf32>, vector<64x32xf32>, vector<2x32xf32> -> vector<2x32xf32>
    %c0_3 = arith.constant 0 : index
    %c0_4 = arith.constant 0 : index
    %3 = vector.load %arg18[%c0_3, %c0_4] : memref<2x32xf32, #tpu.memory_space<vmem>>, vector<2x32xf32>
    tpu.vector_store %arg18[%c0_3, %c0_4], %2 {strides = array<i32>} : memref<2x32xf32, #tpu.memory_space<vmem>>, vector<2x32xf32>,
    %c0_5 = arith.constant 0 : index
    %c0_6 = arith.constant 0 : index
    %4 = vector.load %arg9[%c0_5, %c0_6] : memref<2x32xf32, #tpu.memory_space<vmem>>, vector<2x32xf32>
    %c0_7 = arith.constant 0 : index
    %c0_8 = arith.constant 0 : index
    %5 = vector.load %arg13[%c0_7, %c0_8] : memref<2x32xf32, #tpu.memory_space<vmem>>, vector<2x32xf32>
    tpu.vector_store %arg13[%c0_7, %c0_8], %4 {strides = array<i32>} : memref<2x32xf32, #tpu.memory_space<vmem>>, vector<2x32xf32>,
    %c0_9 = arith.constant 0 : index
    %c0_10 = arith.constant 0 : index
    %6 = vector.load %arg5[%c0_9, %c0_10] : memref<32x32xf32, #tpu.memory_space<vmem>>, vector<32x32xf32>
    %c0_11 = arith.constant 0 : index
    %c0_12 = arith.constant 0 : index
    %7 = vector.load %arg6[%c0_11, %c0_12] : memref<32x32xf32, #tpu.memory_space<vmem>>, vector<32x32xf32>
    %c0_i32 = arith.constant 0 : i32
    %c2_i32 = arith.constant 2 : i32
    %8 = arith.addi %c0_i32, %c2_i32 : i32
    %c1_i32 = arith.constant 1 : i32
    scf.for %arg21 = %c0_i32 to %8 step %c1_i32  : i32 {
      %c1_i32_58 = arith.constant 1 : i32
      %39 = arith.muli %arg21, %c1_i32_58 : i32
      %c0_i32_59 = arith.constant 0 : i32
      %40 = arith.addi %c0_i32_59, %39 : i32
      %41 = arith.index_cast %40 : i32 to index
      %c0_60 = arith.constant 0 : index
      %42 = vector.load %arg18[%41, %c0_60] : memref<2x32xf32, #tpu.memory_space<vmem>>, vector<1x32xf32>
      %c0_61 = arith.constant 0 : index
      %c0_62 = arith.constant 0 : index
      %43 = vector.load %arg13[%c0_61, %c0_62] : memref<2x32xf32, #tpu.memory_space<vmem>>, vector<1x32xf32>
      %c1 = arith.constant 1 : index
      %c0_63 = arith.constant 0 : index
      %44 = vector.load %arg13[%c1, %c0_63] : memref<2x32xf32, #tpu.memory_space<vmem>>, vector<1x32xf32>
      %c0_i32_64 = arith.constant 0 : i32
      %cst_65 = arith.constant dense<0.000000e+00> : vector<1x32xf32>
      %45 = tpu.matmul %42, %6, %cst_65 {dimension_numbers = #tpu.dot_dimension_numbers<[1], [0], [0], [1], [0, 0, 1, 1], [], []>} : vector<1x32xf32>, vector<32x32xf32>, vector<1x32xf32> -> vector<1x32xf32>
      %cst_66 = arith.constant dense<0.000000e+00> : vector<1x32xf32>
      %46 = tpu.matmul %42, %7, %cst_66 {dimension_numbers = #tpu.dot_dimension_numbers<[1], [0], [0], [1], [0, 0, 1, 1], [], []>} : vector<1x32xf32>, vector<32x32xf32>, vector<1x32xf32> -> vector<1x32xf32>
      %47 = arith.subf %45, %42 : vector<1x32xf32>
      %48 = arith.subf %46, %42 : vector<1x32xf32>
      %49 = arith.addf %47, %48 : vector<1x32xf32>
      %cst_67 = arith.constant 0.00999999977 : f32
      %50 = vector.broadcast %cst_67 : f32 to vector<1x32xf32>
      %51 = arith.mulf %50, %48 : vector<1x32xf32>
      %52 = arith.subf %43, %51 : vector<1x32xf32>
      %cst_68 = arith.constant -1.000000e+00 : f32
      %cst_69 = arith.constant 1.000000e+00 : f32
      %53 = vector.broadcast %cst_68 : f32 to vector<1x32xf32>
      %54 = arith.maximumf %53, %52 : vector<1x32xf32>
      %55 = vector.broadcast %cst_69 : f32 to vector<1x32xf32>
      %56 = arith.minimumf %55, %54 : vector<1x32xf32>
      %cst_70 = arith.constant 0.00999999977 : f32
      %57 = vector.broadcast %cst_70 : f32 to vector<1x32xf32>
      %58 = arith.mulf %57, %47 : vector<1x32xf32>
      %59 = arith.subf %44, %58 : vector<1x32xf32>
      %cst_71 = arith.constant -1.000000e+00 : f32
      %cst_72 = arith.constant 1.000000e+00 : f32
      %60 = vector.broadcast %cst_71 : f32 to vector<1x32xf32>
      %61 = arith.maximumf %60, %59 : vector<1x32xf32>
      %62 = vector.broadcast %cst_72 : f32 to vector<1x32xf32>
      %63 = arith.minimumf %62, %61 : vector<1x32xf32>
      %cst_73 = arith.constant 0.00999999977 : f32
      %64 = vector.broadcast %cst_73 : f32 to vector<1x32xf32>
      %65 = arith.mulf %64, %49 : vector<1x32xf32>
      %66 = arith.addf %42, %65 : vector<1x32xf32>
      %cst_74 = arith.constant 1.000000e-03 : f32
      %67 = vector.broadcast %cst_74 : f32 to vector<1x32xf32>
      %68 = arith.mulf %67, %42 : vector<1x32xf32>
      %69 = arith.subf %66, %68 : vector<1x32xf32>
      %70 = arith.mulf %56, %48 : vector<1x32xf32>
      %71 = arith.subf %69, %70 : vector<1x32xf32>
      %72 = arith.mulf %63, %47 : vector<1x32xf32>
      %73 = arith.subf %71, %72 : vector<1x32xf32>
      %cst_75 = arith.constant -1.000000e+01 : f32
      %cst_76 = arith.constant 1.000000e+01 : f32
      %74 = vector.broadcast %cst_75 : f32 to vector<1x32xf32>
      %75 = arith.maximumf %74, %73 : vector<1x32xf32>
      %76 = vector.broadcast %cst_76 : f32 to vector<1x32xf32>
      %77 = arith.minimumf %76, %75 : vector<1x32xf32>
      %c1_i32_77 = arith.constant 1 : i32
      %cst_78 = arith.constant dense<0.000000e+00> : vector<1x32xf32>
      %78 = tpu.matmul %77, %6, %cst_78 {dimension_numbers = #tpu.dot_dimension_numbers<[1], [0], [0], [1], [0, 0, 1, 1], [], []>} : vector<1x32xf32>, vector<32x32xf32>, vector<1x32xf32> -> vector<1x32xf32>
      %cst_79 = arith.constant dense<0.000000e+00> : vector<1x32xf32>
      %79 = tpu.matmul %77, %7, %cst_79 {dimension_numbers = #tpu.dot_dimension_numbers<[1], [0], [0], [1], [0, 0, 1, 1], [], []>} : vector<1x32xf32>, vector<32x32xf32>, vector<1x32xf32> -> vector<1x32xf32>
      %80 = arith.subf %78, %77 : vector<1x32xf32>
      %81 = arith.subf %79, %77 : vector<1x32xf32>
      %82 = arith.addf %80, %81 : vector<1x32xf32>
      %cst_80 = arith.constant 0.00999999977 : f32
      %83 = vector.broadcast %cst_80 : f32 to vector<1x32xf32>
      %84 = arith.mulf %83, %81 : vector<1x32xf32>
      %85 = arith.subf %56, %84 : vector<1x32xf32>
      %cst_81 = arith.constant -1.000000e+00 : f32
      %cst_82 = arith.constant 1.000000e+00 : f32
      %86 = vector.broadcast %cst_81 : f32 to vector<1x32xf32>
      %87 = arith.maximumf %86, %85 : vector<1x32xf32>
      %88 = vector.broadcast %cst_82 : f32 to vector<1x32xf32>
      %89 = arith.minimumf %88, %87 : vector<1x32xf32>
      %cst_83 = arith.constant 0.00999999977 : f32
      %90 = vector.broadcast %cst_83 : f32 to vector<1x32xf32>
      %91 = arith.mulf %90, %80 : vector<1x32xf32>
      %92 = arith.subf %63, %91 : vector<1x32xf32>
      %cst_84 = arith.constant -1.000000e+00 : f32
      %cst_85 = arith.constant 1.000000e+00 : f32
      %93 = vector.broadcast %cst_84 : f32 to vector<1x32xf32>
      %94 = arith.maximumf %93, %92 : vector<1x32xf32>
      %95 = vector.broadcast %cst_85 : f32 to vector<1x32xf32>
      %96 = arith.minimumf %95, %94 : vector<1x32xf32>
      %cst_86 = arith.constant 0.00999999977 : f32
      %97 = vector.broadcast %cst_86 : f32 to vector<1x32xf32>
      %98 = arith.mulf %97, %82 : vector<1x32xf32>
      %99 = arith.addf %77, %98 : vector<1x32xf32>
      %cst_87 = arith.constant 1.000000e-03 : f32
      %100 = vector.broadcast %cst_87 : f32 to vector<1x32xf32>
      %101 = arith.mulf %100, %77 : vector<1x32xf32>
      %102 = arith.subf %99, %101 : vector<1x32xf32>
      %103 = arith.mulf %89, %81 : vector<1x32xf32>
      %104 = arith.subf %102, %103 : vector<1x32xf32>
      %105 = arith.mulf %96, %80 : vector<1x32xf32>
      %106 = arith.subf %104, %105 : vector<1x32xf32>
      %cst_88 = arith.constant -1.000000e+01 : f32
      %cst_89 = arith.constant 1.000000e+01 : f32
      %107 = vector.broadcast %cst_88 : f32 to vector<1x32xf32>
      %108 = arith.maximumf %107, %106 : vector<1x32xf32>
      %109 = vector.broadcast %cst_89 : f32 to vector<1x32xf32>
      %110 = arith.minimumf %109, %108 : vector<1x32xf32>
      %c2_i32_90 = arith.constant 2 : i32
      %cst_91 = arith.constant dense<0.000000e+00> : vector<1x32xf32>
      %111 = tpu.matmul %110, %6, %cst_91 {dimension_numbers = #tpu.dot_dimension_numbers<[1], [0], [0], [1], [0, 0, 1, 1], [], []>} : vector<1x32xf32>, vector<32x32xf32>, vector<1x32xf32> -> vector<1x32xf32>
      %cst_92 = arith.constant dense<0.000000e+00> : vector<1x32xf32>
      %112 = tpu.matmul %110, %7, %cst_92 {dimension_numbers = #tpu.dot_dimension_numbers<[1], [0], [0], [1], [0, 0, 1, 1], [], []>} : vector<1x32xf32>, vector<32x32xf32>, vector<1x32xf32> -> vector<1x32xf32>
      %113 = arith.subf %111, %110 : vector<1x32xf32>
      %114 = arith.subf %112, %110 : vector<1x32xf32>
      %115 = arith.addf %113, %114 : vector<1x32xf32>
      %cst_93 = arith.constant 0.00999999977 : f32
      %116 = vector.broadcast %cst_93 : f32 to vector<1x32xf32>
      %117 = arith.mulf %116, %114 : vector<1x32xf32>
      %118 = arith.subf %89, %117 : vector<1x32xf32>
      %cst_94 = arith.constant -1.000000e+00 : f32
      %cst_95 = arith.constant 1.000000e+00 : f32
      %119 = vector.broadcast %cst_94 : f32 to vector<1x32xf32>
      %120 = arith.maximumf %119, %118 : vector<1x32xf32>
      %121 = vector.broadcast %cst_95 : f32 to vector<1x32xf32>
      %122 = arith.minimumf %121, %120 : vector<1x32xf32>
      %cst_96 = arith.constant 0.00999999977 : f32
      %123 = vector.broadcast %cst_96 : f32 to vector<1x32xf32>
      %124 = arith.mulf %123, %113 : vector<1x32xf32>
      %125 = arith.subf %96, %124 : vector<1x32xf32>
      %cst_97 = arith.constant -1.000000e+00 : f32
      %cst_98 = arith.constant 1.000000e+00 : f32
      %126 = vector.broadcast %cst_97 : f32 to vector<1x32xf32>
      %127 = arith.maximumf %126, %125 : vector<1x32xf32>
      %128 = vector.broadcast %cst_98 : f32 to vector<1x32xf32>
      %129 = arith.minimumf %128, %127 : vector<1x32xf32>
      %cst_99 = arith.constant 0.00999999977 : f32
      %130 = vector.broadcast %cst_99 : f32 to vector<1x32xf32>
      %131 = arith.mulf %130, %115 : vector<1x32xf32>
      %132 = arith.addf %110, %131 : vector<1x32xf32>
      %cst_100 = arith.constant 1.000000e-03 : f32
      %133 = vector.broadcast %cst_100 : f32 to vector<1x32xf32>
      %134 = arith.mulf %133, %110 : vector<1x32xf32>
      %135 = arith.subf %132, %134 : vector<1x32xf32>
      %136 = arith.mulf %122, %114 : vector<1x32xf32>
      %137 = arith.subf %135, %136 : vector<1x32xf32>
      %138 = arith.mulf %129, %113 : vector<1x32xf32>
      %139 = arith.subf %137, %138 : vector<1x32xf32>
      %cst_101 = arith.constant -1.000000e+01 : f32
      %cst_102 = arith.constant 1.000000e+01 : f32
      %140 = vector.broadcast %cst_101 : f32 to vector<1x32xf32>
      %141 = arith.maximumf %140, %139 : vector<1x32xf32>
      %142 = vector.broadcast %cst_102 : f32 to vector<1x32xf32>
      %143 = arith.minimumf %142, %141 : vector<1x32xf32>
      %c3_i32 = arith.constant 3 : i32
      %cst_103 = arith.constant dense<0.000000e+00> : vector<1x32xf32>
      %144 = tpu.matmul %143, %6, %cst_103 {dimension_numbers = #tpu.dot_dimension_numbers<[1], [0], [0], [1], [0, 0, 1, 1], [], []>} : vector<1x32xf32>, vector<32x32xf32>, vector<1x32xf32> -> vector<1x32xf32>
      %cst_104 = arith.constant dense<0.000000e+00> : vector<1x32xf32>
      %145 = tpu.matmul %143, %7, %cst_104 {dimension_numbers = #tpu.dot_dimension_numbers<[1], [0], [0], [1], [0, 0, 1, 1], [], []>} : vector<1x32xf32>, vector<32x32xf32>, vector<1x32xf32> -> vector<1x32xf32>
      %146 = arith.subf %144, %143 : vector<1x32xf32>
      %147 = arith.subf %145, %143 : vector<1x32xf32>
      %148 = arith.addf %146, %147 : vector<1x32xf32>
      %cst_105 = arith.constant 0.00999999977 : f32
      %149 = vector.broadcast %cst_105 : f32 to vector<1x32xf32>
      %150 = arith.mulf %149, %147 : vector<1x32xf32>
      %151 = arith.subf %122, %150 : vector<1x32xf32>
      %cst_106 = arith.constant -1.000000e+00 : f32
      %cst_107 = arith.constant 1.000000e+00 : f32
      %152 = vector.broadcast %cst_106 : f32 to vector<1x32xf32>
      %153 = arith.maximumf %152, %151 : vector<1x32xf32>
      %154 = vector.broadcast %cst_107 : f32 to vector<1x32xf32>
      %155 = arith.minimumf %154, %153 : vector<1x32xf32>
      %cst_108 = arith.constant 0.00999999977 : f32
      %156 = vector.broadcast %cst_108 : f32 to vector<1x32xf32>
      %157 = arith.mulf %156, %146 : vector<1x32xf32>
      %158 = arith.subf %129, %157 : vector<1x32xf32>
      %cst_109 = arith.constant -1.000000e+00 : f32
      %cst_110 = arith.constant 1.000000e+00 : f32
      %159 = vector.broadcast %cst_109 : f32 to vector<1x32xf32>
      %160 = arith.maximumf %159, %158 : vector<1x32xf32>
      %161 = vector.broadcast %cst_110 : f32 to vector<1x32xf32>
      %162 = arith.minimumf %161, %160 : vector<1x32xf32>
      %cst_111 = arith.constant 0.00999999977 : f32
      %163 = vector.broadcast %cst_111 : f32 to vector<1x32xf32>
      %164 = arith.mulf %163, %148 : vector<1x32xf32>
      %165 = arith.addf %143, %164 : vector<1x32xf32>
      %cst_112 = arith.constant 1.000000e-03 : f32
      %166 = vector.broadcast %cst_112 : f32 to vector<1x32xf32>
      %167 = arith.mulf %166, %143 : vector<1x32xf32>
      %168 = arith.subf %165, %167 : vector<1x32xf32>
      %169 = arith.mulf %155, %147 : vector<1x32xf32>
      %170 = arith.subf %168, %169 : vector<1x32xf32>
      %171 = arith.mulf %162, %146 : vector<1x32xf32>
      %172 = arith.subf %170, %171 : vector<1x32xf32>
      %cst_113 = arith.constant -1.000000e+01 : f32
      %cst_114 = arith.constant 1.000000e+01 : f32
      %173 = vector.broadcast %cst_113 : f32 to vector<1x32xf32>
      %174 = arith.maximumf %173, %172 : vector<1x32xf32>
      %175 = vector.broadcast %cst_114 : f32 to vector<1x32xf32>
      %176 = arith.minimumf %175, %174 : vector<1x32xf32>
      %c4_i32 = arith.constant 4 : i32
      %cst_115 = arith.constant dense<0.000000e+00> : vector<1x32xf32>
      %177 = tpu.matmul %176, %6, %cst_115 {dimension_numbers = #tpu.dot_dimension_numbers<[1], [0], [0], [1], [0, 0, 1, 1], [], []>} : vector<1x32xf32>, vector<32x32xf32>, vector<1x32xf32> -> vector<1x32xf32>
      %cst_116 = arith.constant dense<0.000000e+00> : vector<1x32xf32>
      %178 = tpu.matmul %176, %7, %cst_116 {dimension_numbers = #tpu.dot_dimension_numbers<[1], [0], [0], [1], [0, 0, 1, 1], [], []>} : vector<1x32xf32>, vector<32x32xf32>, vector<1x32xf32> -> vector<1x32xf32>
      %179 = arith.subf %177, %176 : vector<1x32xf32>
      %180 = arith.subf %178, %176 : vector<1x32xf32>
      %181 = arith.addf %179, %180 : vector<1x32xf32>
      %cst_117 = arith.constant 0.00999999977 : f32
      %182 = vector.broadcast %cst_117 : f32 to vector<1x32xf32>
      %183 = arith.mulf %182, %180 : vector<1x32xf32>
      %184 = arith.subf %155, %183 : vector<1x32xf32>
      %cst_118 = arith.constant -1.000000e+00 : f32
      %cst_119 = arith.constant 1.000000e+00 : f32
      %185 = vector.broadcast %cst_118 : f32 to vector<1x32xf32>
      %186 = arith.maximumf %185, %184 : vector<1x32xf32>
      %187 = vector.broadcast %cst_119 : f32 to vector<1x32xf32>
      %188 = arith.minimumf %187, %186 : vector<1x32xf32>
      %cst_120 = arith.constant 0.00999999977 : f32
      %189 = vector.broadcast %cst_120 : f32 to vector<1x32xf32>
      %190 = arith.mulf %189, %179 : vector<1x32xf32>
      %191 = arith.subf %162, %190 : vector<1x32xf32>
      %cst_121 = arith.constant -1.000000e+00 : f32
      %cst_122 = arith.constant 1.000000e+00 : f32
      %192 = vector.broadcast %cst_121 : f32 to vector<1x32xf32>
      %193 = arith.maximumf %192, %191 : vector<1x32xf32>
      %194 = vector.broadcast %cst_122 : f32 to vector<1x32xf32>
      %195 = arith.minimumf %194, %193 : vector<1x32xf32>
      %cst_123 = arith.constant 0.00999999977 : f32
      %196 = vector.broadcast %cst_123 : f32 to vector<1x32xf32>
      %197 = arith.mulf %196, %181 : vector<1x32xf32>
      %198 = arith.addf %176, %197 : vector<1x32xf32>
      %cst_124 = arith.constant 1.000000e-03 : f32
      %199 = vector.broadcast %cst_124 : f32 to vector<1x32xf32>
      %200 = arith.mulf %199, %176 : vector<1x32xf32>
      %201 = arith.subf %198, %200 : vector<1x32xf32>
      %202 = arith.mulf %188, %180 : vector<1x32xf32>
      %203 = arith.subf %201, %202 : vector<1x32xf32>
      %204 = arith.mulf %195, %179 : vector<1x32xf32>
      %205 = arith.subf %203, %204 : vector<1x32xf32>
      %cst_125 = arith.constant -1.000000e+01 : f32
      %cst_126 = arith.constant 1.000000e+01 : f32
      %206 = vector.broadcast %cst_125 : f32 to vector<1x32xf32>
      %207 = arith.maximumf %206, %205 : vector<1x32xf32>
      %208 = vector.broadcast %cst_126 : f32 to vector<1x32xf32>
      %209 = arith.minimumf %208, %207 : vector<1x32xf32>
      %c5_i32 = arith.constant 5 : i32
      %cst_127 = arith.constant dense<0.000000e+00> : vector<1x32xf32>
      %210 = tpu.matmul %209, %6, %cst_127 {dimension_numbers = #tpu.dot_dimension_numbers<[1], [0], [0], [1], [0, 0, 1, 1], [], []>} : vector<1x32xf32>, vector<32x32xf32>, vector<1x32xf32> -> vector<1x32xf32>
      %cst_128 = arith.constant dense<0.000000e+00> : vector<1x32xf32>
      %211 = tpu.matmul %209, %7, %cst_128 {dimension_numbers = #tpu.dot_dimension_numbers<[1], [0], [0], [1], [0, 0, 1, 1], [], []>} : vector<1x32xf32>, vector<32x32xf32>, vector<1x32xf32> -> vector<1x32xf32>
      %212 = arith.subf %210, %209 : vector<1x32xf32>
      %213 = arith.subf %211, %209 : vector<1x32xf32>
      %214 = arith.addf %212, %213 : vector<1x32xf32>
      %cst_129 = arith.constant 0.00999999977 : f32
      %215 = vector.broadcast %cst_129 : f32 to vector<1x32xf32>
      %216 = arith.mulf %215, %213 : vector<1x32xf32>
      %217 = arith.subf %188, %216 : vector<1x32xf32>
      %cst_130 = arith.constant -1.000000e+00 : f32
      %cst_131 = arith.constant 1.000000e+00 : f32
      %218 = vector.broadcast %cst_130 : f32 to vector<1x32xf32>
      %219 = arith.maximumf %218, %217 : vector<1x32xf32>
      %220 = vector.broadcast %cst_131 : f32 to vector<1x32xf32>
      %221 = arith.minimumf %220, %219 : vector<1x32xf32>
      %cst_132 = arith.constant 0.00999999977 : f32
      %222 = vector.broadcast %cst_132 : f32 to vector<1x32xf32>
      %223 = arith.mulf %222, %212 : vector<1x32xf32>
      %224 = arith.subf %195, %223 : vector<1x32xf32>
      %cst_133 = arith.constant -1.000000e+00 : f32
      %cst_134 = arith.constant 1.000000e+00 : f32
      %225 = vector.broadcast %cst_133 : f32 to vector<1x32xf32>
      %226 = arith.maximumf %225, %224 : vector<1x32xf32>
      %227 = vector.broadcast %cst_134 : f32 to vector<1x32xf32>
      %228 = arith.minimumf %227, %226 : vector<1x32xf32>
      %cst_135 = arith.constant 0.00999999977 : f32
      %229 = vector.broadcast %cst_135 : f32 to vector<1x32xf32>
      %230 = arith.mulf %229, %214 : vector<1x32xf32>
      %231 = arith.addf %209, %230 : vector<1x32xf32>
      %cst_136 = arith.constant 1.000000e-03 : f32
      %232 = vector.broadcast %cst_136 : f32 to vector<1x32xf32>
      %233 = arith.mulf %232, %209 : vector<1x32xf32>
      %234 = arith.subf %231, %233 : vector<1x32xf32>
      %235 = arith.mulf %221, %213 : vector<1x32xf32>
      %236 = arith.subf %234, %235 : vector<1x32xf32>
      %237 = arith.mulf %228, %212 : vector<1x32xf32>
      %238 = arith.subf %236, %237 : vector<1x32xf32>
      %cst_137 = arith.constant -1.000000e+01 : f32
      %cst_138 = arith.constant 1.000000e+01 : f32
      %239 = vector.broadcast %cst_137 : f32 to vector<1x32xf32>
      %240 = arith.maximumf %239, %238 : vector<1x32xf32>
      %241 = vector.broadcast %cst_138 : f32 to vector<1x32xf32>
      %242 = arith.minimumf %241, %240 : vector<1x32xf32>
      %c6_i32 = arith.constant 6 : i32
      %cst_139 = arith.constant dense<0.000000e+00> : vector<1x32xf32>
      %243 = tpu.matmul %242, %6, %cst_139 {dimension_numbers = #tpu.dot_dimension_numbers<[1], [0], [0], [1], [0, 0, 1, 1], [], []>} : vector<1x32xf32>, vector<32x32xf32>, vector<1x32xf32> -> vector<1x32xf32>
      %cst_140 = arith.constant dense<0.000000e+00> : vector<1x32xf32>
      %244 = tpu.matmul %242, %7, %cst_140 {dimension_numbers = #tpu.dot_dimension_numbers<[1], [0], [0], [1], [0, 0, 1, 1], [], []>} : vector<1x32xf32>, vector<32x32xf32>, vector<1x32xf32> -> vector<1x32xf32>
      %245 = arith.subf %243, %242 : vector<1x32xf32>
      %246 = arith.subf %244, %242 : vector<1x32xf32>
      %247 = arith.addf %245, %246 : vector<1x32xf32>
      %cst_141 = arith.constant 0.00999999977 : f32
      %248 = vector.broadcast %cst_141 : f32 to vector<1x32xf32>
      %249 = arith.mulf %248, %246 : vector<1x32xf32>
      %250 = arith.subf %221, %249 : vector<1x32xf32>
      %cst_142 = arith.constant -1.000000e+00 : f32
      %cst_143 = arith.constant 1.000000e+00 : f32
      %251 = vector.broadcast %cst_142 : f32 to vector<1x32xf32>
      %252 = arith.maximumf %251, %250 : vector<1x32xf32>
      %253 = vector.broadcast %cst_143 : f32 to vector<1x32xf32>
      %254 = arith.minimumf %253, %252 : vector<1x32xf32>
      %cst_144 = arith.constant 0.00999999977 : f32
      %255 = vector.broadcast %cst_144 : f32 to vector<1x32xf32>
      %256 = arith.mulf %255, %245 : vector<1x32xf32>
      %257 = arith.subf %228, %256 : vector<1x32xf32>
      %cst_145 = arith.constant -1.000000e+00 : f32
      %cst_146 = arith.constant 1.000000e+00 : f32
      %258 = vector.broadcast %cst_145 : f32 to vector<1x32xf32>
      %259 = arith.maximumf %258, %257 : vector<1x32xf32>
      %260 = vector.broadcast %cst_146 : f32 to vector<1x32xf32>
      %261 = arith.minimumf %260, %259 : vector<1x32xf32>
      %cst_147 = arith.constant 0.00999999977 : f32
      %262 = vector.broadcast %cst_147 : f32 to vector<1x32xf32>
      %263 = arith.mulf %262, %247 : vector<1x32xf32>
      %264 = arith.addf %242, %263 : vector<1x32xf32>
      %cst_148 = arith.constant 1.000000e-03 : f32
      %265 = vector.broadcast %cst_148 : f32 to vector<1x32xf32>
      %266 = arith.mulf %265, %242 : vector<1x32xf32>
      %267 = arith.subf %264, %266 : vector<1x32xf32>
      %268 = arith.mulf %254, %246 : vector<1x32xf32>
      %269 = arith.subf %267, %268 : vector<1x32xf32>
      %270 = arith.mulf %261, %245 : vector<1x32xf32>
      %271 = arith.subf %269, %270 : vector<1x32xf32>
      %cst_149 = arith.constant -1.000000e+01 : f32
      %cst_150 = arith.constant 1.000000e+01 : f32
      %272 = vector.broadcast %cst_149 : f32 to vector<1x32xf32>
      %273 = arith.maximumf %272, %271 : vector<1x32xf32>
      %274 = vector.broadcast %cst_150 : f32 to vector<1x32xf32>
      %275 = arith.minimumf %274, %273 : vector<1x32xf32>
      %c7_i32 = arith.constant 7 : i32
      %cst_151 = arith.constant dense<0.000000e+00> : vector<1x32xf32>
      %276 = tpu.matmul %275, %6, %cst_151 {dimension_numbers = #tpu.dot_dimension_numbers<[1], [0], [0], [1], [0, 0, 1, 1], [], []>} : vector<1x32xf32>, vector<32x32xf32>, vector<1x32xf32> -> vector<1x32xf32>
      %cst_152 = arith.constant dense<0.000000e+00> : vector<1x32xf32>
      %277 = tpu.matmul %275, %7, %cst_152 {dimension_numbers = #tpu.dot_dimension_numbers<[1], [0], [0], [1], [0, 0, 1, 1], [], []>} : vector<1x32xf32>, vector<32x32xf32>, vector<1x32xf32> -> vector<1x32xf32>
      %278 = arith.subf %276, %275 : vector<1x32xf32>
      %279 = arith.subf %277, %275 : vector<1x32xf32>
      %280 = arith.addf %278, %279 : vector<1x32xf32>
      %cst_153 = arith.constant 0.00999999977 : f32
      %281 = vector.broadcast %cst_153 : f32 to vector<1x32xf32>
      %282 = arith.mulf %281, %279 : vector<1x32xf32>
      %283 = arith.subf %254, %282 : vector<1x32xf32>
      %cst_154 = arith.constant -1.000000e+00 : f32
      %cst_155 = arith.constant 1.000000e+00 : f32
      %284 = vector.broadcast %cst_154 : f32 to vector<1x32xf32>
      %285 = arith.maximumf %284, %283 : vector<1x32xf32>
      %286 = vector.broadcast %cst_155 : f32 to vector<1x32xf32>
      %287 = arith.minimumf %286, %285 : vector<1x32xf32>
      %cst_156 = arith.constant 0.00999999977 : f32
      %288 = vector.broadcast %cst_156 : f32 to vector<1x32xf32>
      %289 = arith.mulf %288, %278 : vector<1x32xf32>
      %290 = arith.subf %261, %289 : vector<1x32xf32>
      %cst_157 = arith.constant -1.000000e+00 : f32
      %cst_158 = arith.constant 1.000000e+00 : f32
      %291 = vector.broadcast %cst_157 : f32 to vector<1x32xf32>
      %292 = arith.maximumf %291, %290 : vector<1x32xf32>
      %293 = vector.broadcast %cst_158 : f32 to vector<1x32xf32>
      %294 = arith.minimumf %293, %292 : vector<1x32xf32>
      %cst_159 = arith.constant 0.00999999977 : f32
      %295 = vector.broadcast %cst_159 : f32 to vector<1x32xf32>
      %296 = arith.mulf %295, %280 : vector<1x32xf32>
      %297 = arith.addf %275, %296 : vector<1x32xf32>
      %cst_160 = arith.constant 1.000000e-03 : f32
      %298 = vector.broadcast %cst_160 : f32 to vector<1x32xf32>
      %299 = arith.mulf %298, %275 : vector<1x32xf32>
      %300 = arith.subf %297, %299 : vector<1x32xf32>
      %301 = arith.mulf %287, %279 : vector<1x32xf32>
      %302 = arith.subf %300, %301 : vector<1x32xf32>
      %303 = arith.mulf %294, %278 : vector<1x32xf32>
      %304 = arith.subf %302, %303 : vector<1x32xf32>
      %cst_161 = arith.constant -1.000000e+01 : f32
      %cst_162 = arith.constant 1.000000e+01 : f32
      %305 = vector.broadcast %cst_161 : f32 to vector<1x32xf32>
      %306 = arith.maximumf %305, %304 : vector<1x32xf32>
      %307 = vector.broadcast %cst_162 : f32 to vector<1x32xf32>
      %308 = arith.minimumf %307, %306 : vector<1x32xf32>
      %c8_i32 = arith.constant 8 : i32
      %cst_163 = arith.constant dense<0.000000e+00> : vector<1x32xf32>
      %309 = tpu.matmul %308, %6, %cst_163 {dimension_numbers = #tpu.dot_dimension_numbers<[1], [0], [0], [1], [0, 0, 1, 1], [], []>} : vector<1x32xf32>, vector<32x32xf32>, vector<1x32xf32> -> vector<1x32xf32>
      %cst_164 = arith.constant dense<0.000000e+00> : vector<1x32xf32>
      %310 = tpu.matmul %308, %7, %cst_164 {dimension_numbers = #tpu.dot_dimension_numbers<[1], [0], [0], [1], [0, 0, 1, 1], [], []>} : vector<1x32xf32>, vector<32x32xf32>, vector<1x32xf32> -> vector<1x32xf32>
      %311 = arith.subf %309, %308 : vector<1x32xf32>
      %312 = arith.subf %310, %308 : vector<1x32xf32>
      %313 = arith.addf %311, %312 : vector<1x32xf32>
      %cst_165 = arith.constant 0.00999999977 : f32
      %314 = vector.broadcast %cst_165 : f32 to vector<1x32xf32>
      %315 = arith.mulf %314, %312 : vector<1x32xf32>
      %316 = arith.subf %287, %315 : vector<1x32xf32>
      %cst_166 = arith.constant -1.000000e+00 : f32
      %cst_167 = arith.constant 1.000000e+00 : f32
      %317 = vector.broadcast %cst_166 : f32 to vector<1x32xf32>
      %318 = arith.maximumf %317, %316 : vector<1x32xf32>
      %319 = vector.broadcast %cst_167 : f32 to vector<1x32xf32>
      %320 = arith.minimumf %319, %318 : vector<1x32xf32>
      %cst_168 = arith.constant 0.00999999977 : f32
      %321 = vector.broadcast %cst_168 : f32 to vector<1x32xf32>
      %322 = arith.mulf %321, %311 : vector<1x32xf32>
      %323 = arith.subf %294, %322 : vector<1x32xf32>
      %cst_169 = arith.constant -1.000000e+00 : f32
      %cst_170 = arith.constant 1.000000e+00 : f32
      %324 = vector.broadcast %cst_169 : f32 to vector<1x32xf32>
      %325 = arith.maximumf %324, %323 : vector<1x32xf32>
      %326 = vector.broadcast %cst_170 : f32 to vector<1x32xf32>
      %327 = arith.minimumf %326, %325 : vector<1x32xf32>
      %cst_171 = arith.constant 0.00999999977 : f32
      %328 = vector.broadcast %cst_171 : f32 to vector<1x32xf32>
      %329 = arith.mulf %328, %313 : vector<1x32xf32>
      %330 = arith.addf %308, %329 : vector<1x32xf32>
      %cst_172 = arith.constant 1.000000e-03 : f32
      %331 = vector.broadcast %cst_172 : f32 to vector<1x32xf32>
      %332 = arith.mulf %331, %308 : vector<1x32xf32>
      %333 = arith.subf %330, %332 : vector<1x32xf32>
      %334 = arith.mulf %320, %312 : vector<1x32xf32>
      %335 = arith.subf %333, %334 : vector<1x32xf32>
      %336 = arith.mulf %327, %311 : vector<1x32xf32>
      %337 = arith.subf %335, %336 : vector<1x32xf32>
      %cst_173 = arith.constant -1.000000e+01 : f32
      %cst_174 = arith.constant 1.000000e+01 : f32
      %338 = vector.broadcast %cst_173 : f32 to vector<1x32xf32>
      %339 = arith.maximumf %338, %337 : vector<1x32xf32>
      %340 = vector.broadcast %cst_174 : f32 to vector<1x32xf32>
      %341 = arith.minimumf %340, %339 : vector<1x32xf32>
      %c9_i32 = arith.constant 9 : i32
      %cst_175 = arith.constant dense<0.000000e+00> : vector<1x32xf32>
      %342 = tpu.matmul %341, %6, %cst_175 {dimension_numbers = #tpu.dot_dimension_numbers<[1], [0], [0], [1], [0, 0, 1, 1], [], []>} : vector<1x32xf32>, vector<32x32xf32>, vector<1x32xf32> -> vector<1x32xf32>
      %cst_176 = arith.constant dense<0.000000e+00> : vector<1x32xf32>
      %343 = tpu.matmul %341, %7, %cst_176 {dimension_numbers = #tpu.dot_dimension_numbers<[1], [0], [0], [1], [0, 0, 1, 1], [], []>} : vector<1x32xf32>, vector<32x32xf32>, vector<1x32xf32> -> vector<1x32xf32>
      %344 = arith.subf %342, %341 : vector<1x32xf32>
      %345 = arith.subf %343, %341 : vector<1x32xf32>
      %346 = arith.addf %344, %345 : vector<1x32xf32>
      %cst_177 = arith.constant 0.00999999977 : f32
      %347 = vector.broadcast %cst_177 : f32 to vector<1x32xf32>
      %348 = arith.mulf %347, %345 : vector<1x32xf32>
      %349 = arith.subf %320, %348 : vector<1x32xf32>
      %cst_178 = arith.constant -1.000000e+00 : f32
      %cst_179 = arith.constant 1.000000e+00 : f32
      %350 = vector.broadcast %cst_178 : f32 to vector<1x32xf32>
      %351 = arith.maximumf %350, %349 : vector<1x32xf32>
      %352 = vector.broadcast %cst_179 : f32 to vector<1x32xf32>
      %353 = arith.minimumf %352, %351 : vector<1x32xf32>
      %cst_180 = arith.constant 0.00999999977 : f32
      %354 = vector.broadcast %cst_180 : f32 to vector<1x32xf32>
      %355 = arith.mulf %354, %344 : vector<1x32xf32>
      %356 = arith.subf %327, %355 : vector<1x32xf32>
      %cst_181 = arith.constant -1.000000e+00 : f32
      %cst_182 = arith.constant 1.000000e+00 : f32
      %357 = vector.broadcast %cst_181 : f32 to vector<1x32xf32>
      %358 = arith.maximumf %357, %356 : vector<1x32xf32>
      %359 = vector.broadcast %cst_182 : f32 to vector<1x32xf32>
      %360 = arith.minimumf %359, %358 : vector<1x32xf32>
      %cst_183 = arith.constant 0.00999999977 : f32
      %361 = vector.broadcast %cst_183 : f32 to vector<1x32xf32>
      %362 = arith.mulf %361, %346 : vector<1x32xf32>
      %363 = arith.addf %341, %362 : vector<1x32xf32>
      %cst_184 = arith.constant 1.000000e-03 : f32
      %364 = vector.broadcast %cst_184 : f32 to vector<1x32xf32>
      %365 = arith.mulf %364, %341 : vector<1x32xf32>
      %366 = arith.subf %363, %365 : vector<1x32xf32>
      %367 = arith.mulf %353, %345 : vector<1x32xf32>
      %368 = arith.subf %366, %367 : vector<1x32xf32>
      %369 = arith.mulf %360, %344 : vector<1x32xf32>
      %370 = arith.subf %368, %369 : vector<1x32xf32>
      %cst_185 = arith.constant -1.000000e+01 : f32
      %cst_186 = arith.constant 1.000000e+01 : f32
      %371 = vector.broadcast %cst_185 : f32 to vector<1x32xf32>
      %372 = arith.maximumf %371, %370 : vector<1x32xf32>
      %373 = vector.broadcast %cst_186 : f32 to vector<1x32xf32>
      %374 = arith.minimumf %373, %372 : vector<1x32xf32>
      %c0_187 = arith.constant 0 : index
      %c0_188 = arith.constant 0 : index
      %375 = vector.load %arg13[%c0_187, %c0_188] : memref<2x32xf32, #tpu.memory_space<vmem>>, vector<1x32xf32>
      tpu.vector_store %arg13[%c0_187, %c0_188], %353 {strides = array<i32>} : memref<2x32xf32, #tpu.memory_space<vmem>>, vector<1x32xf32>,
      %c1_189 = arith.constant 1 : index
      %c0_190 = arith.constant 0 : index
      %376 = vector.load %arg13[%c1_189, %c0_190] : memref<2x32xf32, #tpu.memory_space<vmem>>, vector<1x32xf32>
      tpu.vector_store %arg13[%c1_189, %c0_190], %360 {strides = array<i32>} : memref<2x32xf32, #tpu.memory_space<vmem>>, vector<1x32xf32>,
      %377 = math.tanh %374 : vector<1x32xf32>
      %378 = arith.index_cast %40 : i32 to index
      %c0_191 = arith.constant 0 : index
      %379 = vector.load %arg16[%378, %c0_191] : memref<2x32xf32, #tpu.memory_space<vmem>>, vector<1x32xf32>
      tpu.vector_store %arg16[%378, %c0_191], %377 {strides = array<i32>} : memref<2x32xf32, #tpu.memory_space<vmem>>, vector<1x32xf32>,
    }
    %c2_i32_13 = arith.constant 2 : i32
    %c0_14 = arith.constant 0 : index
    %c0_15 = arith.constant 0 : index
    %9 = vector.load %arg16[%c0_14, %c0_15] : memref<2x32xf32, #tpu.memory_space<vmem>>, vector<2x32xf32>
    %c0_16 = arith.constant 0 : index
    %c0_17 = arith.constant 0 : index
    %10 = vector.load %arg3[%c0_16, %c0_17] : memref<32x32xf32, #tpu.memory_space<vmem>>, vector<32x32xf32>
    %cst_18 = arith.constant dense<0.000000e+00> : vector<2x32xf32>
    %11 = tpu.matmul %9, %10, %cst_18 {dimension_numbers = #tpu.dot_dimension_numbers<[1], [0], [0], [1], [0, 0, 1, 1], [], []>} : vector<2x32xf32>, vector<32x32xf32>, vector<2x32xf32> -> vector<2x32xf32>
    %c0_19 = arith.constant 0 : index
    %c0_20 = arith.constant 0 : index
    %12 = vector.load %arg18[%c0_19, %c0_20] : memref<2x32xf32, #tpu.memory_space<vmem>>, vector<2x32xf32>
    tpu.vector_store %arg18[%c0_19, %c0_20], %11 {strides = array<i32>} : memref<2x32xf32, #tpu.memory_space<vmem>>, vector<2x32xf32>,
    %c0_21 = arith.constant 0 : index
    %c0_22 = arith.constant 0 : index
    %13 = vector.load %arg10[%c0_21, %c0_22] : memref<2x32xf32, #tpu.memory_space<vmem>>, vector<2x32xf32>
    %c0_23 = arith.constant 0 : index
    %c0_24 = arith.constant 0 : index
    %14 = vector.load %arg14[%c0_23, %c0_24] : memref<2x32xf32, #tpu.memory_space<vmem>>, vector<2x32xf32>
    tpu.vector_store %arg14[%c0_23, %c0_24], %13 {strides = array<i32>} : memref<2x32xf32, #tpu.memory_space<vmem>>, vector<2x32xf32>,
    %c0_25 = arith.constant 0 : index
    %c0_26 = arith.constant 0 : index
    %15 = vector.load %arg5[%c0_25, %c0_26] : memref<32x32xf32, #tpu.memory_space<vmem>>, vector<32x32xf32>
    %c0_27 = arith.constant 0 : index
    %c0_28 = arith.constant 0 : index
    %16 = vector.load %arg6[%c0_27, %c0_28] : memref<32x32xf32, #tpu.memory_space<vmem>>, vector<32x32xf32>
    %c0_i32_29 = arith.constant 0 : i32
    %c2_i32_30 = arith.constant 2 : i32
    %17 = arith.addi %c0_i32_29, %c2_i32_30 : i32
    %c1_i32_31 = arith.constant 1 : i32
    scf.for %arg21 = %c0_i32_29 to %17 step %c1_i32_31  : i32 {
      %c1_i32_58 = arith.constant 1 : i32
      %39 = arith.muli %arg21, %c1_i32_58 : i32
      %c0_i32_59 = arith.constant 0 : i32
      %40 = arith.addi %c0_i32_59, %39 : i32
      %41 = arith.index_cast %40 : i32 to index
      %c0_60 = arith.constant 0 : index
      %42 = vector.load %arg18[%41, %c0_60] : memref<2x32xf32, #tpu.memory_space<vmem>>, vector<1x32xf32>
      %c0_61 = arith.constant 0 : index
      %c0_62 = arith.constant 0 : index
      %43 = vector.load %arg14[%c0_61, %c0_62] : memref<2x32xf32, #tpu.memory_space<vmem>>, vector<1x32xf32>
      %c1 = arith.constant 1 : index
      %c0_63 = arith.constant 0 : index
      %44 = vector.load %arg14[%c1, %c0_63] : memref<2x32xf32, #tpu.memory_space<vmem>>, vector<1x32xf32>
      %c0_i32_64 = arith.constant 0 : i32
      %cst_65 = arith.constant dense<0.000000e+00> : vector<1x32xf32>
      %45 = tpu.matmul %42, %15, %cst_65 {dimension_numbers = #tpu.dot_dimension_numbers<[1], [0], [0], [1], [0, 0, 1, 1], [], []>} : vector<1x32xf32>, vector<32x32xf32>, vector<1x32xf32> -> vector<1x32xf32>
      %cst_66 = arith.constant dense<0.000000e+00> : vector<1x32xf32>
      %46 = tpu.matmul %42, %16, %cst_66 {dimension_numbers = #tpu.dot_dimension_numbers<[1], [0], [0], [1], [0, 0, 1, 1], [], []>} : vector<1x32xf32>, vector<32x32xf32>, vector<1x32xf32> -> vector<1x32xf32>
      %47 = arith.subf %45, %42 : vector<1x32xf32>
      %48 = arith.subf %46, %42 : vector<1x32xf32>
      %49 = arith.addf %47, %48 : vector<1x32xf32>
      %cst_67 = arith.constant 0.00999999977 : f32
      %50 = vector.broadcast %cst_67 : f32 to vector<1x32xf32>
      %51 = arith.mulf %50, %48 : vector<1x32xf32>
      %52 = arith.subf %43, %51 : vector<1x32xf32>
      %cst_68 = arith.constant -1.000000e+00 : f32
      %cst_69 = arith.constant 1.000000e+00 : f32
      %53 = vector.broadcast %cst_68 : f32 to vector<1x32xf32>
      %54 = arith.maximumf %53, %52 : vector<1x32xf32>
      %55 = vector.broadcast %cst_69 : f32 to vector<1x32xf32>
      %56 = arith.minimumf %55, %54 : vector<1x32xf32>
      %cst_70 = arith.constant 0.00999999977 : f32
      %57 = vector.broadcast %cst_70 : f32 to vector<1x32xf32>
      %58 = arith.mulf %57, %47 : vector<1x32xf32>
      %59 = arith.subf %44, %58 : vector<1x32xf32>
      %cst_71 = arith.constant -1.000000e+00 : f32
      %cst_72 = arith.constant 1.000000e+00 : f32
      %60 = vector.broadcast %cst_71 : f32 to vector<1x32xf32>
      %61 = arith.maximumf %60, %59 : vector<1x32xf32>
      %62 = vector.broadcast %cst_72 : f32 to vector<1x32xf32>
      %63 = arith.minimumf %62, %61 : vector<1x32xf32>
      %cst_73 = arith.constant 0.00999999977 : f32
      %64 = vector.broadcast %cst_73 : f32 to vector<1x32xf32>
      %65 = arith.mulf %64, %49 : vector<1x32xf32>
      %66 = arith.addf %42, %65 : vector<1x32xf32>
      %cst_74 = arith.constant 1.000000e-03 : f32
      %67 = vector.broadcast %cst_74 : f32 to vector<1x32xf32>
      %68 = arith.mulf %67, %42 : vector<1x32xf32>
      %69 = arith.subf %66, %68 : vector<1x32xf32>
      %70 = arith.mulf %56, %48 : vector<1x32xf32>
      %71 = arith.subf %69, %70 : vector<1x32xf32>
      %72 = arith.mulf %63, %47 : vector<1x32xf32>
      %73 = arith.subf %71, %72 : vector<1x32xf32>
      %cst_75 = arith.constant -1.000000e+01 : f32
      %cst_76 = arith.constant 1.000000e+01 : f32
      %74 = vector.broadcast %cst_75 : f32 to vector<1x32xf32>
      %75 = arith.maximumf %74, %73 : vector<1x32xf32>
      %76 = vector.broadcast %cst_76 : f32 to vector<1x32xf32>
      %77 = arith.minimumf %76, %75 : vector<1x32xf32>
      %c1_i32_77 = arith.constant 1 : i32
      %cst_78 = arith.constant dense<0.000000e+00> : vector<1x32xf32>
      %78 = tpu.matmul %77, %15, %cst_78 {dimension_numbers = #tpu.dot_dimension_numbers<[1], [0], [0], [1], [0, 0, 1, 1], [], []>} : vector<1x32xf32>, vector<32x32xf32>, vector<1x32xf32> -> vector<1x32xf32>
      %cst_79 = arith.constant dense<0.000000e+00> : vector<1x32xf32>
      %79 = tpu.matmul %77, %16, %cst_79 {dimension_numbers = #tpu.dot_dimension_numbers<[1], [0], [0], [1], [0, 0, 1, 1], [], []>} : vector<1x32xf32>, vector<32x32xf32>, vector<1x32xf32> -> vector<1x32xf32>
      %80 = arith.subf %78, %77 : vector<1x32xf32>
      %81 = arith.subf %79, %77 : vector<1x32xf32>
      %82 = arith.addf %80, %81 : vector<1x32xf32>
      %cst_80 = arith.constant 0.00999999977 : f32
      %83 = vector.broadcast %cst_80 : f32 to vector<1x32xf32>
      %84 = arith.mulf %83, %81 : vector<1x32xf32>
      %85 = arith.subf %56, %84 : vector<1x32xf32>
      %cst_81 = arith.constant -1.000000e+00 : f32
      %cst_82 = arith.constant 1.000000e+00 : f32
      %86 = vector.broadcast %cst_81 : f32 to vector<1x32xf32>
      %87 = arith.maximumf %86, %85 : vector<1x32xf32>
      %88 = vector.broadcast %cst_82 : f32 to vector<1x32xf32>
      %89 = arith.minimumf %88, %87 : vector<1x32xf32>
      %cst_83 = arith.constant 0.00999999977 : f32
      %90 = vector.broadcast %cst_83 : f32 to vector<1x32xf32>
      %91 = arith.mulf %90, %80 : vector<1x32xf32>
      %92 = arith.subf %63, %91 : vector<1x32xf32>
      %cst_84 = arith.constant -1.000000e+00 : f32
      %cst_85 = arith.constant 1.000000e+00 : f32
      %93 = vector.broadcast %cst_84 : f32 to vector<1x32xf32>
      %94 = arith.maximumf %93, %92 : vector<1x32xf32>
      %95 = vector.broadcast %cst_85 : f32 to vector<1x32xf32>
      %96 = arith.minimumf %95, %94 : vector<1x32xf32>
      %cst_86 = arith.constant 0.00999999977 : f32
      %97 = vector.broadcast %cst_86 : f32 to vector<1x32xf32>
      %98 = arith.mulf %97, %82 : vector<1x32xf32>
      %99 = arith.addf %77, %98 : vector<1x32xf32>
      %cst_87 = arith.constant 1.000000e-03 : f32
      %100 = vector.broadcast %cst_87 : f32 to vector<1x32xf32>
      %101 = arith.mulf %100, %77 : vector<1x32xf32>
      %102 = arith.subf %99, %101 : vector<1x32xf32>
      %103 = arith.mulf %89, %81 : vector<1x32xf32>
      %104 = arith.subf %102, %103 : vector<1x32xf32>
      %105 = arith.mulf %96, %80 : vector<1x32xf32>
      %106 = arith.subf %104, %105 : vector<1x32xf32>
      %cst_88 = arith.constant -1.000000e+01 : f32
      %cst_89 = arith.constant 1.000000e+01 : f32
      %107 = vector.broadcast %cst_88 : f32 to vector<1x32xf32>
      %108 = arith.maximumf %107, %106 : vector<1x32xf32>
      %109 = vector.broadcast %cst_89 : f32 to vector<1x32xf32>
      %110 = arith.minimumf %109, %108 : vector<1x32xf32>
      %c2_i32_90 = arith.constant 2 : i32
      %cst_91 = arith.constant dense<0.000000e+00> : vector<1x32xf32>
      %111 = tpu.matmul %110, %15, %cst_91 {dimension_numbers = #tpu.dot_dimension_numbers<[1], [0], [0], [1], [0, 0, 1, 1], [], []>} : vector<1x32xf32>, vector<32x32xf32>, vector<1x32xf32> -> vector<1x32xf32>
      %cst_92 = arith.constant dense<0.000000e+00> : vector<1x32xf32>
      %112 = tpu.matmul %110, %16, %cst_92 {dimension_numbers = #tpu.dot_dimension_numbers<[1], [0], [0], [1], [0, 0, 1, 1], [], []>} : vector<1x32xf32>, vector<32x32xf32>, vector<1x32xf32> -> vector<1x32xf32>
      %113 = arith.subf %111, %110 : vector<1x32xf32>
      %114 = arith.subf %112, %110 : vector<1x32xf32>
      %115 = arith.addf %113, %114 : vector<1x32xf32>
      %cst_93 = arith.constant 0.00999999977 : f32
      %116 = vector.broadcast %cst_93 : f32 to vector<1x32xf32>
      %117 = arith.mulf %116, %114 : vector<1x32xf32>
      %118 = arith.subf %89, %117 : vector<1x32xf32>
      %cst_94 = arith.constant -1.000000e+00 : f32
      %cst_95 = arith.constant 1.000000e+00 : f32
      %119 = vector.broadcast %cst_94 : f32 to vector<1x32xf32>
      %120 = arith.maximumf %119, %118 : vector<1x32xf32>
      %121 = vector.broadcast %cst_95 : f32 to vector<1x32xf32>
      %122 = arith.minimumf %121, %120 : vector<1x32xf32>
      %cst_96 = arith.constant 0.00999999977 : f32
      %123 = vector.broadcast %cst_96 : f32 to vector<1x32xf32>
      %124 = arith.mulf %123, %113 : vector<1x32xf32>
      %125 = arith.subf %96, %124 : vector<1x32xf32>
      %cst_97 = arith.constant -1.000000e+00 : f32
      %cst_98 = arith.constant 1.000000e+00 : f32
      %126 = vector.broadcast %cst_97 : f32 to vector<1x32xf32>
      %127 = arith.maximumf %126, %125 : vector<1x32xf32>
      %128 = vector.broadcast %cst_98 : f32 to vector<1x32xf32>
      %129 = arith.minimumf %128, %127 : vector<1x32xf32>
      %cst_99 = arith.constant 0.00999999977 : f32
      %130 = vector.broadcast %cst_99 : f32 to vector<1x32xf32>
      %131 = arith.mulf %130, %115 : vector<1x32xf32>
      %132 = arith.addf %110, %131 : vector<1x32xf32>
      %cst_100 = arith.constant 1.000000e-03 : f32
      %133 = vector.broadcast %cst_100 : f32 to vector<1x32xf32>
      %134 = arith.mulf %133, %110 : vector<1x32xf32>
      %135 = arith.subf %132, %134 : vector<1x32xf32>
      %136 = arith.mulf %122, %114 : vector<1x32xf32>
      %137 = arith.subf %135, %136 : vector<1x32xf32>
      %138 = arith.mulf %129, %113 : vector<1x32xf32>
      %139 = arith.subf %137, %138 : vector<1x32xf32>
      %cst_101 = arith.constant -1.000000e+01 : f32
      %cst_102 = arith.constant 1.000000e+01 : f32
      %140 = vector.broadcast %cst_101 : f32 to vector<1x32xf32>
      %141 = arith.maximumf %140, %139 : vector<1x32xf32>
      %142 = vector.broadcast %cst_102 : f32 to vector<1x32xf32>
      %143 = arith.minimumf %142, %141 : vector<1x32xf32>
      %c3_i32 = arith.constant 3 : i32
      %cst_103 = arith.constant dense<0.000000e+00> : vector<1x32xf32>
      %144 = tpu.matmul %143, %15, %cst_103 {dimension_numbers = #tpu.dot_dimension_numbers<[1], [0], [0], [1], [0, 0, 1, 1], [], []>} : vector<1x32xf32>, vector<32x32xf32>, vector<1x32xf32> -> vector<1x32xf32>
      %cst_104 = arith.constant dense<0.000000e+00> : vector<1x32xf32>
      %145 = tpu.matmul %143, %16, %cst_104 {dimension_numbers = #tpu.dot_dimension_numbers<[1], [0], [0], [1], [0, 0, 1, 1], [], []>} : vector<1x32xf32>, vector<32x32xf32>, vector<1x32xf32> -> vector<1x32xf32>
      %146 = arith.subf %144, %143 : vector<1x32xf32>
      %147 = arith.subf %145, %143 : vector<1x32xf32>
      %148 = arith.addf %146, %147 : vector<1x32xf32>
      %cst_105 = arith.constant 0.00999999977 : f32
      %149 = vector.broadcast %cst_105 : f32 to vector<1x32xf32>
      %150 = arith.mulf %149, %147 : vector<1x32xf32>
      %151 = arith.subf %122, %150 : vector<1x32xf32>
      %cst_106 = arith.constant -1.000000e+00 : f32
      %cst_107 = arith.constant 1.000000e+00 : f32
      %152 = vector.broadcast %cst_106 : f32 to vector<1x32xf32>
      %153 = arith.maximumf %152, %151 : vector<1x32xf32>
      %154 = vector.broadcast %cst_107 : f32 to vector<1x32xf32>
      %155 = arith.minimumf %154, %153 : vector<1x32xf32>
      %cst_108 = arith.constant 0.00999999977 : f32
      %156 = vector.broadcast %cst_108 : f32 to vector<1x32xf32>
      %157 = arith.mulf %156, %146 : vector<1x32xf32>
      %158 = arith.subf %129, %157 : vector<1x32xf32>
      %cst_109 = arith.constant -1.000000e+00 : f32
      %cst_110 = arith.constant 1.000000e+00 : f32
      %159 = vector.broadcast %cst_109 : f32 to vector<1x32xf32>
      %160 = arith.maximumf %159, %158 : vector<1x32xf32>
      %161 = vector.broadcast %cst_110 : f32 to vector<1x32xf32>
      %162 = arith.minimumf %161, %160 : vector<1x32xf32>
      %cst_111 = arith.constant 0.00999999977 : f32
      %163 = vector.broadcast %cst_111 : f32 to vector<1x32xf32>
      %164 = arith.mulf %163, %148 : vector<1x32xf32>
      %165 = arith.addf %143, %164 : vector<1x32xf32>
      %cst_112 = arith.constant 1.000000e-03 : f32
      %166 = vector.broadcast %cst_112 : f32 to vector<1x32xf32>
      %167 = arith.mulf %166, %143 : vector<1x32xf32>
      %168 = arith.subf %165, %167 : vector<1x32xf32>
      %169 = arith.mulf %155, %147 : vector<1x32xf32>
      %170 = arith.subf %168, %169 : vector<1x32xf32>
      %171 = arith.mulf %162, %146 : vector<1x32xf32>
      %172 = arith.subf %170, %171 : vector<1x32xf32>
      %cst_113 = arith.constant -1.000000e+01 : f32
      %cst_114 = arith.constant 1.000000e+01 : f32
      %173 = vector.broadcast %cst_113 : f32 to vector<1x32xf32>
      %174 = arith.maximumf %173, %172 : vector<1x32xf32>
      %175 = vector.broadcast %cst_114 : f32 to vector<1x32xf32>
      %176 = arith.minimumf %175, %174 : vector<1x32xf32>
      %c4_i32 = arith.constant 4 : i32
      %cst_115 = arith.constant dense<0.000000e+00> : vector<1x32xf32>
      %177 = tpu.matmul %176, %15, %cst_115 {dimension_numbers = #tpu.dot_dimension_numbers<[1], [0], [0], [1], [0, 0, 1, 1], [], []>} : vector<1x32xf32>, vector<32x32xf32>, vector<1x32xf32> -> vector<1x32xf32>
      %cst_116 = arith.constant dense<0.000000e+00> : vector<1x32xf32>
      %178 = tpu.matmul %176, %16, %cst_116 {dimension_numbers = #tpu.dot_dimension_numbers<[1], [0], [0], [1], [0, 0, 1, 1], [], []>} : vector<1x32xf32>, vector<32x32xf32>, vector<1x32xf32> -> vector<1x32xf32>
      %179 = arith.subf %177, %176 : vector<1x32xf32>
      %180 = arith.subf %178, %176 : vector<1x32xf32>
      %181 = arith.addf %179, %180 : vector<1x32xf32>
      %cst_117 = arith.constant 0.00999999977 : f32
      %182 = vector.broadcast %cst_117 : f32 to vector<1x32xf32>
      %183 = arith.mulf %182, %180 : vector<1x32xf32>
      %184 = arith.subf %155, %183 : vector<1x32xf32>
      %cst_118 = arith.constant -1.000000e+00 : f32
      %cst_119 = arith.constant 1.000000e+00 : f32
      %185 = vector.broadcast %cst_118 : f32 to vector<1x32xf32>
      %186 = arith.maximumf %185, %184 : vector<1x32xf32>
      %187 = vector.broadcast %cst_119 : f32 to vector<1x32xf32>
      %188 = arith.minimumf %187, %186 : vector<1x32xf32>
      %cst_120 = arith.constant 0.00999999977 : f32
      %189 = vector.broadcast %cst_120 : f32 to vector<1x32xf32>
      %190 = arith.mulf %189, %179 : vector<1x32xf32>
      %191 = arith.subf %162, %190 : vector<1x32xf32>
      %cst_121 = arith.constant -1.000000e+00 : f32
      %cst_122 = arith.constant 1.000000e+00 : f32
      %192 = vector.broadcast %cst_121 : f32 to vector<1x32xf32>
      %193 = arith.maximumf %192, %191 : vector<1x32xf32>
      %194 = vector.broadcast %cst_122 : f32 to vector<1x32xf32>
      %195 = arith.minimumf %194, %193 : vector<1x32xf32>
      %cst_123 = arith.constant 0.00999999977 : f32
      %196 = vector.broadcast %cst_123 : f32 to vector<1x32xf32>
      %197 = arith.mulf %196, %181 : vector<1x32xf32>
      %198 = arith.addf %176, %197 : vector<1x32xf32>
      %cst_124 = arith.constant 1.000000e-03 : f32
      %199 = vector.broadcast %cst_124 : f32 to vector<1x32xf32>
      %200 = arith.mulf %199, %176 : vector<1x32xf32>
      %201 = arith.subf %198, %200 : vector<1x32xf32>
      %202 = arith.mulf %188, %180 : vector<1x32xf32>
      %203 = arith.subf %201, %202 : vector<1x32xf32>
      %204 = arith.mulf %195, %179 : vector<1x32xf32>
      %205 = arith.subf %203, %204 : vector<1x32xf32>
      %cst_125 = arith.constant -1.000000e+01 : f32
      %cst_126 = arith.constant 1.000000e+01 : f32
      %206 = vector.broadcast %cst_125 : f32 to vector<1x32xf32>
      %207 = arith.maximumf %206, %205 : vector<1x32xf32>
      %208 = vector.broadcast %cst_126 : f32 to vector<1x32xf32>
      %209 = arith.minimumf %208, %207 : vector<1x32xf32>
      %c5_i32 = arith.constant 5 : i32
      %cst_127 = arith.constant dense<0.000000e+00> : vector<1x32xf32>
      %210 = tpu.matmul %209, %15, %cst_127 {dimension_numbers = #tpu.dot_dimension_numbers<[1], [0], [0], [1], [0, 0, 1, 1], [], []>} : vector<1x32xf32>, vector<32x32xf32>, vector<1x32xf32> -> vector<1x32xf32>
      %cst_128 = arith.constant dense<0.000000e+00> : vector<1x32xf32>
      %211 = tpu.matmul %209, %16, %cst_128 {dimension_numbers = #tpu.dot_dimension_numbers<[1], [0], [0], [1], [0, 0, 1, 1], [], []>} : vector<1x32xf32>, vector<32x32xf32>, vector<1x32xf32> -> vector<1x32xf32>
      %212 = arith.subf %210, %209 : vector<1x32xf32>
      %213 = arith.subf %211, %209 : vector<1x32xf32>
      %214 = arith.addf %212, %213 : vector<1x32xf32>
      %cst_129 = arith.constant 0.00999999977 : f32
      %215 = vector.broadcast %cst_129 : f32 to vector<1x32xf32>
      %216 = arith.mulf %215, %213 : vector<1x32xf32>
      %217 = arith.subf %188, %216 : vector<1x32xf32>
      %cst_130 = arith.constant -1.000000e+00 : f32
      %cst_131 = arith.constant 1.000000e+00 : f32
      %218 = vector.broadcast %cst_130 : f32 to vector<1x32xf32>
      %219 = arith.maximumf %218, %217 : vector<1x32xf32>
      %220 = vector.broadcast %cst_131 : f32 to vector<1x32xf32>
      %221 = arith.minimumf %220, %219 : vector<1x32xf32>
      %cst_132 = arith.constant 0.00999999977 : f32
      %222 = vector.broadcast %cst_132 : f32 to vector<1x32xf32>
      %223 = arith.mulf %222, %212 : vector<1x32xf32>
      %224 = arith.subf %195, %223 : vector<1x32xf32>
      %cst_133 = arith.constant -1.000000e+00 : f32
      %cst_134 = arith.constant 1.000000e+00 : f32
      %225 = vector.broadcast %cst_133 : f32 to vector<1x32xf32>
      %226 = arith.maximumf %225, %224 : vector<1x32xf32>
      %227 = vector.broadcast %cst_134 : f32 to vector<1x32xf32>
      %228 = arith.minimumf %227, %226 : vector<1x32xf32>
      %cst_135 = arith.constant 0.00999999977 : f32
      %229 = vector.broadcast %cst_135 : f32 to vector<1x32xf32>
      %230 = arith.mulf %229, %214 : vector<1x32xf32>
      %231 = arith.addf %209, %230 : vector<1x32xf32>
      %cst_136 = arith.constant 1.000000e-03 : f32
      %232 = vector.broadcast %cst_136 : f32 to vector<1x32xf32>
      %233 = arith.mulf %232, %209 : vector<1x32xf32>
      %234 = arith.subf %231, %233 : vector<1x32xf32>
      %235 = arith.mulf %221, %213 : vector<1x32xf32>
      %236 = arith.subf %234, %235 : vector<1x32xf32>
      %237 = arith.mulf %228, %212 : vector<1x32xf32>
      %238 = arith.subf %236, %237 : vector<1x32xf32>
      %cst_137 = arith.constant -1.000000e+01 : f32
      %cst_138 = arith.constant 1.000000e+01 : f32
      %239 = vector.broadcast %cst_137 : f32 to vector<1x32xf32>
      %240 = arith.maximumf %239, %238 : vector<1x32xf32>
      %241 = vector.broadcast %cst_138 : f32 to vector<1x32xf32>
      %242 = arith.minimumf %241, %240 : vector<1x32xf32>
      %c6_i32 = arith.constant 6 : i32
      %cst_139 = arith.constant dense<0.000000e+00> : vector<1x32xf32>
      %243 = tpu.matmul %242, %15, %cst_139 {dimension_numbers = #tpu.dot_dimension_numbers<[1], [0], [0], [1], [0, 0, 1, 1], [], []>} : vector<1x32xf32>, vector<32x32xf32>, vector<1x32xf32> -> vector<1x32xf32>
      %cst_140 = arith.constant dense<0.000000e+00> : vector<1x32xf32>
      %244 = tpu.matmul %242, %16, %cst_140 {dimension_numbers = #tpu.dot_dimension_numbers<[1], [0], [0], [1], [0, 0, 1, 1], [], []>} : vector<1x32xf32>, vector<32x32xf32>, vector<1x32xf32> -> vector<1x32xf32>
      %245 = arith.subf %243, %242 : vector<1x32xf32>
      %246 = arith.subf %244, %242 : vector<1x32xf32>
      %247 = arith.addf %245, %246 : vector<1x32xf32>
      %cst_141 = arith.constant 0.00999999977 : f32
      %248 = vector.broadcast %cst_141 : f32 to vector<1x32xf32>
      %249 = arith.mulf %248, %246 : vector<1x32xf32>
      %250 = arith.subf %221, %249 : vector<1x32xf32>
      %cst_142 = arith.constant -1.000000e+00 : f32
      %cst_143 = arith.constant 1.000000e+00 : f32
      %251 = vector.broadcast %cst_142 : f32 to vector<1x32xf32>
      %252 = arith.maximumf %251, %250 : vector<1x32xf32>
      %253 = vector.broadcast %cst_143 : f32 to vector<1x32xf32>
      %254 = arith.minimumf %253, %252 : vector<1x32xf32>
      %cst_144 = arith.constant 0.00999999977 : f32
      %255 = vector.broadcast %cst_144 : f32 to vector<1x32xf32>
      %256 = arith.mulf %255, %245 : vector<1x32xf32>
      %257 = arith.subf %228, %256 : vector<1x32xf32>
      %cst_145 = arith.constant -1.000000e+00 : f32
      %cst_146 = arith.constant 1.000000e+00 : f32
      %258 = vector.broadcast %cst_145 : f32 to vector<1x32xf32>
      %259 = arith.maximumf %258, %257 : vector<1x32xf32>
      %260 = vector.broadcast %cst_146 : f32 to vector<1x32xf32>
      %261 = arith.minimumf %260, %259 : vector<1x32xf32>
      %cst_147 = arith.constant 0.00999999977 : f32
      %262 = vector.broadcast %cst_147 : f32 to vector<1x32xf32>
      %263 = arith.mulf %262, %247 : vector<1x32xf32>
      %264 = arith.addf %242, %263 : vector<1x32xf32>
      %cst_148 = arith.constant 1.000000e-03 : f32
      %265 = vector.broadcast %cst_148 : f32 to vector<1x32xf32>
      %266 = arith.mulf %265, %242 : vector<1x32xf32>
      %267 = arith.subf %264, %266 : vector<1x32xf32>
      %268 = arith.mulf %254, %246 : vector<1x32xf32>
      %269 = arith.subf %267, %268 : vector<1x32xf32>
      %270 = arith.mulf %261, %245 : vector<1x32xf32>
      %271 = arith.subf %269, %270 : vector<1x32xf32>
      %cst_149 = arith.constant -1.000000e+01 : f32
      %cst_150 = arith.constant 1.000000e+01 : f32
      %272 = vector.broadcast %cst_149 : f32 to vector<1x32xf32>
      %273 = arith.maximumf %272, %271 : vector<1x32xf32>
      %274 = vector.broadcast %cst_150 : f32 to vector<1x32xf32>
      %275 = arith.minimumf %274, %273 : vector<1x32xf32>
      %c7_i32 = arith.constant 7 : i32
      %cst_151 = arith.constant dense<0.000000e+00> : vector<1x32xf32>
      %276 = tpu.matmul %275, %15, %cst_151 {dimension_numbers = #tpu.dot_dimension_numbers<[1], [0], [0], [1], [0, 0, 1, 1], [], []>} : vector<1x32xf32>, vector<32x32xf32>, vector<1x32xf32> -> vector<1x32xf32>
      %cst_152 = arith.constant dense<0.000000e+00> : vector<1x32xf32>
      %277 = tpu.matmul %275, %16, %cst_152 {dimension_numbers = #tpu.dot_dimension_numbers<[1], [0], [0], [1], [0, 0, 1, 1], [], []>} : vector<1x32xf32>, vector<32x32xf32>, vector<1x32xf32> -> vector<1x32xf32>
      %278 = arith.subf %276, %275 : vector<1x32xf32>
      %279 = arith.subf %277, %275 : vector<1x32xf32>
      %280 = arith.addf %278, %279 : vector<1x32xf32>
      %cst_153 = arith.constant 0.00999999977 : f32
      %281 = vector.broadcast %cst_153 : f32 to vector<1x32xf32>
      %282 = arith.mulf %281, %279 : vector<1x32xf32>
      %283 = arith.subf %254, %282 : vector<1x32xf32>
      %cst_154 = arith.constant -1.000000e+00 : f32
      %cst_155 = arith.constant 1.000000e+00 : f32
      %284 = vector.broadcast %cst_154 : f32 to vector<1x32xf32>
      %285 = arith.maximumf %284, %283 : vector<1x32xf32>
      %286 = vector.broadcast %cst_155 : f32 to vector<1x32xf32>
      %287 = arith.minimumf %286, %285 : vector<1x32xf32>
      %cst_156 = arith.constant 0.00999999977 : f32
      %288 = vector.broadcast %cst_156 : f32 to vector<1x32xf32>
      %289 = arith.mulf %288, %278 : vector<1x32xf32>
      %290 = arith.subf %261, %289 : vector<1x32xf32>
      %cst_157 = arith.constant -1.000000e+00 : f32
      %cst_158 = arith.constant 1.000000e+00 : f32
      %291 = vector.broadcast %cst_157 : f32 to vector<1x32xf32>
      %292 = arith.maximumf %291, %290 : vector<1x32xf32>
      %293 = vector.broadcast %cst_158 : f32 to vector<1x32xf32>
      %294 = arith.minimumf %293, %292 : vector<1x32xf32>
      %cst_159 = arith.constant 0.00999999977 : f32
      %295 = vector.broadcast %cst_159 : f32 to vector<1x32xf32>
      %296 = arith.mulf %295, %280 : vector<1x32xf32>
      %297 = arith.addf %275, %296 : vector<1x32xf32>
      %cst_160 = arith.constant 1.000000e-03 : f32
      %298 = vector.broadcast %cst_160 : f32 to vector<1x32xf32>
      %299 = arith.mulf %298, %275 : vector<1x32xf32>
      %300 = arith.subf %297, %299 : vector<1x32xf32>
      %301 = arith.mulf %287, %279 : vector<1x32xf32>
      %302 = arith.subf %300, %301 : vector<1x32xf32>
      %303 = arith.mulf %294, %278 : vector<1x32xf32>
      %304 = arith.subf %302, %303 : vector<1x32xf32>
      %cst_161 = arith.constant -1.000000e+01 : f32
      %cst_162 = arith.constant 1.000000e+01 : f32
      %305 = vector.broadcast %cst_161 : f32 to vector<1x32xf32>
      %306 = arith.maximumf %305, %304 : vector<1x32xf32>
      %307 = vector.broadcast %cst_162 : f32 to vector<1x32xf32>
      %308 = arith.minimumf %307, %306 : vector<1x32xf32>
      %c8_i32 = arith.constant 8 : i32
      %cst_163 = arith.constant dense<0.000000e+00> : vector<1x32xf32>
      %309 = tpu.matmul %308, %15, %cst_163 {dimension_numbers = #tpu.dot_dimension_numbers<[1], [0], [0], [1], [0, 0, 1, 1], [], []>} : vector<1x32xf32>, vector<32x32xf32>, vector<1x32xf32> -> vector<1x32xf32>
      %cst_164 = arith.constant dense<0.000000e+00> : vector<1x32xf32>
      %310 = tpu.matmul %308, %16, %cst_164 {dimension_numbers = #tpu.dot_dimension_numbers<[1], [0], [0], [1], [0, 0, 1, 1], [], []>} : vector<1x32xf32>, vector<32x32xf32>, vector<1x32xf32> -> vector<1x32xf32>
      %311 = arith.subf %309, %308 : vector<1x32xf32>
      %312 = arith.subf %310, %308 : vector<1x32xf32>
      %313 = arith.addf %311, %312 : vector<1x32xf32>
      %cst_165 = arith.constant 0.00999999977 : f32
      %314 = vector.broadcast %cst_165 : f32 to vector<1x32xf32>
      %315 = arith.mulf %314, %312 : vector<1x32xf32>
      %316 = arith.subf %287, %315 : vector<1x32xf32>
      %cst_166 = arith.constant -1.000000e+00 : f32
      %cst_167 = arith.constant 1.000000e+00 : f32
      %317 = vector.broadcast %cst_166 : f32 to vector<1x32xf32>
      %318 = arith.maximumf %317, %316 : vector<1x32xf32>
      %319 = vector.broadcast %cst_167 : f32 to vector<1x32xf32>
      %320 = arith.minimumf %319, %318 : vector<1x32xf32>
      %cst_168 = arith.constant 0.00999999977 : f32
      %321 = vector.broadcast %cst_168 : f32 to vector<1x32xf32>
      %322 = arith.mulf %321, %311 : vector<1x32xf32>
      %323 = arith.subf %294, %322 : vector<1x32xf32>
      %cst_169 = arith.constant -1.000000e+00 : f32
      %cst_170 = arith.constant 1.000000e+00 : f32
      %324 = vector.broadcast %cst_169 : f32 to vector<1x32xf32>
      %325 = arith.maximumf %324, %323 : vector<1x32xf32>
      %326 = vector.broadcast %cst_170 : f32 to vector<1x32xf32>
      %327 = arith.minimumf %326, %325 : vector<1x32xf32>
      %cst_171 = arith.constant 0.00999999977 : f32
      %328 = vector.broadcast %cst_171 : f32 to vector<1x32xf32>
      %329 = arith.mulf %328, %313 : vector<1x32xf32>
      %330 = arith.addf %308, %329 : vector<1x32xf32>
      %cst_172 = arith.constant 1.000000e-03 : f32
      %331 = vector.broadcast %cst_172 : f32 to vector<1x32xf32>
      %332 = arith.mulf %331, %308 : vector<1x32xf32>
      %333 = arith.subf %330, %332 : vector<1x32xf32>
      %334 = arith.mulf %320, %312 : vector<1x32xf32>
      %335 = arith.subf %333, %334 : vector<1x32xf32>
      %336 = arith.mulf %327, %311 : vector<1x32xf32>
      %337 = arith.subf %335, %336 : vector<1x32xf32>
      %cst_173 = arith.constant -1.000000e+01 : f32
      %cst_174 = arith.constant 1.000000e+01 : f32
      %338 = vector.broadcast %cst_173 : f32 to vector<1x32xf32>
      %339 = arith.maximumf %338, %337 : vector<1x32xf32>
      %340 = vector.broadcast %cst_174 : f32 to vector<1x32xf32>
      %341 = arith.minimumf %340, %339 : vector<1x32xf32>
      %c9_i32 = arith.constant 9 : i32
      %cst_175 = arith.constant dense<0.000000e+00> : vector<1x32xf32>
      %342 = tpu.matmul %341, %15, %cst_175 {dimension_numbers = #tpu.dot_dimension_numbers<[1], [0], [0], [1], [0, 0, 1, 1], [], []>} : vector<1x32xf32>, vector<32x32xf32>, vector<1x32xf32> -> vector<1x32xf32>
      %cst_176 = arith.constant dense<0.000000e+00> : vector<1x32xf32>
      %343 = tpu.matmul %341, %16, %cst_176 {dimension_numbers = #tpu.dot_dimension_numbers<[1], [0], [0], [1], [0, 0, 1, 1], [], []>} : vector<1x32xf32>, vector<32x32xf32>, vector<1x32xf32> -> vector<1x32xf32>
      %344 = arith.subf %342, %341 : vector<1x32xf32>
      %345 = arith.subf %343, %341 : vector<1x32xf32>
      %346 = arith.addf %344, %345 : vector<1x32xf32>
      %cst_177 = arith.constant 0.00999999977 : f32
      %347 = vector.broadcast %cst_177 : f32 to vector<1x32xf32>
      %348 = arith.mulf %347, %345 : vector<1x32xf32>
      %349 = arith.subf %320, %348 : vector<1x32xf32>
      %cst_178 = arith.constant -1.000000e+00 : f32
      %cst_179 = arith.constant 1.000000e+00 : f32
      %350 = vector.broadcast %cst_178 : f32 to vector<1x32xf32>
      %351 = arith.maximumf %350, %349 : vector<1x32xf32>
      %352 = vector.broadcast %cst_179 : f32 to vector<1x32xf32>
      %353 = arith.minimumf %352, %351 : vector<1x32xf32>
      %cst_180 = arith.constant 0.00999999977 : f32
      %354 = vector.broadcast %cst_180 : f32 to vector<1x32xf32>
      %355 = arith.mulf %354, %344 : vector<1x32xf32>
      %356 = arith.subf %327, %355 : vector<1x32xf32>
      %cst_181 = arith.constant -1.000000e+00 : f32
      %cst_182 = arith.constant 1.000000e+00 : f32
      %357 = vector.broadcast %cst_181 : f32 to vector<1x32xf32>
      %358 = arith.maximumf %357, %356 : vector<1x32xf32>
      %359 = vector.broadcast %cst_182 : f32 to vector<1x32xf32>
      %360 = arith.minimumf %359, %358 : vector<1x32xf32>
      %cst_183 = arith.constant 0.00999999977 : f32
      %361 = vector.broadcast %cst_183 : f32 to vector<1x32xf32>
      %362 = arith.mulf %361, %346 : vector<1x32xf32>
      %363 = arith.addf %341, %362 : vector<1x32xf32>
      %cst_184 = arith.constant 1.000000e-03 : f32
      %364 = vector.broadcast %cst_184 : f32 to vector<1x32xf32>
      %365 = arith.mulf %364, %341 : vector<1x32xf32>
      %366 = arith.subf %363, %365 : vector<1x32xf32>
      %367 = arith.mulf %353, %345 : vector<1x32xf32>
      %368 = arith.subf %366, %367 : vector<1x32xf32>
      %369 = arith.mulf %360, %344 : vector<1x32xf32>
      %370 = arith.subf %368, %369 : vector<1x32xf32>
      %cst_185 = arith.constant -1.000000e+01 : f32
      %cst_186 = arith.constant 1.000000e+01 : f32
      %371 = vector.broadcast %cst_185 : f32 to vector<1x32xf32>
      %372 = arith.maximumf %371, %370 : vector<1x32xf32>
      %373 = vector.broadcast %cst_186 : f32 to vector<1x32xf32>
      %374 = arith.minimumf %373, %372 : vector<1x32xf32>
      %c0_187 = arith.constant 0 : index
      %c0_188 = arith.constant 0 : index
      %375 = vector.load %arg14[%c0_187, %c0_188] : memref<2x32xf32, #tpu.memory_space<vmem>>, vector<1x32xf32>
      tpu.vector_store %arg14[%c0_187, %c0_188], %353 {strides = array<i32>} : memref<2x32xf32, #tpu.memory_space<vmem>>, vector<1x32xf32>,
      %c1_189 = arith.constant 1 : index
      %c0_190 = arith.constant 0 : index
      %376 = vector.load %arg14[%c1_189, %c0_190] : memref<2x32xf32, #tpu.memory_space<vmem>>, vector<1x32xf32>
      tpu.vector_store %arg14[%c1_189, %c0_190], %360 {strides = array<i32>} : memref<2x32xf32, #tpu.memory_space<vmem>>, vector<1x32xf32>,
      %377 = math.tanh %374 : vector<1x32xf32>
      %378 = arith.index_cast %40 : i32 to index
      %c0_191 = arith.constant 0 : index
      %379 = vector.load %arg17[%378, %c0_191] : memref<2x32xf32, #tpu.memory_space<vmem>>, vector<1x32xf32>
      tpu.vector_store %arg17[%378, %c0_191], %377 {strides = array<i32>} : memref<2x32xf32, #tpu.memory_space<vmem>>, vector<1x32xf32>,
    }
    %c2_i32_32 = arith.constant 2 : i32
    %c0_33 = arith.constant 0 : index
    %c0_34 = arith.constant 0 : index
    %18 = vector.load %arg17[%c0_33, %c0_34] : memref<2x32xf32, #tpu.memory_space<vmem>>, vector<2x32xf32>
    %c0_35 = arith.constant 0 : index
    %c0_36 = arith.constant 0 : index
    %19 = vector.load %arg4[%c0_35, %c0_36] : memref<32x10xf32, #tpu.memory_space<vmem>>, vector<32x10xf32>
    %cst_37 = arith.constant dense<0.000000e+00> : vector<2x10xf32>
    %20 = tpu.matmul %18, %19, %cst_37 {dimension_numbers = #tpu.dot_dimension_numbers<[1], [0], [0], [1], [0, 0, 1, 1], [], []>} : vector<2x32xf32>, vector<32x10xf32>, vector<2x10xf32> -> vector<2x10xf32>
    %c0_38 = arith.constant 0 : index
    %c0_39 = arith.constant 0 : index
    %21 = vector.load %arg19[%c0_38, %c0_39] : memref<2x10xf32, #tpu.memory_space<vmem>>, vector<2x10xf32>
    tpu.vector_store %arg19[%c0_38, %c0_39], %20 {strides = array<i32>} : memref<2x10xf32, #tpu.memory_space<vmem>>, vector<2x10xf32>,
    %c0_40 = arith.constant 0 : index
    %c0_41 = arith.constant 0 : index
    %22 = vector.load %arg11[%c0_40, %c0_41] : memref<2x10xf32, #tpu.memory_space<vmem>>, vector<2x10xf32>
    %c0_42 = arith.constant 0 : index
    %c0_43 = arith.constant 0 : index
    %23 = vector.load %arg15[%c0_42, %c0_43] : memref<2x10xf32, #tpu.memory_space<vmem>>, vector<2x10xf32>
    tpu.vector_store %arg15[%c0_42, %c0_43], %22 {strides = array<i32>} : memref<2x10xf32, #tpu.memory_space<vmem>>, vector<2x10xf32>,
    %c0_44 = arith.constant 0 : index
    %c0_45 = arith.constant 0 : index
    %24 = vector.load %arg7[%c0_44, %c0_45] : memref<10x10xf32, #tpu.memory_space<vmem>>, vector<10x10xf32>
    %c0_46 = arith.constant 0 : index
    %c0_47 = arith.constant 0 : index
    %25 = vector.load %arg8[%c0_46, %c0_47] : memref<10x10xf32, #tpu.memory_space<vmem>>, vector<10x10xf32>
    %c0_i32_48 = arith.constant 0 : i32
    %c2_i32_49 = arith.constant 2 : i32
    %26 = arith.addi %c0_i32_48, %c2_i32_49 : i32
    %c1_i32_50 = arith.constant 1 : i32
    scf.for %arg21 = %c0_i32_48 to %26 step %c1_i32_50  : i32 {
      %c1_i32_58 = arith.constant 1 : i32
      %39 = arith.muli %arg21, %c1_i32_58 : i32
      %c0_i32_59 = arith.constant 0 : i32
      %40 = arith.addi %c0_i32_59, %39 : i32
      %41 = arith.index_cast %40 : i32 to index
      %c0_60 = arith.constant 0 : index
      %42 = vector.load %arg19[%41, %c0_60] : memref<2x10xf32, #tpu.memory_space<vmem>>, vector<1x10xf32>
      %c0_61 = arith.constant 0 : index
      %c0_62 = arith.constant 0 : index
      %43 = vector.load %arg15[%c0_61, %c0_62] : memref<2x10xf32, #tpu.memory_space<vmem>>, vector<1x10xf32>
      %c1 = arith.constant 1 : index
      %c0_63 = arith.constant 0 : index
      %44 = vector.load %arg15[%c1, %c0_63] : memref<2x10xf32, #tpu.memory_space<vmem>>, vector<1x10xf32>
      %c0_i32_64 = arith.constant 0 : i32
      %cst_65 = arith.constant dense<0.000000e+00> : vector<1x10xf32>
      %45 = tpu.matmul %42, %24, %cst_65 {dimension_numbers = #tpu.dot_dimension_numbers<[1], [0], [0], [1], [0, 0, 1, 1], [], []>} : vector<1x10xf32>, vector<10x10xf32>, vector<1x10xf32> -> vector<1x10xf32>
      %cst_66 = arith.constant dense<0.000000e+00> : vector<1x10xf32>
      %46 = tpu.matmul %42, %25, %cst_66 {dimension_numbers = #tpu.dot_dimension_numbers<[1], [0], [0], [1], [0, 0, 1, 1], [], []>} : vector<1x10xf32>, vector<10x10xf32>, vector<1x10xf32> -> vector<1x10xf32>
      %47 = arith.subf %45, %42 : vector<1x10xf32>
      %48 = arith.subf %46, %42 : vector<1x10xf32>
      %49 = arith.addf %47, %48 : vector<1x10xf32>
      %cst_67 = arith.constant 0.00999999977 : f32
      %50 = vector.broadcast %cst_67 : f32 to vector<1x10xf32>
      %51 = arith.mulf %50, %48 : vector<1x10xf32>
      %52 = arith.subf %43, %51 : vector<1x10xf32>
      %cst_68 = arith.constant -1.000000e+00 : f32
      %cst_69 = arith.constant 1.000000e+00 : f32
      %53 = vector.broadcast %cst_68 : f32 to vector<1x10xf32>
      %54 = arith.maximumf %53, %52 : vector<1x10xf32>
      %55 = vector.broadcast %cst_69 : f32 to vector<1x10xf32>
      %56 = arith.minimumf %55, %54 : vector<1x10xf32>
      %cst_70 = arith.constant 0.00999999977 : f32
      %57 = vector.broadcast %cst_70 : f32 to vector<1x10xf32>
      %58 = arith.mulf %57, %47 : vector<1x10xf32>
      %59 = arith.subf %44, %58 : vector<1x10xf32>
      %cst_71 = arith.constant -1.000000e+00 : f32
      %cst_72 = arith.constant 1.000000e+00 : f32
      %60 = vector.broadcast %cst_71 : f32 to vector<1x10xf32>
      %61 = arith.maximumf %60, %59 : vector<1x10xf32>
      %62 = vector.broadcast %cst_72 : f32 to vector<1x10xf32>
      %63 = arith.minimumf %62, %61 : vector<1x10xf32>
      %cst_73 = arith.constant 0.00999999977 : f32
      %64 = vector.broadcast %cst_73 : f32 to vector<1x10xf32>
      %65 = arith.mulf %64, %49 : vector<1x10xf32>
      %66 = arith.addf %42, %65 : vector<1x10xf32>
      %cst_74 = arith.constant 1.000000e-03 : f32
      %67 = vector.broadcast %cst_74 : f32 to vector<1x10xf32>
      %68 = arith.mulf %67, %42 : vector<1x10xf32>
      %69 = arith.subf %66, %68 : vector<1x10xf32>
      %70 = arith.mulf %56, %48 : vector<1x10xf32>
      %71 = arith.subf %69, %70 : vector<1x10xf32>
      %72 = arith.mulf %63, %47 : vector<1x10xf32>
      %73 = arith.subf %71, %72 : vector<1x10xf32>
      %cst_75 = arith.constant -1.000000e+01 : f32
      %cst_76 = arith.constant 1.000000e+01 : f32
      %74 = vector.broadcast %cst_75 : f32 to vector<1x10xf32>
      %75 = arith.maximumf %74, %73 : vector<1x10xf32>
      %76 = vector.broadcast %cst_76 : f32 to vector<1x10xf32>
      %77 = arith.minimumf %76, %75 : vector<1x10xf32>
      %c1_i32_77 = arith.constant 1 : i32
      %cst_78 = arith.constant dense<0.000000e+00> : vector<1x10xf32>
      %78 = tpu.matmul %77, %24, %cst_78 {dimension_numbers = #tpu.dot_dimension_numbers<[1], [0], [0], [1], [0, 0, 1, 1], [], []>} : vector<1x10xf32>, vector<10x10xf32>, vector<1x10xf32> -> vector<1x10xf32>
      %cst_79 = arith.constant dense<0.000000e+00> : vector<1x10xf32>
      %79 = tpu.matmul %77, %25, %cst_79 {dimension_numbers = #tpu.dot_dimension_numbers<[1], [0], [0], [1], [0, 0, 1, 1], [], []>} : vector<1x10xf32>, vector<10x10xf32>, vector<1x10xf32> -> vector<1x10xf32>
      %80 = arith.subf %78, %77 : vector<1x10xf32>
      %81 = arith.subf %79, %77 : vector<1x10xf32>
      %82 = arith.addf %80, %81 : vector<1x10xf32>
      %cst_80 = arith.constant 0.00999999977 : f32
      %83 = vector.broadcast %cst_80 : f32 to vector<1x10xf32>
      %84 = arith.mulf %83, %81 : vector<1x10xf32>
      %85 = arith.subf %56, %84 : vector<1x10xf32>
      %cst_81 = arith.constant -1.000000e+00 : f32
      %cst_82 = arith.constant 1.000000e+00 : f32
      %86 = vector.broadcast %cst_81 : f32 to vector<1x10xf32>
      %87 = arith.maximumf %86, %85 : vector<1x10xf32>
      %88 = vector.broadcast %cst_82 : f32 to vector<1x10xf32>
      %89 = arith.minimumf %88, %87 : vector<1x10xf32>
      %cst_83 = arith.constant 0.00999999977 : f32
      %90 = vector.broadcast %cst_83 : f32 to vector<1x10xf32>
      %91 = arith.mulf %90, %80 : vector<1x10xf32>
      %92 = arith.subf %63, %91 : vector<1x10xf32>
      %cst_84 = arith.constant -1.000000e+00 : f32
      %cst_85 = arith.constant 1.000000e+00 : f32
      %93 = vector.broadcast %cst_84 : f32 to vector<1x10xf32>
      %94 = arith.maximumf %93, %92 : vector<1x10xf32>
      %95 = vector.broadcast %cst_85 : f32 to vector<1x10xf32>
      %96 = arith.minimumf %95, %94 : vector<1x10xf32>
      %cst_86 = arith.constant 0.00999999977 : f32
      %97 = vector.broadcast %cst_86 : f32 to vector<1x10xf32>
      %98 = arith.mulf %97, %82 : vector<1x10xf32>
      %99 = arith.addf %77, %98 : vector<1x10xf32>
      %cst_87 = arith.constant 1.000000e-03 : f32
      %100 = vector.broadcast %cst_87 : f32 to vector<1x10xf32>
      %101 = arith.mulf %100, %77 : vector<1x10xf32>
      %102 = arith.subf %99, %101 : vector<1x10xf32>
      %103 = arith.mulf %89, %81 : vector<1x10xf32>
      %104 = arith.subf %102, %103 : vector<1x10xf32>
      %105 = arith.mulf %96, %80 : vector<1x10xf32>
      %106 = arith.subf %104, %105 : vector<1x10xf32>
      %cst_88 = arith.constant -1.000000e+01 : f32
      %cst_89 = arith.constant 1.000000e+01 : f32
      %107 = vector.broadcast %cst_88 : f32 to vector<1x10xf32>
      %108 = arith.maximumf %107, %106 : vector<1x10xf32>
      %109 = vector.broadcast %cst_89 : f32 to vector<1x10xf32>
      %110 = arith.minimumf %109, %108 : vector<1x10xf32>
      %c2_i32_90 = arith.constant 2 : i32
      %cst_91 = arith.constant dense<0.000000e+00> : vector<1x10xf32>
      %111 = tpu.matmul %110, %24, %cst_91 {dimension_numbers = #tpu.dot_dimension_numbers<[1], [0], [0], [1], [0, 0, 1, 1], [], []>} : vector<1x10xf32>, vector<10x10xf32>, vector<1x10xf32> -> vector<1x10xf32>
      %cst_92 = arith.constant dense<0.000000e+00> : vector<1x10xf32>
      %112 = tpu.matmul %110, %25, %cst_92 {dimension_numbers = #tpu.dot_dimension_numbers<[1], [0], [0], [1], [0, 0, 1, 1], [], []>} : vector<1x10xf32>, vector<10x10xf32>, vector<1x10xf32> -> vector<1x10xf32>
      %113 = arith.subf %111, %110 : vector<1x10xf32>
      %114 = arith.subf %112, %110 : vector<1x10xf32>
      %115 = arith.addf %113, %114 : vector<1x10xf32>
      %cst_93 = arith.constant 0.00999999977 : f32
      %116 = vector.broadcast %cst_93 : f32 to vector<1x10xf32>
      %117 = arith.mulf %116, %114 : vector<1x10xf32>
      %118 = arith.subf %89, %117 : vector<1x10xf32>
      %cst_94 = arith.constant -1.000000e+00 : f32
      %cst_95 = arith.constant 1.000000e+00 : f32
      %119 = vector.broadcast %cst_94 : f32 to vector<1x10xf32>
      %120 = arith.maximumf %119, %118 : vector<1x10xf32>
      %121 = vector.broadcast %cst_95 : f32 to vector<1x10xf32>
      %122 = arith.minimumf %121, %120 : vector<1x10xf32>
      %cst_96 = arith.constant 0.00999999977 : f32
      %123 = vector.broadcast %cst_96 : f32 to vector<1x10xf32>
      %124 = arith.mulf %123, %113 : vector<1x10xf32>
      %125 = arith.subf %96, %124 : vector<1x10xf32>
      %cst_97 = arith.constant -1.000000e+00 : f32
      %cst_98 = arith.constant 1.000000e+00 : f32
      %126 = vector.broadcast %cst_97 : f32 to vector<1x10xf32>
      %127 = arith.maximumf %126, %125 : vector<1x10xf32>
      %128 = vector.broadcast %cst_98 : f32 to vector<1x10xf32>
      %129 = arith.minimumf %128, %127 : vector<1x10xf32>
      %cst_99 = arith.constant 0.00999999977 : f32
      %130 = vector.broadcast %cst_99 : f32 to vector<1x10xf32>
      %131 = arith.mulf %130, %115 : vector<1x10xf32>
      %132 = arith.addf %110, %131 : vector<1x10xf32>
      %cst_100 = arith.constant 1.000000e-03 : f32
      %133 = vector.broadcast %cst_100 : f32 to vector<1x10xf32>
      %134 = arith.mulf %133, %110 : vector<1x10xf32>
      %135 = arith.subf %132, %134 : vector<1x10xf32>
      %136 = arith.mulf %122, %114 : vector<1x10xf32>
      %137 = arith.subf %135, %136 : vector<1x10xf32>
      %138 = arith.mulf %129, %113 : vector<1x10xf32>
      %139 = arith.subf %137, %138 : vector<1x10xf32>
      %cst_101 = arith.constant -1.000000e+01 : f32
      %cst_102 = arith.constant 1.000000e+01 : f32
      %140 = vector.broadcast %cst_101 : f32 to vector<1x10xf32>
      %141 = arith.maximumf %140, %139 : vector<1x10xf32>
      %142 = vector.broadcast %cst_102 : f32 to vector<1x10xf32>
      %143 = arith.minimumf %142, %141 : vector<1x10xf32>
      %c3_i32 = arith.constant 3 : i32
      %cst_103 = arith.constant dense<0.000000e+00> : vector<1x10xf32>
      %144 = tpu.matmul %143, %24, %cst_103 {dimension_numbers = #tpu.dot_dimension_numbers<[1], [0], [0], [1], [0, 0, 1, 1], [], []>} : vector<1x10xf32>, vector<10x10xf32>, vector<1x10xf32> -> vector<1x10xf32>
      %cst_104 = arith.constant dense<0.000000e+00> : vector<1x10xf32>
      %145 = tpu.matmul %143, %25, %cst_104 {dimension_numbers = #tpu.dot_dimension_numbers<[1], [0], [0], [1], [0, 0, 1, 1], [], []>} : vector<1x10xf32>, vector<10x10xf32>, vector<1x10xf32> -> vector<1x10xf32>
      %146 = arith.subf %144, %143 : vector<1x10xf32>
      %147 = arith.subf %145, %143 : vector<1x10xf32>
      %148 = arith.addf %146, %147 : vector<1x10xf32>
      %cst_105 = arith.constant 0.00999999977 : f32
      %149 = vector.broadcast %cst_105 : f32 to vector<1x10xf32>
      %150 = arith.mulf %149, %147 : vector<1x10xf32>
      %151 = arith.subf %122, %150 : vector<1x10xf32>
      %cst_106 = arith.constant -1.000000e+00 : f32
      %cst_107 = arith.constant 1.000000e+00 : f32
      %152 = vector.broadcast %cst_106 : f32 to vector<1x10xf32>
      %153 = arith.maximumf %152, %151 : vector<1x10xf32>
      %154 = vector.broadcast %cst_107 : f32 to vector<1x10xf32>
      %155 = arith.minimumf %154, %153 : vector<1x10xf32>
      %cst_108 = arith.constant 0.00999999977 : f32
      %156 = vector.broadcast %cst_108 : f32 to vector<1x10xf32>
      %157 = arith.mulf %156, %146 : vector<1x10xf32>
      %158 = arith.subf %129, %157 : vector<1x10xf32>
      %cst_109 = arith.constant -1.000000e+00 : f32
      %cst_110 = arith.constant 1.000000e+00 : f32
      %159 = vector.broadcast %cst_109 : f32 to vector<1x10xf32>
      %160 = arith.maximumf %159, %158 : vector<1x10xf32>
      %161 = vector.broadcast %cst_110 : f32 to vector<1x10xf32>
      %162 = arith.minimumf %161, %160 : vector<1x10xf32>
      %cst_111 = arith.constant 0.00999999977 : f32
      %163 = vector.broadcast %cst_111 : f32 to vector<1x10xf32>
      %164 = arith.mulf %163, %148 : vector<1x10xf32>
      %165 = arith.addf %143, %164 : vector<1x10xf32>
      %cst_112 = arith.constant 1.000000e-03 : f32
      %166 = vector.broadcast %cst_112 : f32 to vector<1x10xf32>
      %167 = arith.mulf %166, %143 : vector<1x10xf32>
      %168 = arith.subf %165, %167 : vector<1x10xf32>
      %169 = arith.mulf %155, %147 : vector<1x10xf32>
      %170 = arith.subf %168, %169 : vector<1x10xf32>
      %171 = arith.mulf %162, %146 : vector<1x10xf32>
      %172 = arith.subf %170, %171 : vector<1x10xf32>
      %cst_113 = arith.constant -1.000000e+01 : f32
      %cst_114 = arith.constant 1.000000e+01 : f32
      %173 = vector.broadcast %cst_113 : f32 to vector<1x10xf32>
      %174 = arith.maximumf %173, %172 : vector<1x10xf32>
      %175 = vector.broadcast %cst_114 : f32 to vector<1x10xf32>
      %176 = arith.minimumf %175, %174 : vector<1x10xf32>
      %c4_i32 = arith.constant 4 : i32
      %cst_115 = arith.constant dense<0.000000e+00> : vector<1x10xf32>
      %177 = tpu.matmul %176, %24, %cst_115 {dimension_numbers = #tpu.dot_dimension_numbers<[1], [0], [0], [1], [0, 0, 1, 1], [], []>} : vector<1x10xf32>, vector<10x10xf32>, vector<1x10xf32> -> vector<1x10xf32>
      %cst_116 = arith.constant dense<0.000000e+00> : vector<1x10xf32>
      %178 = tpu.matmul %176, %25, %cst_116 {dimension_numbers = #tpu.dot_dimension_numbers<[1], [0], [0], [1], [0, 0, 1, 1], [], []>} : vector<1x10xf32>, vector<10x10xf32>, vector<1x10xf32> -> vector<1x10xf32>
      %179 = arith.subf %177, %176 : vector<1x10xf32>
      %180 = arith.subf %178, %176 : vector<1x10xf32>
      %181 = arith.addf %179, %180 : vector<1x10xf32>
      %cst_117 = arith.constant 0.00999999977 : f32
      %182 = vector.broadcast %cst_117 : f32 to vector<1x10xf32>
      %183 = arith.mulf %182, %180 : vector<1x10xf32>
      %184 = arith.subf %155, %183 : vector<1x10xf32>
      %cst_118 = arith.constant -1.000000e+00 : f32
      %cst_119 = arith.constant 1.000000e+00 : f32
      %185 = vector.broadcast %cst_118 : f32 to vector<1x10xf32>
      %186 = arith.maximumf %185, %184 : vector<1x10xf32>
      %187 = vector.broadcast %cst_119 : f32 to vector<1x10xf32>
      %188 = arith.minimumf %187, %186 : vector<1x10xf32>
      %cst_120 = arith.constant 0.00999999977 : f32
      %189 = vector.broadcast %cst_120 : f32 to vector<1x10xf32>
      %190 = arith.mulf %189, %179 : vector<1x10xf32>
      %191 = arith.subf %162, %190 : vector<1x10xf32>
      %cst_121 = arith.constant -1.000000e+00 : f32
      %cst_122 = arith.constant 1.000000e+00 : f32
      %192 = vector.broadcast %cst_121 : f32 to vector<1x10xf32>
      %193 = arith.maximumf %192, %191 : vector<1x10xf32>
      %194 = vector.broadcast %cst_122 : f32 to vector<1x10xf32>
      %195 = arith.minimumf %194, %193 : vector<1x10xf32>
      %cst_123 = arith.constant 0.00999999977 : f32
      %196 = vector.broadcast %cst_123 : f32 to vector<1x10xf32>
      %197 = arith.mulf %196, %181 : vector<1x10xf32>
      %198 = arith.addf %176, %197 : vector<1x10xf32>
      %cst_124 = arith.constant 1.000000e-03 : f32
      %199 = vector.broadcast %cst_124 : f32 to vector<1x10xf32>
      %200 = arith.mulf %199, %176 : vector<1x10xf32>
      %201 = arith.subf %198, %200 : vector<1x10xf32>
      %202 = arith.mulf %188, %180 : vector<1x10xf32>
      %203 = arith.subf %201, %202 : vector<1x10xf32>
      %204 = arith.mulf %195, %179 : vector<1x10xf32>
      %205 = arith.subf %203, %204 : vector<1x10xf32>
      %cst_125 = arith.constant -1.000000e+01 : f32
      %cst_126 = arith.constant 1.000000e+01 : f32
      %206 = vector.broadcast %cst_125 : f32 to vector<1x10xf32>
      %207 = arith.maximumf %206, %205 : vector<1x10xf32>
      %208 = vector.broadcast %cst_126 : f32 to vector<1x10xf32>
      %209 = arith.minimumf %208, %207 : vector<1x10xf32>
      %c5_i32 = arith.constant 5 : i32
      %cst_127 = arith.constant dense<0.000000e+00> : vector<1x10xf32>
      %210 = tpu.matmul %209, %24, %cst_127 {dimension_numbers = #tpu.dot_dimension_numbers<[1], [0], [0], [1], [0, 0, 1, 1], [], []>} : vector<1x10xf32>, vector<10x10xf32>, vector<1x10xf32> -> vector<1x10xf32>
      %cst_128 = arith.constant dense<0.000000e+00> : vector<1x10xf32>
      %211 = tpu.matmul %209, %25, %cst_128 {dimension_numbers = #tpu.dot_dimension_numbers<[1], [0], [0], [1], [0, 0, 1, 1], [], []>} : vector<1x10xf32>, vector<10x10xf32>, vector<1x10xf32> -> vector<1x10xf32>
      %212 = arith.subf %210, %209 : vector<1x10xf32>
      %213 = arith.subf %211, %209 : vector<1x10xf32>
      %214 = arith.addf %212, %213 : vector<1x10xf32>
      %cst_129 = arith.constant 0.00999999977 : f32
      %215 = vector.broadcast %cst_129 : f32 to vector<1x10xf32>
      %216 = arith.mulf %215, %213 : vector<1x10xf32>
      %217 = arith.subf %188, %216 : vector<1x10xf32>
      %cst_130 = arith.constant -1.000000e+00 : f32
      %cst_131 = arith.constant 1.000000e+00 : f32
      %218 = vector.broadcast %cst_130 : f32 to vector<1x10xf32>
      %219 = arith.maximumf %218, %217 : vector<1x10xf32>
      %220 = vector.broadcast %cst_131 : f32 to vector<1x10xf32>
      %221 = arith.minimumf %220, %219 : vector<1x10xf32>
      %cst_132 = arith.constant 0.00999999977 : f32
      %222 = vector.broadcast %cst_132 : f32 to vector<1x10xf32>
      %223 = arith.mulf %222, %212 : vector<1x10xf32>
      %224 = arith.subf %195, %223 : vector<1x10xf32>
      %cst_133 = arith.constant -1.000000e+00 : f32
      %cst_134 = arith.constant 1.000000e+00 : f32
      %225 = vector.broadcast %cst_133 : f32 to vector<1x10xf32>
      %226 = arith.maximumf %225, %224 : vector<1x10xf32>
      %227 = vector.broadcast %cst_134 : f32 to vector<1x10xf32>
      %228 = arith.minimumf %227, %226 : vector<1x10xf32>
      %cst_135 = arith.constant 0.00999999977 : f32
      %229 = vector.broadcast %cst_135 : f32 to vector<1x10xf32>
      %230 = arith.mulf %229, %214 : vector<1x10xf32>
      %231 = arith.addf %209, %230 : vector<1x10xf32>
      %cst_136 = arith.constant 1.000000e-03 : f32
      %232 = vector.broadcast %cst_136 : f32 to vector<1x10xf32>
      %233 = arith.mulf %232, %209 : vector<1x10xf32>
      %234 = arith.subf %231, %233 : vector<1x10xf32>
      %235 = arith.mulf %221, %213 : vector<1x10xf32>
      %236 = arith.subf %234, %235 : vector<1x10xf32>
      %237 = arith.mulf %228, %212 : vector<1x10xf32>
      %238 = arith.subf %236, %237 : vector<1x10xf32>
      %cst_137 = arith.constant -1.000000e+01 : f32
      %cst_138 = arith.constant 1.000000e+01 : f32
      %239 = vector.broadcast %cst_137 : f32 to vector<1x10xf32>
      %240 = arith.maximumf %239, %238 : vector<1x10xf32>
      %241 = vector.broadcast %cst_138 : f32 to vector<1x10xf32>
      %242 = arith.minimumf %241, %240 : vector<1x10xf32>
      %c6_i32 = arith.constant 6 : i32
      %cst_139 = arith.constant dense<0.000000e+00> : vector<1x10xf32>
      %243 = tpu.matmul %242, %24, %cst_139 {dimension_numbers = #tpu.dot_dimension_numbers<[1], [0], [0], [1], [0, 0, 1, 1], [], []>} : vector<1x10xf32>, vector<10x10xf32>, vector<1x10xf32> -> vector<1x10xf32>
      %cst_140 = arith.constant dense<0.000000e+00> : vector<1x10xf32>
      %244 = tpu.matmul %242, %25, %cst_140 {dimension_numbers = #tpu.dot_dimension_numbers<[1], [0], [0], [1], [0, 0, 1, 1], [], []>} : vector<1x10xf32>, vector<10x10xf32>, vector<1x10xf32> -> vector<1x10xf32>
      %245 = arith.subf %243, %242 : vector<1x10xf32>
      %246 = arith.subf %244, %242 : vector<1x10xf32>
      %247 = arith.addf %245, %246 : vector<1x10xf32>
      %cst_141 = arith.constant 0.00999999977 : f32
      %248 = vector.broadcast %cst_141 : f32 to vector<1x10xf32>
      %249 = arith.mulf %248, %246 : vector<1x10xf32>
      %250 = arith.subf %221, %249 : vector<1x10xf32>
      %cst_142 = arith.constant -1.000000e+00 : f32
      %cst_143 = arith.constant 1.000000e+00 : f32
      %251 = vector.broadcast %cst_142 : f32 to vector<1x10xf32>
      %252 = arith.maximumf %251, %250 : vector<1x10xf32>
      %253 = vector.broadcast %cst_143 : f32 to vector<1x10xf32>
      %254 = arith.minimumf %253, %252 : vector<1x10xf32>
      %cst_144 = arith.constant 0.00999999977 : f32
      %255 = vector.broadcast %cst_144 : f32 to vector<1x10xf32>
      %256 = arith.mulf %255, %245 : vector<1x10xf32>
      %257 = arith.subf %228, %256 : vector<1x10xf32>
      %cst_145 = arith.constant -1.000000e+00 : f32
      %cst_146 = arith.constant 1.000000e+00 : f32
      %258 = vector.broadcast %cst_145 : f32 to vector<1x10xf32>
      %259 = arith.maximumf %258, %257 : vector<1x10xf32>
      %260 = vector.broadcast %cst_146 : f32 to vector<1x10xf32>
      %261 = arith.minimumf %260, %259 : vector<1x10xf32>
      %cst_147 = arith.constant 0.00999999977 : f32
      %262 = vector.broadcast %cst_147 : f32 to vector<1x10xf32>
      %263 = arith.mulf %262, %247 : vector<1x10xf32>
      %264 = arith.addf %242, %263 : vector<1x10xf32>
      %cst_148 = arith.constant 1.000000e-03 : f32
      %265 = vector.broadcast %cst_148 : f32 to vector<1x10xf32>
      %266 = arith.mulf %265, %242 : vector<1x10xf32>
      %267 = arith.subf %264, %266 : vector<1x10xf32>
      %268 = arith.mulf %254, %246 : vector<1x10xf32>
      %269 = arith.subf %267, %268 : vector<1x10xf32>
      %270 = arith.mulf %261, %245 : vector<1x10xf32>
      %271 = arith.subf %269, %270 : vector<1x10xf32>
      %cst_149 = arith.constant -1.000000e+01 : f32
      %cst_150 = arith.constant 1.000000e+01 : f32
      %272 = vector.broadcast %cst_149 : f32 to vector<1x10xf32>
      %273 = arith.maximumf %272, %271 : vector<1x10xf32>
      %274 = vector.broadcast %cst_150 : f32 to vector<1x10xf32>
      %275 = arith.minimumf %274, %273 : vector<1x10xf32>
      %c7_i32 = arith.constant 7 : i32
      %cst_151 = arith.constant dense<0.000000e+00> : vector<1x10xf32>
      %276 = tpu.matmul %275, %24, %cst_151 {dimension_numbers = #tpu.dot_dimension_numbers<[1], [0], [0], [1], [0, 0, 1, 1], [], []>} : vector<1x10xf32>, vector<10x10xf32>, vector<1x10xf32> -> vector<1x10xf32>
      %cst_152 = arith.constant dense<0.000000e+00> : vector<1x10xf32>
      %277 = tpu.matmul %275, %25, %cst_152 {dimension_numbers = #tpu.dot_dimension_numbers<[1], [0], [0], [1], [0, 0, 1, 1], [], []>} : vector<1x10xf32>, vector<10x10xf32>, vector<1x10xf32> -> vector<1x10xf32>
      %278 = arith.subf %276, %275 : vector<1x10xf32>
      %279 = arith.subf %277, %275 : vector<1x10xf32>
      %280 = arith.addf %278, %279 : vector<1x10xf32>
      %cst_153 = arith.constant 0.00999999977 : f32
      %281 = vector.broadcast %cst_153 : f32 to vector<1x10xf32>
      %282 = arith.mulf %281, %279 : vector<1x10xf32>
      %283 = arith.subf %254, %282 : vector<1x10xf32>
      %cst_154 = arith.constant -1.000000e+00 : f32
      %cst_155 = arith.constant 1.000000e+00 : f32
      %284 = vector.broadcast %cst_154 : f32 to vector<1x10xf32>
      %285 = arith.maximumf %284, %283 : vector<1x10xf32>
      %286 = vector.broadcast %cst_155 : f32 to vector<1x10xf32>
      %287 = arith.minimumf %286, %285 : vector<1x10xf32>
      %cst_156 = arith.constant 0.00999999977 : f32
      %288 = vector.broadcast %cst_156 : f32 to vector<1x10xf32>
      %289 = arith.mulf %288, %278 : vector<1x10xf32>
      %290 = arith.subf %261, %289 : vector<1x10xf32>
      %cst_157 = arith.constant -1.000000e+00 : f32
      %cst_158 = arith.constant 1.000000e+00 : f32
      %291 = vector.broadcast %cst_157 : f32 to vector<1x10xf32>
      %292 = arith.maximumf %291, %290 : vector<1x10xf32>
      %293 = vector.broadcast %cst_158 : f32 to vector<1x10xf32>
      %294 = arith.minimumf %293, %292 : vector<1x10xf32>
      %cst_159 = arith.constant 0.00999999977 : f32
      %295 = vector.broadcast %cst_159 : f32 to vector<1x10xf32>
      %296 = arith.mulf %295, %280 : vector<1x10xf32>
      %297 = arith.addf %275, %296 : vector<1x10xf32>
      %cst_160 = arith.constant 1.000000e-03 : f32
      %298 = vector.broadcast %cst_160 : f32 to vector<1x10xf32>
      %299 = arith.mulf %298, %275 : vector<1x10xf32>
      %300 = arith.subf %297, %299 : vector<1x10xf32>
      %301 = arith.mulf %287, %279 : vector<1x10xf32>
      %302 = arith.subf %300, %301 : vector<1x10xf32>
      %303 = arith.mulf %294, %278 : vector<1x10xf32>
      %304 = arith.subf %302, %303 : vector<1x10xf32>
      %cst_161 = arith.constant -1.000000e+01 : f32
      %cst_162 = arith.constant 1.000000e+01 : f32
      %305 = vector.broadcast %cst_161 : f32 to vector<1x10xf32>
      %306 = arith.maximumf %305, %304 : vector<1x10xf32>
      %307 = vector.broadcast %cst_162 : f32 to vector<1x10xf32>
      %308 = arith.minimumf %307, %306 : vector<1x10xf32>
      %c8_i32 = arith.constant 8 : i32
      %cst_163 = arith.constant dense<0.000000e+00> : vector<1x10xf32>
      %309 = tpu.matmul %308, %24, %cst_163 {dimension_numbers = #tpu.dot_dimension_numbers<[1], [0], [0], [1], [0, 0, 1, 1], [], []>} : vector<1x10xf32>, vector<10x10xf32>, vector<1x10xf32> -> vector<1x10xf32>
      %cst_164 = arith.constant dense<0.000000e+00> : vector<1x10xf32>
      %310 = tpu.matmul %308, %25, %cst_164 {dimension_numbers = #tpu.dot_dimension_numbers<[1], [0], [0], [1], [0, 0, 1, 1], [], []>} : vector<1x10xf32>, vector<10x10xf32>, vector<1x10xf32> -> vector<1x10xf32>
      %311 = arith.subf %309, %308 : vector<1x10xf32>
      %312 = arith.subf %310, %308 : vector<1x10xf32>
      %313 = arith.addf %311, %312 : vector<1x10xf32>
      %cst_165 = arith.constant 0.00999999977 : f32
      %314 = vector.broadcast %cst_165 : f32 to vector<1x10xf32>
      %315 = arith.mulf %314, %312 : vector<1x10xf32>
      %316 = arith.subf %287, %315 : vector<1x10xf32>
      %cst_166 = arith.constant -1.000000e+00 : f32
      %cst_167 = arith.constant 1.000000e+00 : f32
      %317 = vector.broadcast %cst_166 : f32 to vector<1x10xf32>
      %318 = arith.maximumf %317, %316 : vector<1x10xf32>
      %319 = vector.broadcast %cst_167 : f32 to vector<1x10xf32>
      %320 = arith.minimumf %319, %318 : vector<1x10xf32>
      %cst_168 = arith.constant 0.00999999977 : f32
      %321 = vector.broadcast %cst_168 : f32 to vector<1x10xf32>
      %322 = arith.mulf %321, %311 : vector<1x10xf32>
      %323 = arith.subf %294, %322 : vector<1x10xf32>
      %cst_169 = arith.constant -1.000000e+00 : f32
      %cst_170 = arith.constant 1.000000e+00 : f32
      %324 = vector.broadcast %cst_169 : f32 to vector<1x10xf32>
      %325 = arith.maximumf %324, %323 : vector<1x10xf32>
      %326 = vector.broadcast %cst_170 : f32 to vector<1x10xf32>
      %327 = arith.minimumf %326, %325 : vector<1x10xf32>
      %cst_171 = arith.constant 0.00999999977 : f32
      %328 = vector.broadcast %cst_171 : f32 to vector<1x10xf32>
      %329 = arith.mulf %328, %313 : vector<1x10xf32>
      %330 = arith.addf %308, %329 : vector<1x10xf32>
      %cst_172 = arith.constant 1.000000e-03 : f32
      %331 = vector.broadcast %cst_172 : f32 to vector<1x10xf32>
      %332 = arith.mulf %331, %308 : vector<1x10xf32>
      %333 = arith.subf %330, %332 : vector<1x10xf32>
      %334 = arith.mulf %320, %312 : vector<1x10xf32>
      %335 = arith.subf %333, %334 : vector<1x10xf32>
      %336 = arith.mulf %327, %311 : vector<1x10xf32>
      %337 = arith.subf %335, %336 : vector<1x10xf32>
      %cst_173 = arith.constant -1.000000e+01 : f32
      %cst_174 = arith.constant 1.000000e+01 : f32
      %338 = vector.broadcast %cst_173 : f32 to vector<1x10xf32>
      %339 = arith.maximumf %338, %337 : vector<1x10xf32>
      %340 = vector.broadcast %cst_174 : f32 to vector<1x10xf32>
      %341 = arith.minimumf %340, %339 : vector<1x10xf32>
      %c9_i32 = arith.constant 9 : i32
      %cst_175 = arith.constant dense<0.000000e+00> : vector<1x10xf32>
      %342 = tpu.matmul %341, %24, %cst_175 {dimension_numbers = #tpu.dot_dimension_numbers<[1], [0], [0], [1], [0, 0, 1, 1], [], []>} : vector<1x10xf32>, vector<10x10xf32>, vector<1x10xf32> -> vector<1x10xf32>
      %cst_176 = arith.constant dense<0.000000e+00> : vector<1x10xf32>
      %343 = tpu.matmul %341, %25, %cst_176 {dimension_numbers = #tpu.dot_dimension_numbers<[1], [0], [0], [1], [0, 0, 1, 1], [], []>} : vector<1x10xf32>, vector<10x10xf32>, vector<1x10xf32> -> vector<1x10xf32>
      %344 = arith.subf %342, %341 : vector<1x10xf32>
      %345 = arith.subf %343, %341 : vector<1x10xf32>
      %346 = arith.addf %344, %345 : vector<1x10xf32>
      %cst_177 = arith.constant 0.00999999977 : f32
      %347 = vector.broadcast %cst_177 : f32 to vector<1x10xf32>
      %348 = arith.mulf %347, %345 : vector<1x10xf32>
      %349 = arith.subf %320, %348 : vector<1x10xf32>
      %cst_178 = arith.constant -1.000000e+00 : f32
      %cst_179 = arith.constant 1.000000e+00 : f32
      %350 = vector.broadcast %cst_178 : f32 to vector<1x10xf32>
      %351 = arith.maximumf %350, %349 : vector<1x10xf32>
      %352 = vector.broadcast %cst_179 : f32 to vector<1x10xf32>
      %353 = arith.minimumf %352, %351 : vector<1x10xf32>
      %cst_180 = arith.constant 0.00999999977 : f32
      %354 = vector.broadcast %cst_180 : f32 to vector<1x10xf32>
      %355 = arith.mulf %354, %344 : vector<1x10xf32>
      %356 = arith.subf %327, %355 : vector<1x10xf32>
      %cst_181 = arith.constant -1.000000e+00 : f32
      %cst_182 = arith.constant 1.000000e+00 : f32
      %357 = vector.broadcast %cst_181 : f32 to vector<1x10xf32>
      %358 = arith.maximumf %357, %356 : vector<1x10xf32>
      %359 = vector.broadcast %cst_182 : f32 to vector<1x10xf32>
      %360 = arith.minimumf %359, %358 : vector<1x10xf32>
      %cst_183 = arith.constant 0.00999999977 : f32
      %361 = vector.broadcast %cst_183 : f32 to vector<1x10xf32>
      %362 = arith.mulf %361, %346 : vector<1x10xf32>
      %363 = arith.addf %341, %362 : vector<1x10xf32>
      %cst_184 = arith.constant 1.000000e-03 : f32
      %364 = vector.broadcast %cst_184 : f32 to vector<1x10xf32>
      %365 = arith.mulf %364, %341 : vector<1x10xf32>
      %366 = arith.subf %363, %365 : vector<1x10xf32>
      %367 = arith.mulf %353, %345 : vector<1x10xf32>
      %368 = arith.subf %366, %367 : vector<1x10xf32>
      %369 = arith.mulf %360, %344 : vector<1x10xf32>
      %370 = arith.subf %368, %369 : vector<1x10xf32>
      %cst_185 = arith.constant -1.000000e+01 : f32
      %cst_186 = arith.constant 1.000000e+01 : f32
      %371 = vector.broadcast %cst_185 : f32 to vector<1x10xf32>
      %372 = arith.maximumf %371, %370 : vector<1x10xf32>
      %373 = vector.broadcast %cst_186 : f32 to vector<1x10xf32>
      %374 = arith.minimumf %373, %372 : vector<1x10xf32>
      %c0_187 = arith.constant 0 : index
      %c0_188 = arith.constant 0 : index
      %375 = vector.load %arg15[%c0_187, %c0_188] : memref<2x10xf32, #tpu.memory_space<vmem>>, vector<1x10xf32>
      tpu.vector_store %arg15[%c0_187, %c0_188], %353 {strides = array<i32>} : memref<2x10xf32, #tpu.memory_space<vmem>>, vector<1x10xf32>,
      %c1_189 = arith.constant 1 : index
      %c0_190 = arith.constant 0 : index
      %376 = vector.load %arg15[%c1_189, %c0_190] : memref<2x10xf32, #tpu.memory_space<vmem>>, vector<1x10xf32>
      tpu.vector_store %arg15[%c1_189, %c0_190], %360 {strides = array<i32>} : memref<2x10xf32, #tpu.memory_space<vmem>>, vector<1x10xf32>,
      %377 = arith.index_cast %40 : i32 to index
      %c0_191 = arith.constant 0 : index
      %378 = vector.load %arg20[%377, %c0_191] : memref<2x10xf32, #tpu.memory_space<vmem>>, vector<1x10xf32>
      tpu.vector_store %arg20[%377, %c0_191], %374 {strides = array<i32>} : memref<2x10xf32, #tpu.memory_space<vmem>>, vector<1x10xf32>,
    }
    %c2_i32_51 = arith.constant 2 : i32
    %c0_52 = arith.constant 0 : index
    %c0_53 = arith.constant 0 : index
    %27 = vector.load %arg20[%c0_52, %c0_53] : memref<2x10xf32, #tpu.memory_space<vmem>>, vector<2x10xf32>
    %cst_54 = arith.constant dense<0xFF800000> : vector<2xf32>
    %28 = vector.multi_reduction <maximumf>, %27, %cst_54 [1] : vector<2x10xf32> to vector<2xf32>
    %29 = vector.shape_cast %28 : vector<2xf32> to vector<2x1xf32>
    %30 = vector.broadcast %29 : vector<2x1xf32> to vector<2x10xf32>
    %31 = arith.subf %27, %30 : vector<2x10xf32>
    %32 = math.exp %31 : vector<2x10xf32>
    %cst_55 = arith.constant dense<0.000000e+00> : vector<2xf32>
    %33 = vector.multi_reduction <add>, %32, %cst_55 [1] : vector<2x10xf32> to vector<2xf32>
    %34 = vector.shape_cast %33 : vector<2xf32> to vector<2x1xf32>
    %35 = math.log %34 : vector<2x1xf32>
    %36 = vector.broadcast %35 : vector<2x1xf32> to vector<2x10xf32>
    %37 = arith.subf %31, %36 : vector<2x10xf32>
    %c0_56 = arith.constant 0 : index
    %c0_57 = arith.constant 0 : index
    %38 = vector.load %arg12[%c0_56, %c0_57] : memref<2x10xf32, #tpu.memory_space<vmem>>, vector<2x10xf32>
    tpu.vector_store %arg12[%c0_56, %c0_57], %37 {strides = array<i32>} : memref<2x10xf32, #tpu.memory_space<vmem>>, vector<2x10xf32>,
    return
  }
  func.func @transform_0(%arg0: i32) -> (i32, i32) {
    %c0_i32 = arith.constant 0 : i32
    %c0_i32_0 = arith.constant 0 : i32
    %c0_i32_1 = arith.constant 0 : i32
    return %c0_i32, %c0_i32_0 : i32, i32
  }
  func.func @transform_1(%arg0: i32) -> (i32, i32) {
    %c0_i32 = arith.constant 0 : i32
    %c0_i32_0 = arith.constant 0 : i32
    %c0_i32_1 = arith.constant 0 : i32
    return %c0_i32, %c0_i32_0 : i32, i32
  }
  func.func @transform_2(%arg0: i32) -> (i32, i32) {
    %c0_i32 = arith.constant 0 : i32
    %c0_i32_0 = arith.constant 0 : i32
    %c0_i32_1 = arith.constant 0 : i32
    return %c0_i32, %c0_i32_0 : i32, i32
  }
  func.func @transform_3(%arg0: i32) -> (i32, i32) {
    %c0_i32 = arith.constant 0 : i32
    %c0_i32_0 = arith.constant 0 : i32
    %c0_i32_1 = arith.constant 0 : i32
    return %c0_i32, %c0_i32_0 : i32, i32
  }
  func.func @transform_4(%arg0: i32) -> (i32, i32) {
    %c0_i32 = arith.constant 0 : i32
    %c0_i32_0 = arith.constant 0 : i32
    %c0_i32_1 = arith.constant 0 : i32
    return %c0_i32, %c0_i32_0 : i32, i32
  }
  func.func @transform_5(%arg0: i32) -> (i32, i32) {
    %c0_i32 = arith.constant 0 : i32
    %c0_i32_0 = arith.constant 0 : i32
    %c0_i32_1 = arith.constant 0 : i32
    return %c0_i32, %c0_i32_0 : i32, i32
  }
  func.func @transform_6(%arg0: i32) -> (i32, i32) {
    %c0_i32 = arith.constant 0 : i32
    %c0_i32_0 = arith.constant 0 : i32
    %c0_i32_1 = arith.constant 0 : i32
    return %c0_i32, %c0_i32_0 : i32, i32
  }
  func.func @transform_7(%arg0: i32) -> (i32, i32) {
    %c0_i32 = arith.constant 0 : i32
    %c0_i32_0 = arith.constant 0 : i32
    %c0_i32_1 = arith.constant 0 : i32
    return %c0_i32, %c0_i32_0 : i32, i32
  }
  func.func @transform_8(%arg0: i32) -> (i32, i32) {
    %c0_i32 = arith.constant 0 : i32
    %c0_i32_0 = arith.constant 0 : i32
    %c0_i32_1 = arith.constant 0 : i32
    return %c0_i32, %c0_i32_0 : i32, i32
  }
  func.func @transform_9(%arg0: i32) -> (i32, i32) {
    %c0_i32 = arith.constant 0 : i32
    %c0_i32_0 = arith.constant 0 : i32
    %c0_i32_1 = arith.constant 0 : i32
    return %c0_i32, %c0_i32_0 : i32, i32
  }
  func.func @transform_10(%arg0: i32) -> (i32, i32) {
    %c0_i32 = arith.constant 0 : i32
    %c0_i32_0 = arith.constant 0 : i32
    %c0_i32_1 = arith.constant 0 : i32
    return %c0_i32, %c0_i32_0 : i32, i32
  }
  func.func @transform_11(%arg0: i32) -> (i32, i32) {
    %c0_i32 = arith.constant 0 : i32
    %c0_i32_0 = arith.constant 0 : i32
    %c0_i32_1 = arith.constant 0 : i32
    return %c0_i32, %c0_i32_0 : i32, i32
  }
  func.func @transform_12(%arg0: i32) -> (i32, i32) {
    %c0_i32 = arith.constant 0 : i32
    %c0_i32_0 = arith.constant 0 : i32
    %c0_i32_1 = arith.constant 0 : i32
    return %c0_i32, %c0_i32_0 : i32, i32
  }
  func.func @transform_13(%arg0: i32) -> (i32, i32) {
    %c0_i32 = arith.constant 0 : i32
    %c0_i32_0 = arith.constant 0 : i32
    %c0_i32_1 = arith.constant 0 : i32
    return %c0_i32, %c0_i32_0 : i32, i32
  }
  func.func @transform_14(%arg0: i32) -> (i32, i32) {
    %c0_i32 = arith.constant 0 : i32
    %c0_i32_0 = arith.constant 0 : i32
    %c0_i32_1 = arith.constant 0 : i32
    return %c0_i32, %c0_i32_0 : i32, i32
  }
}

</mosaic_0001>

<llo_original>
// kernel: fully_fluid_network.1
$region0: #{fully_fluid_network.1}
  #allocation0 [shape = 'u32[]', space=smem, size = 0x4, offset = 0x4, fixed_abs, tag = 'smem constant byte address 0x4 - core index']
  #allocation1 [shape = 'u32[72,128]{1,0:T(1,128)}', space=vmem, size = 0x9000, scoped, tag = 'internal scratch']
  #allocation2 [shape = 'f32[2,32]{1,0:T(2,128)}', space=vmem, size = 0x400, scoped, tag = 'scratch operand']
  #allocation3 [shape = 'f32[2,32]{1,0:T(2,128)}', space=vmem, size = 0x400, scoped, tag = 'scratch operand']
  #allocation4 [shape = 'f32[2,32]{1,0:T(2,128)}', space=vmem, size = 0x400, scoped, tag = 'scratch operand']
  #allocation5 [shape = 'f32[2,10]{1,0:T(2,128)}', space=vmem, size = 0x400, scoped, tag = 'scratch operand']
  #allocation6 [shape = 'f32[2,10]{1,0:T(2,128)}', space=vmem, size = 0x400, scoped, tag = 'scratch operand']
  %s0 = inlined_call_operand.vmem [shape: f32[2,64], index: 0, kind: input, shape index: {}]
  %s1 = inlined_call_operand.vmem [shape: f32[64,32], index: 1, kind: input, shape index: {}]
  %s2 = inlined_call_operand.vmem [shape: f32[32,32], index: 2, kind: input, shape index: {}]
  %s3 = inlined_call_operand.vmem [shape: f32[32,10], index: 3, kind: input, shape index: {}]
  %s4 = inlined_call_operand.vmem [shape: f32[32,32], index: 4, kind: input, shape index: {}]
  %s5 = inlined_call_operand.vmem [shape: f32[32,32], index: 5, kind: input, shape index: {}]
  %s6 = inlined_call_operand.vmem [shape: f32[10,10], index: 6, kind: input, shape index: {}]
  %s7 = inlined_call_operand.vmem [shape: f32[10,10], index: 7, kind: input, shape index: {}]
  %s8 = inlined_call_operand.vmem [shape: f32[2,32], index: 8, kind: input, shape index: {}]
  %s9 = inlined_call_operand.vmem [shape: f32[2,32], index: 9, kind: input, shape index: {}]
  %s10 = inlined_call_operand.vmem [shape: f32[2,10], index: 10, kind: input, shape index: {}]
  %s11 = inlined_call_operand.hbm [shape: f32[2,10], index: 11, kind: output, shape index: {0}]
  %s12 = inlined_call_operand.hbm [shape: f32[2,32], index: 12, kind: output, shape index: {1}]
  %s13 = inlined_call_operand.hbm [shape: f32[2,32], index: 13, kind: output, shape index: {2}]
  %s14 = inlined_call_operand.hbm [shape: f32[2,10], index: 14, kind: output, shape index: {3}]
  %15 = xla_tuple %s11, %s12, %s13, %s14
  %s16 = sld [smem:[#allocation0]]
  $region99: #{fully_fluid_network.1} parent=0
    _
  %s18 = ssub.s32 1, %s16
  %s19 = scalar_select 0, %s18, %s16
  $region1: #{fully_fluid_network.1} parent=0
    #allocation7 [shape = 'u8[1024]{0}', space=vmem, size = 0x400, scoped, tag = 'output window, operand 0, single buffered']
    #allocation8 [shape = 's32[1]{0}', space=sflag, size = 0x4, scoped, tag = 'scoped memory for fully_fluid_network.1']
    #allocation9 [shape = 'u8[1024]{0}', space=vmem, size = 0x400, scoped, tag = 'output window, operand 1, single buffered']
    #allocation10 [shape = 's32[1]{0}', space=sflag, size = 0x4, scoped, tag = 'scoped memory for fully_fluid_network.1']
    #allocation11 [shape = 'u8[1024]{0}', space=vmem, size = 0x400, scoped, tag = 'output window, operand 2, single buffered']
    #allocation12 [shape = 'u8[1024]{0}', space=vmem, size = 0x400, scoped, tag = 'output window, operand 3, single buffered']
    #allocation13 [shape = 's32[1]{0}', space=sflag, size = 0x4, scoped, tag = 'scoped memory for fully_fluid_network.1']
    %20 = vsyncpa [#allocation8], 0
    %21 = vsyncpa [#allocation10], 0
    %22 = vsyncpa [#allocation13], 0
    // Predicated region
    $region2: #{fully_fluid_network.1} parent=1 // pred_check
      _
    $region3: #{fully_fluid_network.1} parent=1 // pred_check_branch
      %24 = sbr.rel (0) target = $region5
    $region4: #{fully_fluid_network.1} parent=1 // pred_region
      _
    $region5: #{fully_fluid_network.1} parent=1 // pred_fallthru
      _
    // Predicated region
    $region6: #{fully_fluid_network.1} parent=1 // pred_check
      _
    $region7: #{fully_fluid_network.1} parent=1 // pred_check_branch
      %26 = sbr.rel (0) target = $region9
    $region8: #{fully_fluid_network.1} parent=1 // pred_region
      _
    $region9: #{fully_fluid_network.1} parent=1 // pred_fallthru
      _
    // Predicated region
    $region10: #{fully_fluid_network.1} parent=1 // pred_check
      _
    $region11: #{fully_fluid_network.1} parent=1 // pred_check_branch
      %28 = sbr.rel (0) target = $region13
    $region12: #{fully_fluid_network.1} parent=1 // pred_region
      _
    $region13: #{fully_fluid_network.1} parent=1 // pred_fallthru
      _
    // Predicated region
    $region14: #{fully_fluid_network.1} parent=1 // pred_check
      _
    $region15: #{fully_fluid_network.1} parent=1 // pred_check_branch
      %30 = sbr.rel (0) target = $region17
    $region16: #{fully_fluid_network.1} parent=1 // pred_region
      _
    $region17: #{fully_fluid_network.1} parent=1 // pred_fallthru
      _
    // Predicated region
    $region18: #{fully_fluid_network.1} parent=1 // pred_check
      _
    $region19: #{fully_fluid_network.1} parent=1 // pred_check_branch
      %32 = sbr.rel (0) target = $region21
    $region20: #{fully_fluid_network.1} parent=1 // pred_region
      _
    $region21: #{fully_fluid_network.1} parent=1 // pred_fallthru
      _
    // Predicated region
    $region22: #{fully_fluid_network.1} parent=1 // pred_check
      _
    $region23: #{fully_fluid_network.1} parent=1 // pred_check_branch
      %34 = sbr.rel (0) target = $region25
    $region24: #{fully_fluid_network.1} parent=1 // pred_region
      _
    $region25: #{fully_fluid_network.1} parent=1 // pred_fallthru
      _
    // Predicated region
    $region26: #{fully_fluid_network.1} parent=1 // pred_check
      _
    $region27: #{fully_fluid_network.1} parent=1 // pred_check_branch
      %36 = sbr.rel (0) target = $region29
    $region28: #{fully_fluid_network.1} parent=1 // pred_region
      _
    $region29: #{fully_fluid_network.1} parent=1 // pred_fallthru
      _
    // Predicated region
    $region30: #{fully_fluid_network.1} parent=1 // pred_check
      _
    $region31: #{fully_fluid_network.1} parent=1 // pred_check_branch
      %38 = sbr.rel (0) target = $region33
    $region32: #{fully_fluid_network.1} parent=1 // pred_region
      _
    $region33: #{fully_fluid_network.1} parent=1 // pred_fallthru
      _
    // Predicated region
    $region34: #{fully_fluid_network.1} parent=1 // pred_check
      _
    $region35: #{fully_fluid_network.1} parent=1 // pred_check_branch
      %40 = sbr.rel (0) target = $region37
    $region36: #{fully_fluid_network.1} parent=1 // pred_region
      _
    $region37: #{fully_fluid_network.1} parent=1 // pred_fallthru
      _
    // Predicated region
    $region38: #{fully_fluid_network.1} parent=1 // pred_check
      _
    $region39: #{fully_fluid_network.1} parent=1 // pred_check_branch
      %42 = sbr.rel (0) target = $region41
    $region40: #{fully_fluid_network.1} parent=1 // pred_region
      _
    $region41: #{fully_fluid_network.1} parent=1 // pred_fallthru
      _
    // Predicated region
    $region42: #{fully_fluid_network.1} parent=1 // pred_check
      _
    $region43: #{fully_fluid_network.1} parent=1 // pred_check_branch
      %44 = sbr.rel (0) target = $region45
    $region44: #{fully_fluid_network.1} parent=1 // pred_region
      _
    $region45: #{fully_fluid_network.1} parent=1 // pred_fallthru
      _
    %v45 = vld [vmem:[%s0] sm:$0x3]
    %v46 = vld [vmem:[%s1] sm:$0xff]
    %v47 = vld [vmem:[%s1 + $0x8] sm:$0xff]
    %v48 = vld [vmem:[%s1 + $0x10] sm:$0xff]
    %v49 = vld [vmem:[%s1 + $0x18] sm:$0xff]
    %v50 = vld [vmem:[%s1 + $0x20] sm:$0xff]
    %v51 = vld [vmem:[%s1 + $0x28] sm:$0xff]
    %v52 = vld [vmem:[%s1 + $0x30] sm:$0xff]
    %v53 = vld [vmem:[%s1 + $0x38] sm:$0xff]
    %vm54 = vcmask 523264
    %v56 = vsel %vm54, %v45, 0
    %58 = vmatpush.msra.mxu0 0.0
    %59 = vmatpush.msra.mxu0 0.0
    %60 = vmatpush.msra.mxu0 0.0
    %61 = vmatpush.msra.mxu0 0.0
    %62 = vmatpush.msra.mxu0 0.0
    %63 = vmatpush.msra.mxu0 0.0
    %64 = vmatpush.msra.mxu0 0.0
    %65 = vmatpush.msra.mxu0 0.0
    %66 = vmatpush.msra.mxu0 %v53
    %67 = vmatpush.msra.mxu0 %v52
    %68 = vmatpush.msra.mxu0 %v51
    %69 = vmatpush.msra.mxu0 %v50
    %70 = vmatpush.msra.mxu0 %v49
    %71 = vmatpush.msra.mxu0 %v48
    %72 = vmatpush.msra.mxu0 %v47
    %73 = vmatpush.msra.mxu0 %v46
    %74 = vmatmul.f32.gmra.mxu0 %v56
    %v75 = vpop.f32.mrf.mxu0
    %v76 = vadd.f32 0.0, %v75
    %77 = vdwg.mxu0
    %vm78 = vcmask 254976
    %79 = vst.msk [vmem:[#allocation4] sm:$0x3] %vm78, %v76
    %v80 = vld [vmem:[%s8] sm:$0x3]
    %81 = vst.msk [vmem:[#allocation9] sm:$0x3] %vm78, %v80
    %v82 = vld [vmem:[%s4] sm:$0xff]
    %v83 = vld [vmem:[%s4 + $0x8] sm:$0xff]
    %v84 = vld [vmem:[%s4 + $0x10] sm:$0xff]
    %v85 = vld [vmem:[%s4 + $0x18] sm:$0xff]
    %v86 = vld [vmem:[%s5] sm:$0xff]
    %v87 = vld [vmem:[%s5 + $0x8] sm:$0xff]
    %v88 = vld [vmem:[%s5 + $0x10] sm:$0xff]
    %v89 = vld [vmem:[%s5 + $0x18] sm:$0xff]
    loop: start=0, step=1, limit=2
    $region46: #{fully_fluid_network.1} parent=1 // loop_pre_header
      _
    $region47: #{fully_fluid_network.1} parent=1 // loop_header
      %s91 = sphi 0, %s95
      %p92 = scmp.ge.s32.totalorder %s91, 2
    $region48: #{fully_fluid_network.1} parent=1 // loop_header_branch
      %94 = sbr.rel (%p92) target = $region52
    $region49: #{fully_fluid_network.1} parent=1 // loop_body
      %s96 = scalar_lea.vmem [#allocation4], %s91
      %v97 = vld [vmem:[%s96] sm:$0x1]
      %v98 = vld [vmem:[#allocation9] sm:$0x1]
      %v99 = vld [vmem:[#allocation9 + $0x1] sm:$0x1]
      %vm100 = vcmask 261120
      %v102 = vsel %vm100, %v97, 0
      %104 = vmatpush.msra.mxu0 0.0
      %105 = vmatpush.msra.mxu0 0.0
      %106 = vmatpush.msra.mxu0 0.0
      %107 = vmatpush.msra.mxu0 0.0
      %108 = vmatpush.msra.mxu0 0.0
      %109 = vmatpush.msra.mxu0 0.0
      %110 = vmatpush.msra.mxu0 0.0
      %111 = vmatpush.msra.mxu0 0.0
      %112 = vmatpush.msra.mxu0 0.0
      %113 = vmatpush.msra.mxu0 0.0
      %114 = vmatpush.msra.mxu0 0.0
      %115 = vmatpush.msra.mxu0 0.0
      %116 = vmatpush.msra.mxu0 %v85
      %117 = vmatpush.msra.mxu0 %v84
      %118 = vmatpush.msra.mxu0 %v83
      %119 = vmatpush.msra.mxu0 %v82
      %120 = vmatmul.f32.gmra.mxu0 %v102
      %v121 = vpop.f32.mrf.mxu0
      %v122 = vadd.f32 0.0, %v121
      %123 = vdwg.mxu0
      %124 = vmatpush.msra.mxu0 0.0
      %125 = vmatpush.msra.mxu0 0.0
      %126 = vmatpush.msra.mxu0 0.0
      %127 = vmatpush.msra.mxu0 0.0
      %128 = vmatpush.msra.mxu0 0.0
      %129 = vmatpush.msra.mxu0 0.0
      %130 = vmatpush.msra.mxu0 0.0
      %131 = vmatpush.msra.mxu0 0.0
      %132 = vmatpush.msra.mxu0 0.0
      %133 = vmatpush.msra.mxu0 0.0
      %134 = vmatpush.msra.mxu0 0.0
      %135 = vmatpush.msra.mxu0 0.0
      %136 = vmatpush.msra.mxu0 %v89
      %137 = vmatpush.msra.mxu0 %v88
      %138 = vmatpush.msra.mxu0 %v87
      %139 = vmatpush.msra.mxu0 %v86
      %140 = vmatmul.f32.gmra.mxu0 %v102
      %v141 = vpop.f32.mrf.mxu0
      %v142 = vadd.f32 0.0, %v141
      %143 = vdwg.mxu0
      %v144 = vsub.f32 %v122, %v97
      %v145 = vsub.f32 %v142, %v97
      %v146 = vadd.f32 %v144, %v145
      %v147 = vmul.f32 %v145, 0.01
      %v148 = vsub.f32 %v98, %v147
      %v149 = vmax.f32 %v148, -1.0
      %v150 = vmin.f32 %v149, 1.0
      %v151 = vmul.f32 %v144, 0.01
      %v152 = vsub.f32 %v99, %v151
      %v153 = vmax.f32 %v152, -1.0
      %v154 = vmin.f32 %v153, 1.0
      %v155 = vmul.f32 %v146, 0.01
      %v156 = vadd.f32 %v97, %v155
      %v157 = vmul.f32 %v97, 0.001
      %v158 = vsub.f32 %v156, %v157
      %v159 = vmul.f32 %v150, %v145
      %v160 = vsub.f32 %v158, %v159
      %v161 = vmul.f32 %v154, %v144
      %v162 = vsub.f32 %v160, %v161
      %v163 = vmax.f32 %v162, -10.0
      %v164 = vmin.f32 %v163, 10.0
      %v166 = vsel %vm100, %v164, 0
      %168 = vmatpush.msra.mxu0 0.0
      %169 = vmatpush.msra.mxu0 0.0
      %170 = vmatpush.msra.mxu0 0.0
      %171 = vmatpush.msra.mxu0 0.0
      %172 = vmatpush.msra.mxu0 0.0
      %173 = vmatpush.msra.mxu0 0.0
      %174 = vmatpush.msra.mxu0 0.0
      %175 = vmatpush.msra.mxu0 0.0
      %176 = vmatpush.msra.mxu0 0.0
      %177 = vmatpush.msra.mxu0 0.0
      %178 = vmatpush.msra.mxu0 0.0
      %179 = vmatpush.msra.mxu0 0.0
      %180 = vmatpush.msra.mxu0 %v85
      %181 = vmatpush.msra.mxu0 %v84
      %182 = vmatpush.msra.mxu0 %v83
      %183 = vmatpush.msra.mxu0 %v82
      %184 = vmatmul.f32.gmra.mxu0 %v166
      %v185 = vpop.f32.mrf.mxu0
      %v186 = vadd.f32 0.0, %v185
      %187 = vdwg.mxu0
      %188 = vmatpush.msra.mxu0 0.0
      %189 = vmatpush.msra.mxu0 0.0
      %190 = vmatpush.msra.mxu0 0.0
      %191 = vmatpush.msra.mxu0 0.0
      %192 = vmatpush.msra.mxu0 0.0
      %193 = vmatpush.msra.mxu0 0.0
      %194 = vmatpush.msra.mxu0 0.0
      %195 = vmatpush.msra.mxu0 0.0
      %196 = vmatpush.msra.mxu0 0.0
      %197 = vmatpush.msra.mxu0 0.0
      %198 = vmatpush.msra.mxu0 0.0
      %199 = vmatpush.msra.mxu0 0.0
      %200 = vmatpush.msra.mxu0 %v89
      %201 = vmatpush.msra.mxu0 %v88
      %202 = vmatpush.msra.mxu0 %v87
      %203 = vmatpush.msra.mxu0 %v86
      %204 = vmatmul.f32.gmra.mxu0 %v166
      %v205 = vpop.f32.mrf.mxu0
      %v206 = vadd.f32 0.0, %v205
      %207 = vdwg.mxu0
      %v208 = vsub.f32 %v186, %v164
      %v209 = vsub.f32 %v206, %v164
      %v210 = vadd.f32 %v208, %v209
      %v211 = vmul.f32 %v209, 0.01
      %v212 = vsub.f32 %v150, %v211
      %v213 = vmax.f32 %v212, -1.0
      %v214 = vmin.f32 %v213, 1.0
      %v215 = vmul.f32 %v208, 0.01
      %v216 = vsub.f32 %v154, %v215
      %v217 = vmax.f32 %v216, -1.0
      %v218 = vmin.f32 %v217, 1.0
      %v219 = vmul.f32 %v210, 0.01
      %v220 = vadd.f32 %v164, %v219
      %v221 = vmul.f32 %v164, 0.001
      %v222 = vsub.f32 %v220, %v221
      %v223 = vmul.f32 %v214, %v209
      %v224 = vsub.f32 %v222, %v223
      %v225 = vmul.f32 %v218, %v208
      %v226 = vsub.f32 %v224, %v225
      %v227 = vmax.f32 %v226, -10.0
      %v228 = vmin.f32 %v227, 10.0
      %v230 = vsel %vm100, %v228, 0
      %232 = vmatpush.msra.mxu0 0.0
      %233 = vmatpush.msra.mxu0 0.0
      %234 = vmatpush.msra.mxu0 0.0
      %235 = vmatpush.msra.mxu0 0.0
      %236 = vmatpush.msra.mxu0 0.0
      %237 = vmatpush.msra.mxu0 0.0
      %238 = vmatpush.msra.mxu0 0.0
      %239 = vmatpush.msra.mxu0 0.0
      %240 = vmatpush.msra.mxu0 0.0
      %241 = vmatpush.msra.mxu0 0.0
      %242 = vmatpush.msra.mxu0 0.0
      %243 = vmatpush.msra.mxu0 0.0
      %244 = vmatpush.msra.mxu0 %v85
      %245 = vmatpush.msra.mxu0 %v84
      %246 = vmatpush.msra.mxu0 %v83
      %247 = vmatpush.msra.mxu0 %v82
      %248 = vmatmul.f32.gmra.mxu0 %v230
      %v249 = vpop.f32.mrf.mxu0
      %v250 = vadd.f32 0.0, %v249
      %251 = vdwg.mxu0
      %252 = vmatpush.msra.mxu0 0.0
      %253 = vmatpush.msra.mxu0 0.0
      %254 = vmatpush.msra.mxu0 0.0
      %255 = vmatpush.msra.mxu0 0.0
      %256 = vmatpush.msra.mxu0 0.0
      %257 = vmatpush.msra.mxu0 0.0
      %258 = vmatpush.msra.mxu0 0.0
      %259 = vmatpush.msra.mxu0 0.0
      %260 = vmatpush.msra.mxu0 0.0
      %261 = vmatpush.msra.mxu0 0.0
      %262 = vmatpush.msra.mxu0 0.0
      %263 = vmatpush.msra.mxu0 0.0
      %264 = vmatpush.msra.mxu0 %v89
      %265 = vmatpush.msra.mxu0 %v88
      %266 = vmatpush.msra.mxu0 %v87
      %267 = vmatpush.msra.mxu0 %v86
      %268 = vmatmul.f32.gmra.mxu0 %v230
      %v269 = vpop.f32.mrf.mxu0
      %v270 = vadd.f32 0.0, %v269
      %271 = vdwg.mxu0
      %v272 = vsub.f32 %v250, %v228
      %v273 = vsub.f32 %v270, %v228
      %v274 = vadd.f32 %v272, %v273
      %v275 = vmul.f32 %v273, 0.01
      %v276 = vsub.f32 %v214, %v275
      %v277 = vmax.f32 %v276, -1.0
      %v278 = vmin.f32 %v277, 1.0
      %v279 = vmul.f32 %v272, 0.01
      %v280 = vsub.f32 %v218, %v279
      %v281 = vmax.f32 %v280, -1.0
      %v282 = vmin.f32 %v281, 1.0
      %v283 = vmul.f32 %v274, 0.01
      %v284 = vadd.f32 %v228, %v283
      %v285 = vmul.f32 %v228, 0.001
      %v286 = vsub.f32 %v284, %v285
      %v287 = vmul.f32 %v278, %v273
      %v288 = vsub.f32 %v286, %v287
      %v289 = vmul.f32 %v282, %v272
      %v290 = vsub.f32 %v288, %v289
      %v291 = vmax.f32 %v290, -10.0
      %v292 = vmin.f32 %v291, 10.0
      %v294 = vsel %vm100, %v292, 0
      %296 = vmatpush.msra.mxu0 0.0
      %297 = vmatpush.msra.mxu0 0.0
      %298 = vmatpush.msra.mxu0 0.0
      %299 = vmatpush.msra.mxu0 0.0
      %300 = vmatpush.msra.mxu0 0.0
      %301 = vmatpush.msra.mxu0 0.0
      %302 = vmatpush.msra.mxu0 0.0
      %303 = vmatpush.msra.mxu0 0.0
      %304 = vmatpush.msra.mxu0 0.0
      %305 = vmatpush.msra.mxu0 0.0
      %306 = vmatpush.msra.mxu0 0.0
      %307 = vmatpush.msra.mxu0 0.0
      %308 = vmatpush.msra.mxu0 %v85
      %309 = vmatpush.msra.mxu0 %v84
      %310 = vmatpush.msra.mxu0 %v83
      %311 = vmatpush.msra.mxu0 %v82
      %312 = vmatmul.f32.gmra.mxu0 %v294
      %v313 = vpop.f32.mrf.mxu0
      %v314 = vadd.f32 0.0, %v313
      %315 = vdwg.mxu0
      %316 = vmatpush.msra.mxu0 0.0
      %317 = vmatpush.msra.mxu0 0.0
      %318 = vmatpush.msra.mxu0 0.0
      %319 = vmatpush.msra.mxu0 0.0
      %320 = vmatpush.msra.mxu0 0.0
      %321 = vmatpush.msra.mxu0 0.0
      %322 = vmatpush.msra.mxu0 0.0
      %323 = vmatpush.msra.mxu0 0.0
      %324 = vmatpush.msra.mxu0 0.0
      %325 = vmatpush.msra.mxu0 0.0
      %326 = vmatpush.msra.mxu0 0.0
      %327 = vmatpush.msra.mxu0 0.0
      %328 = vmatpush.msra.mxu0 %v89
      %329 = vmatpush.msra.mxu0 %v88
      %330 = vmatpush.msra.mxu0 %v87
      %331 = vmatpush.msra.mxu0 %v86
      %332 = vmatmul.f32.gmra.mxu0 %v294
      %v333 = vpop.f32.mrf.mxu0
      %v334 = vadd.f32 0.0, %v333
      %335 = vdwg.mxu0
      %v336 = vsub.f32 %v314, %v292
      %v337 = vsub.f32 %v334, %v292
      %v338 = vadd.f32 %v336, %v337
      %v339 = vmul.f32 %v337, 0.01
      %v340 = vsub.f32 %v278, %v339
      %v341 = vmax.f32 %v340, -1.0
      %v342 = vmin.f32 %v341, 1.0
      %v343 = vmul.f32 %v336, 0.01
      %v344 = vsub.f32 %v282, %v343
      %v345 = vmax.f32 %v344, -1.0
      %v346 = vmin.f32 %v345, 1.0
      %v347 = vmul.f32 %v338, 0.01
      %v348 = vadd.f32 %v292, %v347
      %v349 = vmul.f32 %v292, 0.001
      %v350 = vsub.f32 %v348, %v349
      %v351 = vmul.f32 %v342, %v337
      %v352 = vsub.f32 %v350, %v351
      %v353 = vmul.f32 %v346, %v336
      %v354 = vsub.f32 %v352, %v353
      %v355 = vmax.f32 %v354, -10.0
      %v356 = vmin.f32 %v355, 10.0
      %v358 = vsel %vm100, %v356, 0
      %360 = vmatpush.msra.mxu0 0.0
      %361 = vmatpush.msra.mxu0 0.0
      %362 = vmatpush.msra.mxu0 0.0
      %363 = vmatpush.msra.mxu0 0.0
      %364 = vmatpush.msra.mxu0 0.0
      %365 = vmatpush.msra.mxu0 0.0
      %366 = vmatpush.msra.mxu0 0.0
      %367 = vmatpush.msra.mxu0 0.0
      %368 = vmatpush.msra.mxu0 0.0
      %369 = vmatpush.msra.mxu0 0.0
      %370 = vmatpush.msra.mxu0 0.0
      %371 = vmatpush.msra.mxu0 0.0
      %372 = vmatpush.msra.mxu0 %v85
      %373 = vmatpush.msra.mxu0 %v84
      %374 = vmatpush.msra.mxu0 %v83
      %375 = vmatpush.msra.mxu0 %v82
      %376 = vmatmul.f32.gmra.mxu0 %v358
      %v377 = vpop.f32.mrf.mxu0
      %v378 = vadd.f32 0.0, %v377
      %379 = vdwg.mxu0
      %380 = vmatpush.msra.mxu0 0.0
      %381 = vmatpush.msra.mxu0 0.0
      %382 = vmatpush.msra.mxu0 0.0
      %383 = vmatpush.msra.mxu0 0.0
      %384 = vmatpush.msra.mxu0 0.0
      %385 = vmatpush.msra.mxu0 0.0
      %386 = vmatpush.msra.mxu0 0.0
      %387 = vmatpush.msra.mxu0 0.0
      %388 = vmatpush.msra.mxu0 0.0
      %389 = vmatpush.msra.mxu0 0.0
      %390 = vmatpush.msra.mxu0 0.0
      %391 = vmatpush.msra.mxu0 0.0
      %392 = vmatpush.msra.mxu0 %v89
      %393 = vmatpush.msra.mxu0 %v88
      %394 = vmatpush.msra.mxu0 %v87
      %395 = vmatpush.msra.mxu0 %v86
      %396 = vmatmul.f32.gmra.mxu0 %v358
      %v397 = vpop.f32.mrf.mxu0
      %v398 = vadd.f32 0.0, %v397
      %399 = vdwg.mxu0
      %v400 = vsub.f32 %v378, %v356
      %v401 = vsub.f32 %v398, %v356
      %v402 = vadd.f32 %v400, %v401
      %v403 = vmul.f32 %v401, 0.01
      %v404 = vsub.f32 %v342, %v403
      %v405 = vmax.f32 %v404, -1.0
      %v406 = vmin.f32 %v405, 1.0
      %v407 = vmul.f32 %v400, 0.01
      %v408 = vsub.f32 %v346, %v407
      %v409 = vmax.f32 %v408, -1.0
      %v410 = vmin.f32 %v409, 1.0
      %v411 = vmul.f32 %v402, 0.01
      %v412 = vadd.f32 %v356, %v411
      %v413 = vmul.f32 %v356, 0.001
      %v414 = vsub.f32 %v412, %v413
      %v415 = vmul.f32 %v406, %v401
      %v416 = vsub.f32 %v414, %v415
      %v417 = vmul.f32 %v410, %v400
      %v418 = vsub.f32 %v416, %v417
      %v419 = vmax.f32 %v418, -10.0
      %v420 = vmin.f32 %v419, 10.0
      %v422 = vsel %vm100, %v420, 0
      %424 = vmatpush.msra.mxu0 0.0
      %425 = vmatpush.msra.mxu0 0.0
      %426 = vmatpush.msra.mxu0 0.0
      %427 = vmatpush.msra.mxu0 0.0
      %428 = vmatpush.msra.mxu0 0.0
      %429 = vmatpush.msra.mxu0 0.0
      %430 = vmatpush.msra.mxu0 0.0
      %431 = vmatpush.msra.mxu0 0.0
      %432 = vmatpush.msra.mxu0 0.0
      %433 = vmatpush.msra.mxu0 0.0
      %434 = vmatpush.msra.mxu0 0.0
      %435 = vmatpush.msra.mxu0 0.0
      %436 = vmatpush.msra.mxu0 %v85
      %437 = vmatpush.msra.mxu0 %v84
      %438 = vmatpush.msra.mxu0 %v83
      %439 = vmatpush.msra.mxu0 %v82
      %440 = vmatmul.f32.gmra.mxu0 %v422
      %v441 = vpop.f32.mrf.mxu0
      %v442 = vadd.f32 0.0, %v441
      %443 = vdwg.mxu0
      %444 = vmatpush.msra.mxu0 0.0
      %445 = vmatpush.msra.mxu0 0.0
      %446 = vmatpush.msra.mxu0 0.0
      %447 = vmatpush.msra.mxu0 0.0
      %448 = vmatpush.msra.mxu0 0.0
      %449 = vmatpush.msra.mxu0 0.0
      %450 = vmatpush.msra.mxu0 0.0
      %451 = vmatpush.msra.mxu0 0.0
      %452 = vmatpush.msra.mxu0 0.0
      %453 = vmatpush.msra.mxu0 0.0
      %454 = vmatpush.msra.mxu0 0.0
      %455 = vmatpush.msra.mxu0 0.0
      %456 = vmatpush.msra.mxu0 %v89
      %457 = vmatpush.msra.mxu0 %v88
      %458 = vmatpush.msra.mxu0 %v87
      %459 = vmatpush.msra.mxu0 %v86
      %460 = vmatmul.f32.gmra.mxu0 %v422
      %v461 = vpop.f32.mrf.mxu0
      %v462 = vadd.f32 0.0, %v461
      %463 = vdwg.mxu0
      %v464 = vsub.f32 %v442, %v420
      %v465 = vsub.f32 %v462, %v420
      %v466 = vadd.f32 %v464, %v465
      %v467 = vmul.f32 %v465, 0.01
      %v468 = vsub.f32 %v406, %v467
      %v469 = vmax.f32 %v468, -1.0
      %v470 = vmin.f32 %v469, 1.0
      %v471 = vmul.f32 %v464, 0.01
      %v472 = vsub.f32 %v410, %v471
      %v473 = vmax.f32 %v472, -1.0
      %v474 = vmin.f32 %v473, 1.0
      %v475 = vmul.f32 %v466, 0.01
      %v476 = vadd.f32 %v420, %v475
      %v477 = vmul.f32 %v420, 0.001
      %v478 = vsub.f32 %v476, %v477
      %v479 = vmul.f32 %v470, %v465
      %v480 = vsub.f32 %v478, %v479
      %v481 = vmul.f32 %v474, %v464
      %v482 = vsub.f32 %v480, %v481
      %v483 = vmax.f32 %v482, -10.0
      %v484 = vmin.f32 %v483, 10.0
      %v486 = vsel %vm100, %v484, 0
      %488 = vmatpush.msra.mxu0 0.0
      %489 = vmatpush.msra.mxu0 0.0
      %490 = vmatpush.msra.mxu0 0.0
      %491 = vmatpush.msra.mxu0 0.0
      %492 = vmatpush.msra.mxu0 0.0
      %493 = vmatpush.msra.mxu0 0.0
      %494 = vmatpush.msra.mxu0 0.0
      %495 = vmatpush.msra.mxu0 0.0
      %496 = vmatpush.msra.mxu0 0.0
      %497 = vmatpush.msra.mxu0 0.0
      %498 = vmatpush.msra.mxu0 0.0
      %499 = vmatpush.msra.mxu0 0.0
      %500 = vmatpush.msra.mxu0 %v85
      %501 = vmatpush.msra.mxu0 %v84
      %502 = vmatpush.msra.mxu0 %v83
      %503 = vmatpush.msra.mxu0 %v82
      %504 = vmatmul.f32.gmra.mxu0 %v486
      %v505 = vpop.f32.mrf.mxu0
      %v506 = vadd.f32 0.0, %v505
      %507 = vdwg.mxu0
      %508 = vmatpush.msra.mxu0 0.0
      %509 = vmatpush.msra.mxu0 0.0
      %510 = vmatpush.msra.mxu0 0.0
      %511 = vmatpush.msra.mxu0 0.0
      %512 = vmatpush.msra.mxu0 0.0
      %513 = vmatpush.msra.mxu0 0.0
      %514 = vmatpush.msra.mxu0 0.0
      %515 = vmatpush.msra.mxu0 0.0
      %516 = vmatpush.msra.mxu0 0.0
      %517 = vmatpush.msra.mxu0 0.0
      %518 = vmatpush.msra.mxu0 0.0
      %519 = vmatpush.msra.mxu0 0.0
      %520 = vmatpush.msra.mxu0 %v89
      %521 = vmatpush.msra.mxu0 %v88
      %522 = vmatpush.msra.mxu0 %v87
      %523 = vmatpush.msra.mxu0 %v86
      %524 = vmatmul.f32.gmra.mxu0 %v486
      %v525 = vpop.f32.mrf.mxu0
      %v526 = vadd.f32 0.0, %v525
      %527 = vdwg.mxu0
      %v528 = vsub.f32 %v506, %v484
      %v529 = vsub.f32 %v526, %v484
      %v530 = vadd.f32 %v528, %v529
      %v531 = vmul.f32 %v529, 0.01
      %v532 = vsub.f32 %v470, %v531
      %v533 = vmax.f32 %v532, -1.0
      %v534 = vmin.f32 %v533, 1.0
      %v535 = vmul.f32 %v528, 0.01
      %v536 = vsub.f32 %v474, %v535
      %v537 = vmax.f32 %v536, -1.0
      %v538 = vmin.f32 %v537, 1.0
      %v539 = vmul.f32 %v530, 0.01
      %v540 = vadd.f32 %v484, %v539
      %v541 = vmul.f32 %v484, 0.001
      %v542 = vsub.f32 %v540, %v541
      %v543 = vmul.f32 %v534, %v529
      %v544 = vsub.f32 %v542, %v543
      %v545 = vmul.f32 %v538, %v528
      %v546 = vsub.f32 %v544, %v545
      %v547 = vmax.f32 %v546, -10.0
      %v548 = vmin.f32 %v547, 10.0
      %v550 = vsel %vm100, %v548, 0
      %552 = vmatpush.msra.mxu0 0.0
      %553 = vmatpush.msra.mxu0 0.0
      %554 = vmatpush.msra.mxu0 0.0
      %555 = vmatpush.msra.mxu0 0.0
      %556 = vmatpush.msra.mxu0 0.0
      %557 = vmatpush.msra.mxu0 0.0
      %558 = vmatpush.msra.mxu0 0.0
      %559 = vmatpush.msra.mxu0 0.0
      %560 = vmatpush.msra.mxu0 0.0
      %561 = vmatpush.msra.mxu0 0.0
      %562 = vmatpush.msra.mxu0 0.0
      %563 = vmatpush.msra.mxu0 0.0
      %564 = vmatpush.msra.mxu0 %v85
      %565 = vmatpush.msra.mxu0 %v84
      %566 = vmatpush.msra.mxu0 %v83
      %567 = vmatpush.msra.mxu0 %v82
      %568 = vmatmul.f32.gmra.mxu0 %v550
      %v569 = vpop.f32.mrf.mxu0
      %v570 = vadd.f32 0.0, %v569
      %571 = vdwg.mxu0
      %572 = vmatpush.msra.mxu0 0.0
      %573 = vmatpush.msra.mxu0 0.0
      %574 = vmatpush.msra.mxu0 0.0
      %575 = vmatpush.msra.mxu0 0.0
      %576 = vmatpush.msra.mxu0 0.0
      %577 = vmatpush.msra.mxu0 0.0
      %578 = vmatpush.msra.mxu0 0.0
      %579 = vmatpush.msra.mxu0 0.0
      %580 = vmatpush.msra.mxu0 0.0
      %581 = vmatpush.msra.mxu0 0.0
      %582 = vmatpush.msra.mxu0 0.0
      %583 = vmatpush.msra.mxu0 0.0
      %584 = vmatpush.msra.mxu0 %v89
      %585 = vmatpush.msra.mxu0 %v88
      %586 = vmatpush.msra.mxu0 %v87
      %587 = vmatpush.msra.mxu0 %v86
      %588 = vmatmul.f32.gmra.mxu0 %v550
      %v589 = vpop.f32.mrf.mxu0
      %v590 = vadd.f32 0.0, %v589
      %591 = vdwg.mxu0
      %v592 = vsub.f32 %v570, %v548
      %v593 = vsub.f32 %v590, %v548
      %v594 = vadd.f32 %v592, %v593
      %v595 = vmul.f32 %v593, 0.01
      %v596 = vsub.f32 %v534, %v595
      %v597 = vmax.f32 %v596, -1.0
      %v598 = vmin.f32 %v597, 1.0
      %v599 = vmul.f32 %v592, 0.01
      %v600 = vsub.f32 %v538, %v599
      %v601 = vmax.f32 %v600, -1.0
      %v602 = vmin.f32 %v601, 1.0
      %v603 = vmul.f32 %v594, 0.01
      %v604 = vadd.f32 %v548, %v603
      %v605 = vmul.f32 %v548, 0.001
      %v606 = vsub.f32 %v604, %v605
      %v607 = vmul.f32 %v598, %v593
      %v608 = vsub.f32 %v606, %v607
      %v609 = vmul.f32 %v602, %v592
      %v610 = vsub.f32 %v608, %v609
      %v611 = vmax.f32 %v610, -10.0
      %v612 = vmin.f32 %v611, 10.0
      %v614 = vsel %vm100, %v612, 0
      %616 = vmatpush.msra.mxu0 0.0
      %617 = vmatpush.msra.mxu0 0.0
      %618 = vmatpush.msra.mxu0 0.0
      %619 = vmatpush.msra.mxu0 0.0
      %620 = vmatpush.msra.mxu0 0.0
      %621 = vmatpush.msra.mxu0 0.0
      %622 = vmatpush.msra.mxu0 0.0
      %623 = vmatpush.msra.mxu0 0.0
      %624 = vmatpush.msra.mxu0 0.0
      %625 = vmatpush.msra.mxu0 0.0
      %626 = vmatpush.msra.mxu0 0.0
      %627 = vmatpush.msra.mxu0 0.0
      %628 = vmatpush.msra.mxu0 %v85
      %629 = vmatpush.msra.mxu0 %v84
      %630 = vmatpush.msra.mxu0 %v83
      %631 = vmatpush.msra.mxu0 %v82
      %632 = vmatmul.f32.gmra.mxu0 %v614
      %v633 = vpop.f32.mrf.mxu0
      %v634 = vadd.f32 0.0, %v633
      %635 = vdwg.mxu0
      %636 = vmatpush.msra.mxu0 0.0
      %637 = vmatpush.msra.mxu0 0.0
      %638 = vmatpush.msra.mxu0 0.0
      %639 = vmatpush.msra.mxu0 0.0
      %640 = vmatpush.msra.mxu0 0.0
      %641 = vmatpush.msra.mxu0 0.0
      %642 = vmatpush.msra.mxu0 0.0
      %643 = vmatpush.msra.mxu0 0.0
      %644 = vmatpush.msra.mxu0 0.0
      %645 = vmatpush.msra.mxu0 0.0
      %646 = vmatpush.msra.mxu0 0.0
      %647 = vmatpush.msra.mxu0 0.0
      %648 = vmatpush.msra.mxu0 %v89
      %649 = vmatpush.msra.mxu0 %v88
      %650 = vmatpush.msra.mxu0 %v87
      %651 = vmatpush.msra.mxu0 %v86
      %652 = vmatmul.f32.gmra.mxu0 %v614
      %v653 = vpop.f32.mrf.mxu0
      %v654 = vadd.f32 0.0, %v653
      %655 = vdwg.mxu0
      %v656 = vsub.f32 %v634, %v612
      %v657 = vsub.f32 %v654, %v612
      %v658 = vadd.f32 %v656, %v657
      %v659 = vmul.f32 %v657, 0.01
      %v660 = vsub.f32 %v598, %v659
      %v661 = vmax.f32 %v660, -1.0
      %v662 = vmin.f32 %v661, 1.0
      %v663 = vmul.f32 %v656, 0.01
      %v664 = vsub.f32 %v602, %v663
      %v665 = vmax.f32 %v664, -1.0
      %v666 = vmin.f32 %v665, 1.0
      %v667 = vmul.f32 %v658, 0.01
      %v668 = vadd.f32 %v612, %v667
      %v669 = vmul.f32 %v612, 0.001
      %v670 = vsub.f32 %v668, %v669
      %v671 = vmul.f32 %v662, %v657
      %v672 = vsub.f32 %v670, %v671
      %v673 = vmul.f32 %v666, %v656
      %v674 = vsub.f32 %v672, %v673
      %v675 = vmax.f32 %v674, -10.0
      %v676 = vmin.f32 %v675, 10.0
      %v678 = vsel %vm100, %v676, 0
      %680 = vmatpush.msra.mxu0 0.0
      %681 = vmatpush.msra.mxu0 0.0
      %682 = vmatpush.msra.mxu0 0.0
      %683 = vmatpush.msra.mxu0 0.0
      %684 = vmatpush.msra.mxu0 0.0
      %685 = vmatpush.msra.mxu0 0.0
      %686 = vmatpush.msra.mxu0 0.0
      %687 = vmatpush.msra.mxu0 0.0
      %688 = vmatpush.msra.mxu0 0.0
      %689 = vmatpush.msra.mxu0 0.0
      %690 = vmatpush.msra.mxu0 0.0
      %691 = vmatpush.msra.mxu0 0.0
      %692 = vmatpush.msra.mxu0 %v85
      %693 = vmatpush.msra.mxu0 %v84
      %694 = vmatpush.msra.mxu0 %v83
      %695 = vmatpush.msra.mxu0 %v82
      %696 = vmatmul.f32.gmra.mxu0 %v678
      %v697 = vpop.f32.mrf.mxu0
      %v698 = vadd.f32 0.0, %v697
      %699 = vdwg.mxu0
      %700 = vmatpush.msra.mxu0 0.0
      %701 = vmatpush.msra.mxu0 0.0
      %702 = vmatpush.msra.mxu0 0.0
      %703 = vmatpush.msra.mxu0 0.0
      %704 = vmatpush.msra.mxu0 0.0
      %705 = vmatpush.msra.mxu0 0.0
      %706 = vmatpush.msra.mxu0 0.0
      %707 = vmatpush.msra.mxu0 0.0
      %708 = vmatpush.msra.mxu0 0.0
      %709 = vmatpush.msra.mxu0 0.0
      %710 = vmatpush.msra.mxu0 0.0
      %711 = vmatpush.msra.mxu0 0.0
      %712 = vmatpush.msra.mxu0 %v89
      %713 = vmatpush.msra.mxu0 %v88
      %714 = vmatpush.msra.mxu0 %v87
      %715 = vmatpush.msra.mxu0 %v86
      %716 = vmatmul.f32.gmra.mxu0 %v678
      %v717 = vpop.f32.mrf.mxu0
      %v718 = vadd.f32 0.0, %v717
      %719 = vdwg.mxu0
      %v720 = vsub.f32 %v698, %v676
      %v721 = vsub.f32 %v718, %v676
      %v722 = vadd.f32 %v720, %v721
      %v723 = vmul.f32 %v721, 0.01
      %v724 = vsub.f32 %v662, %v723
      %v725 = vmax.f32 %v724, -1.0
      %v726 = vmin.f32 %v725, 1.0
      %v727 = vmul.f32 %v720, 0.01
      %v728 = vsub.f32 %v666, %v727
      %v729 = vmax.f32 %v728, -1.0
      %v730 = vmin.f32 %v729, 1.0
      %v731 = vmul.f32 %v722, 0.01
      %v732 = vadd.f32 %v676, %v731
      %v733 = vmul.f32 %v676, 0.001
      %v734 = vsub.f32 %v732, %v733
      %v735 = vmul.f32 %v726, %v721
      %v736 = vsub.f32 %v734, %v735
      %v737 = vmul.f32 %v730, %v720
      %v738 = vsub.f32 %v736, %v737
      %v739 = vmax.f32 %v738, -10.0
      %v740 = vmin.f32 %v739, 10.0
      %vm741 = vcmask 253952
      %742 = vst.msk [vmem:[#allocation9] sm:$0x1] %vm741, %v726
      %743 = vst.msk [vmem:[#allocation9 + $0x1] sm:$0x1] %vm741, %v730
      %v744 = vtanh.pop %v740
      %s745 = scalar_lea.vmem [#allocation2], %s91
      %746 = vst.msk [vmem:[%s745] sm:$0x1] %vm741, %v744
    $region50: #{fully_fluid_network.1} parent=1 // loop_footer
      %s95 = sadd.s32 1, %s91
    $region51: #{fully_fluid_network.1} parent=1 // loop_footer_branch
      %90 = sbr.rel target = $region47
    $region52: #{fully_fluid_network.1} parent=1 // loop_exit
      _
    %v747 = vld [vmem:[#allocation2] sm:$0x3]
    %v748 = vld [vmem:[%s2] sm:$0xff]
    %v749 = vld [vmem:[%s2 + $0x8] sm:$0xff]
    %v750 = vld [vmem:[%s2 + $0x10] sm:$0xff]
    %v751 = vld [vmem:[%s2 + $0x18] sm:$0xff]
    %vm752 = vcmask 261120
    %v754 = vsel %vm752, %v747, 0
    %756 = vmatpush.msra.mxu0 0.0
    %757 = vmatpush.msra.mxu0 0.0
    %758 = vmatpush.msra.mxu0 0.0
    %759 = vmatpush.msra.mxu0 0.0
    %760 = vmatpush.msra.mxu0 0.0
    %761 = vmatpush.msra.mxu0 0.0
    %762 = vmatpush.msra.mxu0 0.0
    %763 = vmatpush.msra.mxu0 0.0
    %764 = vmatpush.msra.mxu0 0.0
    %765 = vmatpush.msra.mxu0 0.0
    %766 = vmatpush.msra.mxu0 0.0
    %767 = vmatpush.msra.mxu0 0.0
    %768 = vmatpush.msra.mxu0 %v751
    %769 = vmatpush.msra.mxu0 %v750
    %770 = vmatpush.msra.mxu0 %v749
    %771 = vmatpush.msra.mxu0 %v748
    %772 = vmatmul.f32.gmra.mxu0 %v754
    %v773 = vpop.f32.mrf.mxu0
    %v774 = vadd.f32 0.0, %v773
    %775 = vdwg.mxu0
    %776 = vst.msk [vmem:[#allocation4] sm:$0x3] %vm78, %v774
    %v777 = vld [vmem:[%s9] sm:$0x3]
    %778 = vst.msk [vmem:[#allocation11] sm:$0x3] %vm78, %v777
    %v779 = vld [vmem:[%s4] sm:$0xff]
    %v780 = vld [vmem:[%s4 + $0x8] sm:$0xff]
    %v781 = vld [vmem:[%s4 + $0x10] sm:$0xff]
    %v782 = vld [vmem:[%s4 + $0x18] sm:$0xff]
    %v783 = vld [vmem:[%s5] sm:$0xff]
    %v784 = vld [vmem:[%s5 + $0x8] sm:$0xff]
    %v785 = vld [vmem:[%s5 + $0x10] sm:$0xff]
    %v786 = vld [vmem:[%s5 + $0x18] sm:$0xff]
    loop: start=0, step=1, limit=2
    $region53: #{fully_fluid_network.1} parent=1 // loop_pre_header
      _
    $region54: #{fully_fluid_network.1} parent=1 // loop_header
      %s788 = sphi 0, %s792
      %p789 = scmp.ge.s32.totalorder %s788, 2
    $region55: #{fully_fluid_network.1} parent=1 // loop_header_branch
      %791 = sbr.rel (%p789) target = $region59
    $region56: #{fully_fluid_network.1} parent=1 // loop_body
      %s793 = scalar_lea.vmem [#allocation4], %s788
      %v794 = vld [vmem:[%s793] sm:$0x1]
      %v795 = vld [vmem:[#allocation11] sm:$0x1]
      %v796 = vld [vmem:[#allocation11 + $0x1] sm:$0x1]
      %v798 = vsel %vm752, %v794, 0
      %800 = vmatpush.msra.mxu0 0.0
      %801 = vmatpush.msra.mxu0 0.0
      %802 = vmatpush.msra.mxu0 0.0
      %803 = vmatpush.msra.mxu0 0.0
      %804 = vmatpush.msra.mxu0 0.0
      %805 = vmatpush.msra.mxu0 0.0
      %806 = vmatpush.msra.mxu0 0.0
      %807 = vmatpush.msra.mxu0 0.0
      %808 = vmatpush.msra.mxu0 0.0
      %809 = vmatpush.msra.mxu0 0.0
      %810 = vmatpush.msra.mxu0 0.0
      %811 = vmatpush.msra.mxu0 0.0
      %812 = vmatpush.msra.mxu0 %v782
      %813 = vmatpush.msra.mxu0 %v781
      %814 = vmatpush.msra.mxu0 %v780
      %815 = vmatpush.msra.mxu0 %v779
      %816 = vmatmul.f32.gmra.mxu0 %v798
      %v817 = vpop.f32.mrf.mxu0
      %v818 = vadd.f32 0.0, %v817
      %819 = vdwg.mxu0
      %820 = vmatpush.msra.mxu0 0.0
      %821 = vmatpush.msra.mxu0 0.0
      %822 = vmatpush.msra.mxu0 0.0
      %823 = vmatpush.msra.mxu0 0.0
      %824 = vmatpush.msra.mxu0 0.0
      %825 = vmatpush.msra.mxu0 0.0
      %826 = vmatpush.msra.mxu0 0.0
      %827 = vmatpush.msra.mxu0 0.0
      %828 = vmatpush.msra.mxu0 0.0
      %829 = vmatpush.msra.mxu0 0.0
      %830 = vmatpush.msra.mxu0 0.0
      %831 = vmatpush.msra.mxu0 0.0
      %832 = vmatpush.msra.mxu0 %v786
      %833 = vmatpush.msra.mxu0 %v785
      %834 = vmatpush.msra.mxu0 %v784
      %835 = vmatpush.msra.mxu0 %v783
      %836 = vmatmul.f32.gmra.mxu0 %v798
      %v837 = vpop.f32.mrf.mxu0
      %v838 = vadd.f32 0.0, %v837
      %839 = vdwg.mxu0
      %v840 = vsub.f32 %v818, %v794
      %v841 = vsub.f32 %v838, %v794
      %v842 = vadd.f32 %v840, %v841
      %v843 = vmul.f32 %v841, 0.01
      %v844 = vsub.f32 %v795, %v843
      %v845 = vmax.f32 %v844, -1.0
      %v846 = vmin.f32 %v845, 1.0
      %v847 = vmul.f32 %v840, 0.01
      %v848 = vsub.f32 %v796, %v847
      %v849 = vmax.f32 %v848, -1.0
      %v850 = vmin.f32 %v849, 1.0
      %v851 = vmul.f32 %v842, 0.01
      %v852 = vadd.f32 %v794, %v851
      %v853 = vmul.f32 %v794, 0.001
      %v854 = vsub.f32 %v852, %v853
      %v855 = vmul.f32 %v846, %v841
      %v856 = vsub.f32 %v854, %v855
      %v857 = vmul.f32 %v850, %v840
      %v858 = vsub.f32 %v856, %v857
      %v859 = vmax.f32 %v858, -10.0
      %v860 = vmin.f32 %v859, 10.0
      %v862 = vsel %vm752, %v860, 0
      %864 = vmatpush.msra.mxu0 0.0
      %865 = vmatpush.msra.mxu0 0.0
      %866 = vmatpush.msra.mxu0 0.0
      %867 = vmatpush.msra.mxu0 0.0
      %868 = vmatpush.msra.mxu0 0.0
      %869 = vmatpush.msra.mxu0 0.0
      %870 = vmatpush.msra.mxu0 0.0
      %871 = vmatpush.msra.mxu0 0.0
      %872 = vmatpush.msra.mxu0 0.0
      %873 = vmatpush.msra.mxu0 0.0
      %874 = vmatpush.msra.mxu0 0.0
      %875 = vmatpush.msra.mxu0 0.0
      %876 = vmatpush.msra.mxu0 %v782
      %877 = vmatpush.msra.mxu0 %v781
      %878 = vmatpush.msra.mxu0 %v780
      %879 = vmatpush.msra.mxu0 %v779
      %880 = vmatmul.f32.gmra.mxu0 %v862
      %v881 = vpop.f32.mrf.mxu0
      %v882 = vadd.f32 0.0, %v881
      %883 = vdwg.mxu0
      %884 = vmatpush.msra.mxu0 0.0
      %885 = vmatpush.msra.mxu0 0.0
      %886 = vmatpush.msra.mxu0 0.0
      %887 = vmatpush.msra.mxu0 0.0
      %888 = vmatpush.msra.mxu0 0.0
      %889 = vmatpush.msra.mxu0 0.0
      %890 = vmatpush.msra.mxu0 0.0
      %891 = vmatpush.msra.mxu0 0.0
      %892 = vmatpush.msra.mxu0 0.0
      %893 = vmatpush.msra.mxu0 0.0
      %894 = vmatpush.msra.mxu0 0.0
      %895 = vmatpush.msra.mxu0 0.0
      %896 = vmatpush.msra.mxu0 %v786
      %897 = vmatpush.msra.mxu0 %v785
      %898 = vmatpush.msra.mxu0 %v784
      %899 = vmatpush.msra.mxu0 %v783
      %900 = vmatmul.f32.gmra.mxu0 %v862
      %v901 = vpop.f32.mrf.mxu0
      %v902 = vadd.f32 0.0, %v901
      %903 = vdwg.mxu0
      %v904 = vsub.f32 %v882, %v860
      %v905 = vsub.f32 %v902, %v860
      %v906 = vadd.f32 %v904, %v905
      %v907 = vmul.f32 %v905, 0.01
      %v908 = vsub.f32 %v846, %v907
      %v909 = vmax.f32 %v908, -1.0
      %v910 = vmin.f32 %v909, 1.0
      %v911 = vmul.f32 %v904, 0.01
      %v912 = vsub.f32 %v850, %v911
      %v913 = vmax.f32 %v912, -1.0
      %v914 = vmin.f32 %v913, 1.0
      %v915 = vmul.f32 %v906, 0.01
      %v916 = vadd.f32 %v860, %v915
      %v917 = vmul.f32 %v860, 0.001
      %v918 = vsub.f32 %v916, %v917
      %v919 = vmul.f32 %v910, %v905
      %v920 = vsub.f32 %v918, %v919
      %v921 = vmul.f32 %v914, %v904
      %v922 = vsub.f32 %v920, %v921
      %v923 = vmax.f32 %v922, -10.0
      %v924 = vmin.f32 %v923, 10.0
      %v926 = vsel %vm752, %v924, 0
      %928 = vmatpush.msra.mxu0 0.0
      %929 = vmatpush.msra.mxu0 0.0
      %930 = vmatpush.msra.mxu0 0.0
      %931 = vmatpush.msra.mxu0 0.0
      %932 = vmatpush.msra.mxu0 0.0
      %933 = vmatpush.msra.mxu0 0.0
      %934 = vmatpush.msra.mxu0 0.0
      %935 = vmatpush.msra.mxu0 0.0
      %936 = vmatpush.msra.mxu0 0.0
      %937 = vmatpush.msra.mxu0 0.0
      %938 = vmatpush.msra.mxu0 0.0
      %939 = vmatpush.msra.mxu0 0.0
      %940 = vmatpush.msra.mxu0 %v782
      %941 = vmatpush.msra.mxu0 %v781
      %942 = vmatpush.msra.mxu0 %v780
      %943 = vmatpush.msra.mxu0 %v779
      %944 = vmatmul.f32.gmra.mxu0 %v926
      %v945 = vpop.f32.mrf.mxu0
      %v946 = vadd.f32 0.0, %v945
      %947 = vdwg.mxu0
      %948 = vmatpush.msra.mxu0 0.0
      %949 = vmatpush.msra.mxu0 0.0
      %950 = vmatpush.msra.mxu0 0.0
      %951 = vmatpush.msra.mxu0 0.0
      %952 = vmatpush.msra.mxu0 0.0
      %953 = vmatpush.msra.mxu0 0.0
      %954 = vmatpush.msra.mxu0 0.0
      %955 = vmatpush.msra.mxu0 0.0
      %956 = vmatpush.msra.mxu0 0.0
      %957 = vmatpush.msra.mxu0 0.0
      %958 = vmatpush.msra.mxu0 0.0
      %959 = vmatpush.msra.mxu0 0.0
      %960 = vmatpush.msra.mxu0 %v786
      %961 = vmatpush.msra.mxu0 %v785
      %962 = vmatpush.msra.mxu0 %v784
      %963 = vmatpush.msra.mxu0 %v783
      %964 = vmatmul.f32.gmra.mxu0 %v926
      %v965 = vpop.f32.mrf.mxu0
      %v966 = vadd.f32 0.0, %v965
      %967 = vdwg.mxu0
      %v968 = vsub.f32 %v946, %v924
      %v969 = vsub.f32 %v966, %v924
      %v970 = vadd.f32 %v968, %v969
      %v971 = vmul.f32 %v969, 0.01
      %v972 = vsub.f32 %v910, %v971
      %v973 = vmax.f32 %v972, -1.0
      %v974 = vmin.f32 %v973, 1.0
      %v975 = vmul.f32 %v968, 0.01
      %v976 = vsub.f32 %v914, %v975
      %v977 = vmax.f32 %v976, -1.0
      %v978 = vmin.f32 %v977, 1.0
      %v979 = vmul.f32 %v970, 0.01
      %v980 = vadd.f32 %v924, %v979
      %v981 = vmul.f32 %v924, 0.001
      %v982 = vsub.f32 %v980, %v981
      %v983 = vmul.f32 %v974, %v969
      %v984 = vsub.f32 %v982, %v983
      %v985 = vmul.f32 %v978, %v968
      %v986 = vsub.f32 %v984, %v985
      %v987 = vmax.f32 %v986, -10.0
      %v988 = vmin.f32 %v987, 10.0
      %v990 = vsel %vm752, %v988, 0
      %992 = vmatpush.msra.mxu0 0.0
      %993 = vmatpush.msra.mxu0 0.0
      %994 = vmatpush.msra.mxu0 0.0
      %995 = vmatpush.msra.mxu0 0.0
      %996 = vmatpush.msra.mxu0 0.0
      %997 = vmatpush.msra.mxu0 0.0
      %998 = vmatpush.msra.mxu0 0.0
      %999 = vmatpush.msra.mxu0 0.0
      %1000 = vmatpush.msra.mxu0 0.0
      %1001 = vmatpush.msra.mxu0 0.0
      %1002 = vmatpush.msra.mxu0 0.0
      %1003 = vmatpush.msra.mxu0 0.0
      %1004 = vmatpush.msra.mxu0 %v782
      %1005 = vmatpush.msra.mxu0 %v781
      %1006 = vmatpush.msra.mxu0 %v780
      %1007 = vmatpush.msra.mxu0 %v779
      %1008 = vmatmul.f32.gmra.mxu0 %v990
      %v1009 = vpop.f32.mrf.mxu0
      %v1010 = vadd.f32 0.0, %v1009
      %1011 = vdwg.mxu0
      %1012 = vmatpush.msra.mxu0 0.0
      %1013 = vmatpush.msra.mxu0 0.0
      %1014 = vmatpush.msra.mxu0 0.0
      %1015 = vmatpush.msra.mxu0 0.0
      %1016 = vmatpush.msra.mxu0 0.0
      %1017 = vmatpush.msra.mxu0 0.0
      %1018 = vmatpush.msra.mxu0 0.0
      %1019 = vmatpush.msra.mxu0 0.0
      %1020 = vmatpush.msra.mxu0 0.0
      %1021 = vmatpush.msra.mxu0 0.0
      %1022 = vmatpush.msra.mxu0 0.0
      %1023 = vmatpush.msra.mxu0 0.0
      %1024 = vmatpush.msra.mxu0 %v786
      %1025 = vmatpush.msra.mxu0 %v785
      %1026 = vmatpush.msra.mxu0 %v784
      %1027 = vmatpush.msra.mxu0 %v783
      %1028 = vmatmul.f32.gmra.mxu0 %v990
      %v1029 = vpop.f32.mrf.mxu0
      %v1030 = vadd.f32 0.0, %v1029
      %1031 = vdwg.mxu0
      %v1032 = vsub.f32 %v1010, %v988
      %v1033 = vsub.f32 %v1030, %v988
      %v1034 = vadd.f32 %v1032, %v1033
      %v1035 = vmul.f32 %v1033, 0.01
      %v1036 = vsub.f32 %v974, %v1035
      %v1037 = vmax.f32 %v1036, -1.0
      %v1038 = vmin.f32 %v1037, 1.0
      %v1039 = vmul.f32 %v1032, 0.01
      %v1040 = vsub.f32 %v978, %v1039
      %v1041 = vmax.f32 %v1040, -1.0
      %v1042 = vmin.f32 %v1041, 1.0
      %v1043 = vmul.f32 %v1034, 0.01
      %v1044 = vadd.f32 %v988, %v1043
      %v1045 = vmul.f32 %v988, 0.001
      %v1046 = vsub.f32 %v1044, %v1045
      %v1047 = vmul.f32 %v1038, %v1033
      %v1048 = vsub.f32 %v1046, %v1047
      %v1049 = vmul.f32 %v1042, %v1032
      %v1050 = vsub.f32 %v1048, %v1049
      %v1051 = vmax.f32 %v1050, -10.0
      %v1052 = vmin.f32 %v1051, 10.0
      %v1054 = vsel %vm752, %v1052, 0
      %1056 = vmatpush.msra.mxu0 0.0
      %1057 = vmatpush.msra.mxu0 0.0
      %1058 = vmatpush.msra.mxu0 0.0
      %1059 = vmatpush.msra.mxu0 0.0
      %1060 = vmatpush.msra.mxu0 0.0
      %1061 = vmatpush.msra.mxu0 0.0
      %1062 = vmatpush.msra.mxu0 0.0
      %1063 = vmatpush.msra.mxu0 0.0
      %1064 = vmatpush.msra.mxu0 0.0
      %1065 = vmatpush.msra.mxu0 0.0
      %1066 = vmatpush.msra.mxu0 0.0
      %1067 = vmatpush.msra.mxu0 0.0
      %1068 = vmatpush.msra.mxu0 %v782
      %1069 = vmatpush.msra.mxu0 %v781
      %1070 = vmatpush.msra.mxu0 %v780
      %1071 = vmatpush.msra.mxu0 %v779
      %1072 = vmatmul.f32.gmra.mxu0 %v1054
      %v1073 = vpop.f32.mrf.mxu0
      %v1074 = vadd.f32 0.0, %v1073
      %1075 = vdwg.mxu0
      %1076 = vmatpush.msra.mxu0 0.0
      %1077 = vmatpush.msra.mxu0 0.0
      %1078 = vmatpush.msra.mxu0 0.0
      %1079 = vmatpush.msra.mxu0 0.0
      %1080 = vmatpush.msra.mxu0 0.0
      %1081 = vmatpush.msra.mxu0 0.0
      %1082 = vmatpush.msra.mxu0 0.0
      %1083 = vmatpush.msra.mxu0 0.0
      %1084 = vmatpush.msra.mxu0 0.0
      %1085 = vmatpush.msra.mxu0 0.0
      %1086 = vmatpush.msra.mxu0 0.0
      %1087 = vmatpush.msra.mxu0 0.0
      %1088 = vmatpush.msra.mxu0 %v786
      %1089 = vmatpush.msra.mxu0 %v785
      %1090 = vmatpush.msra.mxu0 %v784
      %1091 = vmatpush.msra.mxu0 %v783
      %1092 = vmatmul.f32.gmra.mxu0 %v1054
      %v1093 = vpop.f32.mrf.mxu0
      %v1094 = vadd.f32 0.0, %v1093
      %1095 = vdwg.mxu0
      %v1096 = vsub.f32 %v1074, %v1052
      %v1097 = vsub.f32 %v1094, %v1052
      %v1098 = vadd.f32 %v1096, %v1097
      %v1099 = vmul.f32 %v1097, 0.01
      %v1100 = vsub.f32 %v1038, %v1099
      %v1101 = vmax.f32 %v1100, -1.0
      %v1102 = vmin.f32 %v1101, 1.0
      %v1103 = vmul.f32 %v1096, 0.01
      %v1104 = vsub.f32 %v1042, %v1103
      %v1105 = vmax.f32 %v1104, -1.0
      %v1106 = vmin.f32 %v1105, 1.0
      %v1107 = vmul.f32 %v1098, 0.01
      %v1108 = vadd.f32 %v1052, %v1107
      %v1109 = vmul.f32 %v1052, 0.001
      %v1110 = vsub.f32 %v1108, %v1109
      %v1111 = vmul.f32 %v1102, %v1097
      %v1112 = vsub.f32 %v1110, %v1111
      %v1113 = vmul.f32 %v1106, %v1096
      %v1114 = vsub.f32 %v1112, %v1113
      %v1115 = vmax.f32 %v1114, -10.0
      %v1116 = vmin.f32 %v1115, 10.0
      %v1118 = vsel %vm752, %v1116, 0
      %1120 = vmatpush.msra.mxu0 0.0
      %1121 = vmatpush.msra.mxu0 0.0
      %1122 = vmatpush.msra.mxu0 0.0
      %1123 = vmatpush.msra.mxu0 0.0
      %1124 = vmatpush.msra.mxu0 0.0
      %1125 = vmatpush.msra.mxu0 0.0
      %1126 = vmatpush.msra.mxu0 0.0
      %1127 = vmatpush.msra.mxu0 0.0
      %1128 = vmatpush.msra.mxu0 0.0
      %1129 = vmatpush.msra.mxu0 0.0
      %1130 = vmatpush.msra.mxu0 0.0
      %1131 = vmatpush.msra.mxu0 0.0
      %1132 = vmatpush.msra.mxu0 %v782
      %1133 = vmatpush.msra.mxu0 %v781
      %1134 = vmatpush.msra.mxu0 %v780
      %1135 = vmatpush.msra.mxu0 %v779
      %1136 = vmatmul.f32.gmra.mxu0 %v1118
      %v1137 = vpop.f32.mrf.mxu0
      %v1138 = vadd.f32 0.0, %v1137
      %1139 = vdwg.mxu0
      %1140 = vmatpush.msra.mxu0 0.0
      %1141 = vmatpush.msra.mxu0 0.0
      %1142 = vmatpush.msra.mxu0 0.0
      %1143 = vmatpush.msra.mxu0 0.0
      %1144 = vmatpush.msra.mxu0 0.0
      %1145 = vmatpush.msra.mxu0 0.0
      %1146 = vmatpush.msra.mxu0 0.0
      %1147 = vmatpush.msra.mxu0 0.0
      %1148 = vmatpush.msra.mxu0 0.0
      %1149 = vmatpush.msra.mxu0 0.0
      %1150 = vmatpush.msra.mxu0 0.0
      %1151 = vmatpush.msra.mxu0 0.0
      %1152 = vmatpush.msra.mxu0 %v786
      %1153 = vmatpush.msra.mxu0 %v785
      %1154 = vmatpush.msra.mxu0 %v784
      %1155 = vmatpush.msra.mxu0 %v783
      %1156 = vmatmul.f32.gmra.mxu0 %v1118
      %v1157 = vpop.f32.mrf.mxu0
      %v1158 = vadd.f32 0.0, %v1157
      %1159 = vdwg.mxu0
      %v1160 = vsub.f32 %v1138, %v1116
      %v1161 = vsub.f32 %v1158, %v1116
      %v1162 = vadd.f32 %v1160, %v1161
      %v1163 = vmul.f32 %v1161, 0.01
      %v1164 = vsub.f32 %v1102, %v1163
      %v1165 = vmax.f32 %v1164, -1.0
      %v1166 = vmin.f32 %v1165, 1.0
      %v1167 = vmul.f32 %v1160, 0.01
      %v1168 = vsub.f32 %v1106, %v1167
      %v1169 = vmax.f32 %v1168, -1.0
      %v1170 = vmin.f32 %v1169, 1.0
      %v1171 = vmul.f32 %v1162, 0.01
      %v1172 = vadd.f32 %v1116, %v1171
      %v1173 = vmul.f32 %v1116, 0.001
      %v1174 = vsub.f32 %v1172, %v1173
      %v1175 = vmul.f32 %v1166, %v1161
      %v1176 = vsub.f32 %v1174, %v1175
      %v1177 = vmul.f32 %v1170, %v1160
      %v1178 = vsub.f32 %v1176, %v1177
      %v1179 = vmax.f32 %v1178, -10.0
      %v1180 = vmin.f32 %v1179, 10.0
      %v1182 = vsel %vm752, %v1180, 0
      %1184 = vmatpush.msra.mxu0 0.0
      %1185 = vmatpush.msra.mxu0 0.0
      %1186 = vmatpush.msra.mxu0 0.0
      %1187 = vmatpush.msra.mxu0 0.0
      %1188 = vmatpush.msra.mxu0 0.0
      %1189 = vmatpush.msra.mxu0 0.0
      %1190 = vmatpush.msra.mxu0 0.0
      %1191 = vmatpush.msra.mxu0 0.0
      %1192 = vmatpush.msra.mxu0 0.0
      %1193 = vmatpush.msra.mxu0 0.0
      %1194 = vmatpush.msra.mxu0 0.0
      %1195 = vmatpush.msra.mxu0 0.0
      %1196 = vmatpush.msra.mxu0 %v782
      %1197 = vmatpush.msra.mxu0 %v781
      %1198 = vmatpush.msra.mxu0 %v780
      %1199 = vmatpush.msra.mxu0 %v779
      %1200 = vmatmul.f32.gmra.mxu0 %v1182
      %v1201 = vpop.f32.mrf.mxu0
      %v1202 = vadd.f32 0.0, %v1201
      %1203 = vdwg.mxu0
      %1204 = vmatpush.msra.mxu0 0.0
      %1205 = vmatpush.msra.mxu0 0.0
      %1206 = vmatpush.msra.mxu0 0.0
      %1207 = vmatpush.msra.mxu0 0.0
      %1208 = vmatpush.msra.mxu0 0.0
      %1209 = vmatpush.msra.mxu0 0.0
      %1210 = vmatpush.msra.mxu0 0.0
      %1211 = vmatpush.msra.mxu0 0.0
      %1212 = vmatpush.msra.mxu0 0.0
      %1213 = vmatpush.msra.mxu0 0.0
      %1214 = vmatpush.msra.mxu0 0.0
      %1215 = vmatpush.msra.mxu0 0.0
      %1216 = vmatpush.msra.mxu0 %v786
      %1217 = vmatpush.msra.mxu0 %v785
      %1218 = vmatpush.msra.mxu0 %v784
      %1219 = vmatpush.msra.mxu0 %v783
      %1220 = vmatmul.f32.gmra.mxu0 %v1182
      %v1221 = vpop.f32.mrf.mxu0
      %v1222 = vadd.f32 0.0, %v1221
      %1223 = vdwg.mxu0
      %v1224 = vsub.f32 %v1202, %v1180
      %v1225 = vsub.f32 %v1222, %v1180
      %v1226 = vadd.f32 %v1224, %v1225
      %v1227 = vmul.f32 %v1225, 0.01
      %v1228 = vsub.f32 %v1166, %v1227
      %v1229 = vmax.f32 %v1228, -1.0
      %v1230 = vmin.f32 %v1229, 1.0
      %v1231 = vmul.f32 %v1224, 0.01
      %v1232 = vsub.f32 %v1170, %v1231
      %v1233 = vmax.f32 %v1232, -1.0
      %v1234 = vmin.f32 %v1233, 1.0
      %v1235 = vmul.f32 %v1226, 0.01
      %v1236 = vadd.f32 %v1180, %v1235
      %v1237 = vmul.f32 %v1180, 0.001
      %v1238 = vsub.f32 %v1236, %v1237
      %v1239 = vmul.f32 %v1230, %v1225
      %v1240 = vsub.f32 %v1238, %v1239
      %v1241 = vmul.f32 %v1234, %v1224
      %v1242 = vsub.f32 %v1240, %v1241
      %v1243 = vmax.f32 %v1242, -10.0
      %v1244 = vmin.f32 %v1243, 10.0
      %v1246 = vsel %vm752, %v1244, 0
      %1248 = vmatpush.msra.mxu0 0.0
      %1249 = vmatpush.msra.mxu0 0.0
      %1250 = vmatpush.msra.mxu0 0.0
      %1251 = vmatpush.msra.mxu0 0.0
      %1252 = vmatpush.msra.mxu0 0.0
      %1253 = vmatpush.msra.mxu0 0.0
      %1254 = vmatpush.msra.mxu0 0.0
      %1255 = vmatpush.msra.mxu0 0.0
      %1256 = vmatpush.msra.mxu0 0.0
      %1257 = vmatpush.msra.mxu0 0.0
      %1258 = vmatpush.msra.mxu0 0.0
      %1259 = vmatpush.msra.mxu0 0.0
      %1260 = vmatpush.msra.mxu0 %v782
      %1261 = vmatpush.msra.mxu0 %v781
      %1262 = vmatpush.msra.mxu0 %v780
      %1263 = vmatpush.msra.mxu0 %v779
      %1264 = vmatmul.f32.gmra.mxu0 %v1246
      %v1265 = vpop.f32.mrf.mxu0
      %v1266 = vadd.f32 0.0, %v1265
      %1267 = vdwg.mxu0
      %1268 = vmatpush.msra.mxu0 0.0
      %1269 = vmatpush.msra.mxu0 0.0
      %1270 = vmatpush.msra.mxu0 0.0
      %1271 = vmatpush.msra.mxu0 0.0
      %1272 = vmatpush.msra.mxu0 0.0
      %1273 = vmatpush.msra.mxu0 0.0
      %1274 = vmatpush.msra.mxu0 0.0
      %1275 = vmatpush.msra.mxu0 0.0
      %1276 = vmatpush.msra.mxu0 0.0
      %1277 = vmatpush.msra.mxu0 0.0
      %1278 = vmatpush.msra.mxu0 0.0
      %1279 = vmatpush.msra.mxu0 0.0
      %1280 = vmatpush.msra.mxu0 %v786
      %1281 = vmatpush.msra.mxu0 %v785
      %1282 = vmatpush.msra.mxu0 %v784
      %1283 = vmatpush.msra.mxu0 %v783
      %1284 = vmatmul.f32.gmra.mxu0 %v1246
      %v1285 = vpop.f32.mrf.mxu0
      %v1286 = vadd.f32 0.0, %v1285
      %1287 = vdwg.mxu0
      %v1288 = vsub.f32 %v1266, %v1244
      %v1289 = vsub.f32 %v1286, %v1244
      %v1290 = vadd.f32 %v1288, %v1289
      %v1291 = vmul.f32 %v1289, 0.01
      %v1292 = vsub.f32 %v1230, %v1291
      %v1293 = vmax.f32 %v1292, -1.0
      %v1294 = vmin.f32 %v1293, 1.0
      %v1295 = vmul.f32 %v1288, 0.01
      %v1296 = vsub.f32 %v1234, %v1295
      %v1297 = vmax.f32 %v1296, -1.0
      %v1298 = vmin.f32 %v1297, 1.0
      %v1299 = vmul.f32 %v1290, 0.01
      %v1300 = vadd.f32 %v1244, %v1299
      %v1301 = vmul.f32 %v1244, 0.001
      %v1302 = vsub.f32 %v1300, %v1301
      %v1303 = vmul.f32 %v1294, %v1289
      %v1304 = vsub.f32 %v1302, %v1303
      %v1305 = vmul.f32 %v1298, %v1288
      %v1306 = vsub.f32 %v1304, %v1305
      %v1307 = vmax.f32 %v1306, -10.0
      %v1308 = vmin.f32 %v1307, 10.0
      %v1310 = vsel %vm752, %v1308, 0
      %1312 = vmatpush.msra.mxu0 0.0
      %1313 = vmatpush.msra.mxu0 0.0
      %1314 = vmatpush.msra.mxu0 0.0
      %1315 = vmatpush.msra.mxu0 0.0
      %1316 = vmatpush.msra.mxu0 0.0
      %1317 = vmatpush.msra.mxu0 0.0
      %1318 = vmatpush.msra.mxu0 0.0
      %1319 = vmatpush.msra.mxu0 0.0
      %1320 = vmatpush.msra.mxu0 0.0
      %1321 = vmatpush.msra.mxu0 0.0
      %1322 = vmatpush.msra.mxu0 0.0
      %1323 = vmatpush.msra.mxu0 0.0
      %1324 = vmatpush.msra.mxu0 %v782
      %1325 = vmatpush.msra.mxu0 %v781
      %1326 = vmatpush.msra.mxu0 %v780
      %1327 = vmatpush.msra.mxu0 %v779
      %1328 = vmatmul.f32.gmra.mxu0 %v1310
      %v1329 = vpop.f32.mrf.mxu0
      %v1330 = vadd.f32 0.0, %v1329
      %1331 = vdwg.mxu0
      %1332 = vmatpush.msra.mxu0 0.0
      %1333 = vmatpush.msra.mxu0 0.0
      %1334 = vmatpush.msra.mxu0 0.0
      %1335 = vmatpush.msra.mxu0 0.0
      %1336 = vmatpush.msra.mxu0 0.0
      %1337 = vmatpush.msra.mxu0 0.0
      %1338 = vmatpush.msra.mxu0 0.0
      %1339 = vmatpush.msra.mxu0 0.0
      %1340 = vmatpush.msra.mxu0 0.0
      %1341 = vmatpush.msra.mxu0 0.0
      %1342 = vmatpush.msra.mxu0 0.0
      %1343 = vmatpush.msra.mxu0 0.0
      %1344 = vmatpush.msra.mxu0 %v786
      %1345 = vmatpush.msra.mxu0 %v785
      %1346 = vmatpush.msra.mxu0 %v784
      %1347 = vmatpush.msra.mxu0 %v783
      %1348 = vmatmul.f32.gmra.mxu0 %v1310
      %v1349 = vpop.f32.mrf.mxu0
      %v1350 = vadd.f32 0.0, %v1349
      %1351 = vdwg.mxu0
      %v1352 = vsub.f32 %v1330, %v1308
      %v1353 = vsub.f32 %v1350, %v1308
      %v1354 = vadd.f32 %v1352, %v1353
      %v1355 = vmul.f32 %v1353, 0.01
      %v1356 = vsub.f32 %v1294, %v1355
      %v1357 = vmax.f32 %v1356, -1.0
      %v1358 = vmin.f32 %v1357, 1.0
      %v1359 = vmul.f32 %v1352, 0.01
      %v1360 = vsub.f32 %v1298, %v1359
      %v1361 = vmax.f32 %v1360, -1.0
      %v1362 = vmin.f32 %v1361, 1.0
      %v1363 = vmul.f32 %v1354, 0.01
      %v1364 = vadd.f32 %v1308, %v1363
      %v1365 = vmul.f32 %v1308, 0.001
      %v1366 = vsub.f32 %v1364, %v1365
      %v1367 = vmul.f32 %v1358, %v1353
      %v1368 = vsub.f32 %v1366, %v1367
      %v1369 = vmul.f32 %v1362, %v1352
      %v1370 = vsub.f32 %v1368, %v1369
      %v1371 = vmax.f32 %v1370, -10.0
      %v1372 = vmin.f32 %v1371, 10.0
      %v1374 = vsel %vm752, %v1372, 0
      %1376 = vmatpush.msra.mxu0 0.0
      %1377 = vmatpush.msra.mxu0 0.0
      %1378 = vmatpush.msra.mxu0 0.0
      %1379 = vmatpush.msra.mxu0 0.0
      %1380 = vmatpush.msra.mxu0 0.0
      %1381 = vmatpush.msra.mxu0 0.0
      %1382 = vmatpush.msra.mxu0 0.0
      %1383 = vmatpush.msra.mxu0 0.0
      %1384 = vmatpush.msra.mxu0 0.0
      %1385 = vmatpush.msra.mxu0 0.0
      %1386 = vmatpush.msra.mxu0 0.0
      %1387 = vmatpush.msra.mxu0 0.0
      %1388 = vmatpush.msra.mxu0 %v782
      %1389 = vmatpush.msra.mxu0 %v781
      %1390 = vmatpush.msra.mxu0 %v780
      %1391 = vmatpush.msra.mxu0 %v779
      %1392 = vmatmul.f32.gmra.mxu0 %v1374
      %v1393 = vpop.f32.mrf.mxu0
      %v1394 = vadd.f32 0.0, %v1393
      %1395 = vdwg.mxu0
      %1396 = vmatpush.msra.mxu0 0.0
      %1397 = vmatpush.msra.mxu0 0.0
      %1398 = vmatpush.msra.mxu0 0.0
      %1399 = vmatpush.msra.mxu0 0.0
      %1400 = vmatpush.msra.mxu0 0.0
      %1401 = vmatpush.msra.mxu0 0.0
      %1402 = vmatpush.msra.mxu0 0.0
      %1403 = vmatpush.msra.mxu0 0.0
      %1404 = vmatpush.msra.mxu0 0.0
      %1405 = vmatpush.msra.mxu0 0.0
      %1406 = vmatpush.msra.mxu0 0.0
      %1407 = vmatpush.msra.mxu0 0.0
      %1408 = vmatpush.msra.mxu0 %v786
      %1409 = vmatpush.msra.mxu0 %v785
      %1410 = vmatpush.msra.mxu0 %v784
      %1411 = vmatpush.msra.mxu0 %v783
      %1412 = vmatmul.f32.gmra.mxu0 %v1374
      %v1413 = vpop.f32.mrf.mxu0
      %v1414 = vadd.f32 0.0, %v1413
      %1415 = vdwg.mxu0
      %v1416 = vsub.f32 %v1394, %v1372
      %v1417 = vsub.f32 %v1414, %v1372
      %v1418 = vadd.f32 %v1416, %v1417
      %v1419 = vmul.f32 %v1417, 0.01
      %v1420 = vsub.f32 %v1358, %v1419
      %v1421 = vmax.f32 %v1420, -1.0
      %v1422 = vmin.f32 %v1421, 1.0
      %v1423 = vmul.f32 %v1416, 0.01
      %v1424 = vsub.f32 %v1362, %v1423
      %v1425 = vmax.f32 %v1424, -1.0
      %v1426 = vmin.f32 %v1425, 1.0
      %v1427 = vmul.f32 %v1418, 0.01
      %v1428 = vadd.f32 %v1372, %v1427
      %v1429 = vmul.f32 %v1372, 0.001
      %v1430 = vsub.f32 %v1428, %v1429
      %v1431 = vmul.f32 %v1422, %v1417
      %v1432 = vsub.f32 %v1430, %v1431
      %v1433 = vmul.f32 %v1426, %v1416
      %v1434 = vsub.f32 %v1432, %v1433
      %v1435 = vmax.f32 %v1434, -10.0
      %v1436 = vmin.f32 %v1435, 10.0
      %vm1437 = vcmask 253952
      %1438 = vst.msk [vmem:[#allocation11] sm:$0x1] %vm1437, %v1422
      %1439 = vst.msk [vmem:[#allocation11 + $0x1] sm:$0x1] %vm1437, %v1426
      %v1440 = vtanh.pop %v1436
      %s1441 = scalar_lea.vmem [#allocation3], %s788
      %1442 = vst.msk [vmem:[%s1441] sm:$0x1] %vm1437, %v1440
    $region57: #{fully_fluid_network.1} parent=1 // loop_footer
      %s792 = sadd.s32 1, %s788
    $region58: #{fully_fluid_network.1} parent=1 // loop_footer_branch
      %787 = sbr.rel target = $region54
    $region59: #{fully_fluid_network.1} parent=1 // loop_exit
      _
    %v1443 = vld [vmem:[#allocation3] sm:$0x3]
    %v1444 = vld [vmem:[%s3] sm:$0xff]
    %v1445 = vld [vmem:[%s3 + $0x8] sm:$0xff]
    %v1446 = vld [vmem:[%s3 + $0x10] sm:$0xff]
    %v1447 = vld [vmem:[%s3 + $0x18] sm:$0xff]
    %v1449 = vsel %vm752, %v1443, 0
    %1451 = vmatpush.msra.mxu0 0.0
    %1452 = vmatpush.msra.mxu0 0.0
    %1453 = vmatpush.msra.mxu0 0.0
    %1454 = vmatpush.msra.mxu0 0.0
    %1455 = vmatpush.msra.mxu0 0.0
    %1456 = vmatpush.msra.mxu0 0.0
    %1457 = vmatpush.msra.mxu0 0.0
    %1458 = vmatpush.msra.mxu0 0.0
    %1459 = vmatpush.msra.mxu0 0.0
    %1460 = vmatpush.msra.mxu0 0.0
    %1461 = vmatpush.msra.mxu0 0.0
    %1462 = vmatpush.msra.mxu0 0.0
    %1463 = vmatpush.msra.mxu0 %v1447
    %1464 = vmatpush.msra.mxu0 %v1446
    %1465 = vmatpush.msra.mxu0 %v1445
    %1466 = vmatpush.msra.mxu0 %v1444
    %1467 = vmatmul.f32.gmra.mxu0 %v1449
    %v1468 = vpop.f32.mrf.mxu0
    %v1469 = vadd.f32 0.0, %v1468
    %1470 = vdwg.mxu0
    %vm1471 = vcmask 74752
    %1472 = vst.msk [vmem:[#allocation5] sm:$0x3] %vm1471, %v1469
    %v1473 = vld [vmem:[%s10] sm:$0x3]
    %1474 = vst.msk [vmem:[#allocation12] sm:$0x3] %vm1471, %v1473
    %v1475 = vld [vmem:[%s6] sm:$0xff]
    %v1476 = vld [vmem:[%s6 + $0x8] sm:$0x3]
    %v1477 = vld [vmem:[%s7] sm:$0xff]
    %v1478 = vld [vmem:[%s7 + $0x8] sm:$0x3]
    loop: start=0, step=1, limit=2
    $region60: #{fully_fluid_network.1} parent=1 // loop_pre_header
      _
    $region61: #{fully_fluid_network.1} parent=1 // loop_header
      %s1480 = sphi 0, %s1484
      %p1481 = scmp.ge.s32.totalorder %s1480, 2
    $region62: #{fully_fluid_network.1} parent=1 // loop_header_branch
      %1483 = sbr.rel (%p1481) target = $region66
    $region63: #{fully_fluid_network.1} parent=1 // loop_body
      %s1485 = scalar_lea.vmem [#allocation5], %s1480
      %v1486 = vld [vmem:[%s1485] sm:$0x1]
      %v1487 = vld [vmem:[#allocation12] sm:$0x1]
      %v1488 = vld [vmem:[#allocation12 + $0x1] sm:$0x1]
      %vm1489 = vcmask 80896
      %v1491 = vsel %vm1489, %v1486, 0
      %vm1493 = vcmask 1041408
      %v1495 = vsel %vm1493, %v1476, 0
      %1497 = vmatpush.msra.mxu0 0.0
      %1498 = vmatpush.msra.mxu0 0.0
      %1499 = vmatpush.msra.mxu0 0.0
      %1500 = vmatpush.msra.mxu0 0.0
      %1501 = vmatpush.msra.mxu0 0.0
      %1502 = vmatpush.msra.mxu0 0.0
      %1503 = vmatpush.msra.mxu0 0.0
      %1504 = vmatpush.msra.mxu0 0.0
      %1505 = vmatpush.msra.mxu0 0.0
      %1506 = vmatpush.msra.mxu0 0.0
      %1507 = vmatpush.msra.mxu0 0.0
      %1508 = vmatpush.msra.mxu0 0.0
      %1509 = vmatpush.msra.mxu0 0.0
      %1510 = vmatpush.msra.mxu0 0.0
      %1511 = vmatpush.msra.mxu0 %v1495
      %1512 = vmatpush.msra.mxu0 %v1475
      %1513 = vmatmul.f32.gmra.mxu0 %v1491
      %v1514 = vpop.f32.mrf.mxu0
      %v1515 = vadd.f32 0.0, %v1514
      %1516 = vdwg.mxu0
      %v1518 = vsel %vm1493, %v1478, 0
      %1520 = vmatpush.msra.mxu0 0.0
      %1521 = vmatpush.msra.mxu0 0.0
      %1522 = vmatpush.msra.mxu0 0.0
      %1523 = vmatpush.msra.mxu0 0.0
      %1524 = vmatpush.msra.mxu0 0.0
      %1525 = vmatpush.msra.mxu0 0.0
      %1526 = vmatpush.msra.mxu0 0.0
      %1527 = vmatpush.msra.mxu0 0.0
      %1528 = vmatpush.msra.mxu0 0.0
      %1529 = vmatpush.msra.mxu0 0.0
      %1530 = vmatpush.msra.mxu0 0.0
      %1531 = vmatpush.msra.mxu0 0.0
      %1532 = vmatpush.msra.mxu0 0.0
      %1533 = vmatpush.msra.mxu0 0.0
      %1534 = vmatpush.msra.mxu0 %v1518
      %1535 = vmatpush.msra.mxu0 %v1477
      %1536 = vmatmul.f32.gmra.mxu0 %v1491
      %v1537 = vpop.f32.mrf.mxu0
      %v1538 = vadd.f32 0.0, %v1537
      %1539 = vdwg.mxu0
      %v1540 = vsub.f32 %v1515, %v1486
      %v1541 = vsub.f32 %v1538, %v1486
      %v1542 = vadd.f32 %v1540, %v1541
      %v1543 = vmul.f32 %v1541, 0.01
      %v1544 = vsub.f32 %v1487, %v1543
      %v1545 = vmax.f32 %v1544, -1.0
      %v1546 = vmin.f32 %v1545, 1.0
      %v1547 = vmul.f32 %v1540, 0.01
      %v1548 = vsub.f32 %v1488, %v1547
      %v1549 = vmax.f32 %v1548, -1.0
      %v1550 = vmin.f32 %v1549, 1.0
      %v1551 = vmul.f32 %v1542, 0.01
      %v1552 = vadd.f32 %v1486, %v1551
      %v1553 = vmul.f32 %v1486, 0.001
      %v1554 = vsub.f32 %v1552, %v1553
      %v1555 = vmul.f32 %v1546, %v1541
      %v1556 = vsub.f32 %v1554, %v1555
      %v1557 = vmul.f32 %v1550, %v1540
      %v1558 = vsub.f32 %v1556, %v1557
      %v1559 = vmax.f32 %v1558, -10.0
      %v1560 = vmin.f32 %v1559, 10.0
      %v1562 = vsel %vm1489, %v1560, 0
      %1564 = vmatpush.msra.mxu0 0.0
      %1565 = vmatpush.msra.mxu0 0.0
      %1566 = vmatpush.msra.mxu0 0.0
      %1567 = vmatpush.msra.mxu0 0.0
      %1568 = vmatpush.msra.mxu0 0.0
      %1569 = vmatpush.msra.mxu0 0.0
      %1570 = vmatpush.msra.mxu0 0.0
      %1571 = vmatpush.msra.mxu0 0.0
      %1572 = vmatpush.msra.mxu0 0.0
      %1573 = vmatpush.msra.mxu0 0.0
      %1574 = vmatpush.msra.mxu0 0.0
      %1575 = vmatpush.msra.mxu0 0.0
      %1576 = vmatpush.msra.mxu0 0.0
      %1577 = vmatpush.msra.mxu0 0.0
      %1578 = vmatpush.msra.mxu0 %v1495
      %1579 = vmatpush.msra.mxu0 %v1475
      %1580 = vmatmul.f32.gmra.mxu0 %v1562
      %v1581 = vpop.f32.mrf.mxu0
      %v1582 = vadd.f32 0.0, %v1581
      %1583 = vdwg.mxu0
      %1584 = vmatpush.msra.mxu0 0.0
      %1585 = vmatpush.msra.mxu0 0.0
      %1586 = vmatpush.msra.mxu0 0.0
      %1587 = vmatpush.msra.mxu0 0.0
      %1588 = vmatpush.msra.mxu0 0.0
      %1589 = vmatpush.msra.mxu0 0.0
      %1590 = vmatpush.msra.mxu0 0.0
      %1591 = vmatpush.msra.mxu0 0.0
      %1592 = vmatpush.msra.mxu0 0.0
      %1593 = vmatpush.msra.mxu0 0.0
      %1594 = vmatpush.msra.mxu0 0.0
      %1595 = vmatpush.msra.mxu0 0.0
      %1596 = vmatpush.msra.mxu0 0.0
      %1597 = vmatpush.msra.mxu0 0.0
      %1598 = vmatpush.msra.mxu0 %v1518
      %1599 = vmatpush.msra.mxu0 %v1477
      %1600 = vmatmul.f32.gmra.mxu0 %v1562
      %v1601 = vpop.f32.mrf.mxu0
      %v1602 = vadd.f32 0.0, %v1601
      %1603 = vdwg.mxu0
      %v1604 = vsub.f32 %v1582, %v1560
      %v1605 = vsub.f32 %v1602, %v1560
      %v1606 = vadd.f32 %v1604, %v1605
      %v1607 = vmul.f32 %v1605, 0.01
      %v1608 = vsub.f32 %v1546, %v1607
      %v1609 = vmax.f32 %v1608, -1.0
      %v1610 = vmin.f32 %v1609, 1.0
      %v1611 = vmul.f32 %v1604, 0.01
      %v1612 = vsub.f32 %v1550, %v1611
      %v1613 = vmax.f32 %v1612, -1.0
      %v1614 = vmin.f32 %v1613, 1.0
      %v1615 = vmul.f32 %v1606, 0.01
      %v1616 = vadd.f32 %v1560, %v1615
      %v1617 = vmul.f32 %v1560, 0.001
      %v1618 = vsub.f32 %v1616, %v1617
      %v1619 = vmul.f32 %v1610, %v1605
      %v1620 = vsub.f32 %v1618, %v1619
      %v1621 = vmul.f32 %v1614, %v1604
      %v1622 = vsub.f32 %v1620, %v1621
      %v1623 = vmax.f32 %v1622, -10.0
      %v1624 = vmin.f32 %v1623, 10.0
      %v1626 = vsel %vm1489, %v1624, 0
      %1628 = vmatpush.msra.mxu0 0.0
      %1629 = vmatpush.msra.mxu0 0.0
      %1630 = vmatpush.msra.mxu0 0.0
      %1631 = vmatpush.msra.mxu0 0.0
      %1632 = vmatpush.msra.mxu0 0.0
      %1633 = vmatpush.msra.mxu0 0.0
      %1634 = vmatpush.msra.mxu0 0.0
      %1635 = vmatpush.msra.mxu0 0.0
      %1636 = vmatpush.msra.mxu0 0.0
      %1637 = vmatpush.msra.mxu0 0.0
      %1638 = vmatpush.msra.mxu0 0.0
      %1639 = vmatpush.msra.mxu0 0.0
      %1640 = vmatpush.msra.mxu0 0.0
      %1641 = vmatpush.msra.mxu0 0.0
      %1642 = vmatpush.msra.mxu0 %v1495
      %1643 = vmatpush.msra.mxu0 %v1475
      %1644 = vmatmul.f32.gmra.mxu0 %v1626
      %v1645 = vpop.f32.mrf.mxu0
      %v1646 = vadd.f32 0.0, %v1645
      %1647 = vdwg.mxu0
      %1648 = vmatpush.msra.mxu0 0.0
      %1649 = vmatpush.msra.mxu0 0.0
      %1650 = vmatpush.msra.mxu0 0.0
      %1651 = vmatpush.msra.mxu0 0.0
      %1652 = vmatpush.msra.mxu0 0.0
      %1653 = vmatpush.msra.mxu0 0.0
      %1654 = vmatpush.msra.mxu0 0.0
      %1655 = vmatpush.msra.mxu0 0.0
      %1656 = vmatpush.msra.mxu0 0.0
      %1657 = vmatpush.msra.mxu0 0.0
      %1658 = vmatpush.msra.mxu0 0.0
      %1659 = vmatpush.msra.mxu0 0.0
      %1660 = vmatpush.msra.mxu0 0.0
      %1661 = vmatpush.msra.mxu0 0.0
      %1662 = vmatpush.msra.mxu0 %v1518
      %1663 = vmatpush.msra.mxu0 %v1477
      %1664 = vmatmul.f32.gmra.mxu0 %v1626
      %v1665 = vpop.f32.mrf.mxu0
      %v1666 = vadd.f32 0.0, %v1665
      %1667 = vdwg.mxu0
      %v1668 = vsub.f32 %v1646, %v1624
      %v1669 = vsub.f32 %v1666, %v1624
      %v1670 = vadd.f32 %v1668, %v1669
      %v1671 = vmul.f32 %v1669, 0.01
      %v1672 = vsub.f32 %v1610, %v1671
      %v1673 = vmax.f32 %v1672, -1.0
      %v1674 = vmin.f32 %v1673, 1.0
      %v1675 = vmul.f32 %v1668, 0.01
      %v1676 = vsub.f32 %v1614, %v1675
      %v1677 = vmax.f32 %v1676, -1.0
      %v1678 = vmin.f32 %v1677, 1.0
      %v1679 = vmul.f32 %v1670, 0.01
      %v1680 = vadd.f32 %v1624, %v1679
      %v1681 = vmul.f32 %v1624, 0.001
      %v1682 = vsub.f32 %v1680, %v1681
      %v1683 = vmul.f32 %v1674, %v1669
      %v1684 = vsub.f32 %v1682, %v1683
      %v1685 = vmul.f32 %v1678, %v1668
      %v1686 = vsub.f32 %v1684, %v1685
      %v1687 = vmax.f32 %v1686, -10.0
      %v1688 = vmin.f32 %v1687, 10.0
      %v1690 = vsel %vm1489, %v1688, 0
      %1692 = vmatpush.msra.mxu0 0.0
      %1693 = vmatpush.msra.mxu0 0.0
      %1694 = vmatpush.msra.mxu0 0.0
      %1695 = vmatpush.msra.mxu0 0.0
      %1696 = vmatpush.msra.mxu0 0.0
      %1697 = vmatpush.msra.mxu0 0.0
      %1698 = vmatpush.msra.mxu0 0.0
      %1699 = vmatpush.msra.mxu0 0.0
      %1700 = vmatpush.msra.mxu0 0.0
      %1701 = vmatpush.msra.mxu0 0.0
      %1702 = vmatpush.msra.mxu0 0.0
      %1703 = vmatpush.msra.mxu0 0.0
      %1704 = vmatpush.msra.mxu0 0.0
      %1705 = vmatpush.msra.mxu0 0.0
      %1706 = vmatpush.msra.mxu0 %v1495
      %1707 = vmatpush.msra.mxu0 %v1475
      %1708 = vmatmul.f32.gmra.mxu0 %v1690
      %v1709 = vpop.f32.mrf.mxu0
      %v1710 = vadd.f32 0.0, %v1709
      %1711 = vdwg.mxu0
      %1712 = vmatpush.msra.mxu0 0.0
      %1713 = vmatpush.msra.mxu0 0.0
      %1714 = vmatpush.msra.mxu0 0.0
      %1715 = vmatpush.msra.mxu0 0.0
      %1716 = vmatpush.msra.mxu0 0.0
      %1717 = vmatpush.msra.mxu0 0.0
      %1718 = vmatpush.msra.mxu0 0.0
      %1719 = vmatpush.msra.mxu0 0.0
      %1720 = vmatpush.msra.mxu0 0.0
      %1721 = vmatpush.msra.mxu0 0.0
      %1722 = vmatpush.msra.mxu0 0.0
      %1723 = vmatpush.msra.mxu0 0.0
      %1724 = vmatpush.msra.mxu0 0.0
      %1725 = vmatpush.msra.mxu0 0.0
      %1726 = vmatpush.msra.mxu0 %v1518
      %1727 = vmatpush.msra.mxu0 %v1477
      %1728 = vmatmul.f32.gmra.mxu0 %v1690
      %v1729 = vpop.f32.mrf.mxu0
      %v1730 = vadd.f32 0.0, %v1729
      %1731 = vdwg.mxu0
      %v1732 = vsub.f32 %v1710, %v1688
      %v1733 = vsub.f32 %v1730, %v1688
      %v1734 = vadd.f32 %v1732, %v1733
      %v1735 = vmul.f32 %v1733, 0.01
      %v1736 = vsub.f32 %v1674, %v1735
      %v1737 = vmax.f32 %v1736, -1.0
      %v1738 = vmin.f32 %v1737, 1.0
      %v1739 = vmul.f32 %v1732, 0.01
      %v1740 = vsub.f32 %v1678, %v1739
      %v1741 = vmax.f32 %v1740, -1.0
      %v1742 = vmin.f32 %v1741, 1.0
      %v1743 = vmul.f32 %v1734, 0.01
      %v1744 = vadd.f32 %v1688, %v1743
      %v1745 = vmul.f32 %v1688, 0.001
      %v1746 = vsub.f32 %v1744, %v1745
      %v1747 = vmul.f32 %v1738, %v1733
      %v1748 = vsub.f32 %v1746, %v1747
      %v1749 = vmul.f32 %v1742, %v1732
      %v1750 = vsub.f32 %v1748, %v1749
      %v1751 = vmax.f32 %v1750, -10.0
      %v1752 = vmin.f32 %v1751, 10.0
      %v1754 = vsel %vm1489, %v1752, 0
      %1756 = vmatpush.msra.mxu0 0.0
      %1757 = vmatpush.msra.mxu0 0.0
      %1758 = vmatpush.msra.mxu0 0.0
      %1759 = vmatpush.msra.mxu0 0.0
      %1760 = vmatpush.msra.mxu0 0.0
      %1761 = vmatpush.msra.mxu0 0.0
      %1762 = vmatpush.msra.mxu0 0.0
      %1763 = vmatpush.msra.mxu0 0.0
      %1764 = vmatpush.msra.mxu0 0.0
      %1765 = vmatpush.msra.mxu0 0.0
      %1766 = vmatpush.msra.mxu0 0.0
      %1767 = vmatpush.msra.mxu0 0.0
      %1768 = vmatpush.msra.mxu0 0.0
      %1769 = vmatpush.msra.mxu0 0.0
      %1770 = vmatpush.msra.mxu0 %v1495
      %1771 = vmatpush.msra.mxu0 %v1475
      %1772 = vmatmul.f32.gmra.mxu0 %v1754
      %v1773 = vpop.f32.mrf.mxu0
      %v1774 = vadd.f32 0.0, %v1773
      %1775 = vdwg.mxu0
      %1776 = vmatpush.msra.mxu0 0.0
      %1777 = vmatpush.msra.mxu0 0.0
      %1778 = vmatpush.msra.mxu0 0.0
      %1779 = vmatpush.msra.mxu0 0.0
      %1780 = vmatpush.msra.mxu0 0.0
      %1781 = vmatpush.msra.mxu0 0.0
      %1782 = vmatpush.msra.mxu0 0.0
      %1783 = vmatpush.msra.mxu0 0.0
      %1784 = vmatpush.msra.mxu0 0.0
      %1785 = vmatpush.msra.mxu0 0.0
      %1786 = vmatpush.msra.mxu0 0.0
      %1787 = vmatpush.msra.mxu0 0.0
      %1788 = vmatpush.msra.mxu0 0.0
      %1789 = vmatpush.msra.mxu0 0.0
      %1790 = vmatpush.msra.mxu0 %v1518
      %1791 = vmatpush.msra.mxu0 %v1477
      %1792 = vmatmul.f32.gmra.mxu0 %v1754
      %v1793 = vpop.f32.mrf.mxu0
      %v1794 = vadd.f32 0.0, %v1793
      %1795 = vdwg.mxu0
      %v1796 = vsub.f32 %v1774, %v1752
      %v1797 = vsub.f32 %v1794, %v1752
      %v1798 = vadd.f32 %v1796, %v1797
      %v1799 = vmul.f32 %v1797, 0.01
      %v1800 = vsub.f32 %v1738, %v1799
      %v1801 = vmax.f32 %v1800, -1.0
      %v1802 = vmin.f32 %v1801, 1.0
      %v1803 = vmul.f32 %v1796, 0.01
      %v1804 = vsub.f32 %v1742, %v1803
      %v1805 = vmax.f32 %v1804, -1.0
      %v1806 = vmin.f32 %v1805, 1.0
      %v1807 = vmul.f32 %v1798, 0.01
      %v1808 = vadd.f32 %v1752, %v1807
      %v1809 = vmul.f32 %v1752, 0.001
      %v1810 = vsub.f32 %v1808, %v1809
      %v1811 = vmul.f32 %v1802, %v1797
      %v1812 = vsub.f32 %v1810, %v1811
      %v1813 = vmul.f32 %v1806, %v1796
      %v1814 = vsub.f32 %v1812, %v1813
      %v1815 = vmax.f32 %v1814, -10.0
      %v1816 = vmin.f32 %v1815, 10.0
      %v1818 = vsel %vm1489, %v1816, 0
      %1820 = vmatpush.msra.mxu0 0.0
      %1821 = vmatpush.msra.mxu0 0.0
      %1822 = vmatpush.msra.mxu0 0.0
      %1823 = vmatpush.msra.mxu0 0.0
      %1824 = vmatpush.msra.mxu0 0.0
      %1825 = vmatpush.msra.mxu0 0.0
      %1826 = vmatpush.msra.mxu0 0.0
      %1827 = vmatpush.msra.mxu0 0.0
      %1828 = vmatpush.msra.mxu0 0.0
      %1829 = vmatpush.msra.mxu0 0.0
      %1830 = vmatpush.msra.mxu0 0.0
      %1831 = vmatpush.msra.mxu0 0.0
      %1832 = vmatpush.msra.mxu0 0.0
      %1833 = vmatpush.msra.mxu0 0.0
      %1834 = vmatpush.msra.mxu0 %v1495
      %1835 = vmatpush.msra.mxu0 %v1475
      %1836 = vmatmul.f32.gmra.mxu0 %v1818
      %v1837 = vpop.f32.mrf.mxu0
      %v1838 = vadd.f32 0.0, %v1837
      %1839 = vdwg.mxu0
      %1840 = vmatpush.msra.mxu0 0.0
      %1841 = vmatpush.msra.mxu0 0.0
      %1842 = vmatpush.msra.mxu0 0.0
      %1843 = vmatpush.msra.mxu0 0.0
      %1844 = vmatpush.msra.mxu0 0.0
      %1845 = vmatpush.msra.mxu0 0.0
      %1846 = vmatpush.msra.mxu0 0.0
      %1847 = vmatpush.msra.mxu0 0.0
      %1848 = vmatpush.msra.mxu0 0.0
      %1849 = vmatpush.msra.mxu0 0.0
      %1850 = vmatpush.msra.mxu0 0.0
      %1851 = vmatpush.msra.mxu0 0.0
      %1852 = vmatpush.msra.mxu0 0.0
      %1853 = vmatpush.msra.mxu0 0.0
      %1854 = vmatpush.msra.mxu0 %v1518
      %1855 = vmatpush.msra.mxu0 %v1477
      %1856 = vmatmul.f32.gmra.mxu0 %v1818
      %v1857 = vpop.f32.mrf.mxu0
      %v1858 = vadd.f32 0.0, %v1857
      %1859 = vdwg.mxu0
      %v1860 = vsub.f32 %v1838, %v1816
      %v1861 = vsub.f32 %v1858, %v1816
      %v1862 = vadd.f32 %v1860, %v1861
      %v1863 = vmul.f32 %v1861, 0.01
      %v1864 = vsub.f32 %v1802, %v1863
      %v1865 = vmax.f32 %v1864, -1.0
      %v1866 = vmin.f32 %v1865, 1.0
      %v1867 = vmul.f32 %v1860, 0.01
      %v1868 = vsub.f32 %v1806, %v1867
      %v1869 = vmax.f32 %v1868, -1.0
      %v1870 = vmin.f32 %v1869, 1.0
      %v1871 = vmul.f32 %v1862, 0.01
      %v1872 = vadd.f32 %v1816, %v1871
      %v1873 = vmul.f32 %v1816, 0.001
      %v1874 = vsub.f32 %v1872, %v1873
      %v1875 = vmul.f32 %v1866, %v1861
      %v1876 = vsub.f32 %v1874, %v1875
      %v1877 = vmul.f32 %v1870, %v1860
      %v1878 = vsub.f32 %v1876, %v1877
      %v1879 = vmax.f32 %v1878, -10.0
      %v1880 = vmin.f32 %v1879, 10.0
      %v1882 = vsel %vm1489, %v1880, 0
      %1884 = vmatpush.msra.mxu0 0.0
      %1885 = vmatpush.msra.mxu0 0.0
      %1886 = vmatpush.msra.mxu0 0.0
      %1887 = vmatpush.msra.mxu0 0.0
      %1888 = vmatpush.msra.mxu0 0.0
      %1889 = vmatpush.msra.mxu0 0.0
      %1890 = vmatpush.msra.mxu0 0.0
      %1891 = vmatpush.msra.mxu0 0.0
      %1892 = vmatpush.msra.mxu0 0.0
      %1893 = vmatpush.msra.mxu0 0.0
      %1894 = vmatpush.msra.mxu0 0.0
      %1895 = vmatpush.msra.mxu0 0.0
      %1896 = vmatpush.msra.mxu0 0.0
      %1897 = vmatpush.msra.mxu0 0.0
      %1898 = vmatpush.msra.mxu0 %v1495
      %1899 = vmatpush.msra.mxu0 %v1475
      %1900 = vmatmul.f32.gmra.mxu0 %v1882
      %v1901 = vpop.f32.mrf.mxu0
      %v1902 = vadd.f32 0.0, %v1901
      %1903 = vdwg.mxu0
      %1904 = vmatpush.msra.mxu0 0.0
      %1905 = vmatpush.msra.mxu0 0.0
      %1906 = vmatpush.msra.mxu0 0.0
      %1907 = vmatpush.msra.mxu0 0.0
      %1908 = vmatpush.msra.mxu0 0.0
      %1909 = vmatpush.msra.mxu0 0.0
      %1910 = vmatpush.msra.mxu0 0.0
      %1911 = vmatpush.msra.mxu0 0.0
      %1912 = vmatpush.msra.mxu0 0.0
      %1913 = vmatpush.msra.mxu0 0.0
      %1914 = vmatpush.msra.mxu0 0.0
      %1915 = vmatpush.msra.mxu0 0.0
      %1916 = vmatpush.msra.mxu0 0.0
      %1917 = vmatpush.msra.mxu0 0.0
      %1918 = vmatpush.msra.mxu0 %v1518
      %1919 = vmatpush.msra.mxu0 %v1477
      %1920 = vmatmul.f32.gmra.mxu0 %v1882
      %v1921 = vpop.f32.mrf.mxu0
      %v1922 = vadd.f32 0.0, %v1921
      %1923 = vdwg.mxu0
      %v1924 = vsub.f32 %v1902, %v1880
      %v1925 = vsub.f32 %v1922, %v1880
      %v1926 = vadd.f32 %v1924, %v1925
      %v1927 = vmul.f32 %v1925, 0.01
      %v1928 = vsub.f32 %v1866, %v1927
      %v1929 = vmax.f32 %v1928, -1.0
      %v1930 = vmin.f32 %v1929, 1.0
      %v1931 = vmul.f32 %v1924, 0.01
      %v1932 = vsub.f32 %v1870, %v1931
      %v1933 = vmax.f32 %v1932, -1.0
      %v1934 = vmin.f32 %v1933, 1.0
      %v1935 = vmul.f32 %v1926, 0.01
      %v1936 = vadd.f32 %v1880, %v1935
      %v1937 = vmul.f32 %v1880, 0.001
      %v1938 = vsub.f32 %v1936, %v1937
      %v1939 = vmul.f32 %v1930, %v1925
      %v1940 = vsub.f32 %v1938, %v1939
      %v1941 = vmul.f32 %v1934, %v1924
      %v1942 = vsub.f32 %v1940, %v1941
      %v1943 = vmax.f32 %v1942, -10.0
      %v1944 = vmin.f32 %v1943, 10.0
      %v1946 = vsel %vm1489, %v1944, 0
      %1948 = vmatpush.msra.mxu0 0.0
      %1949 = vmatpush.msra.mxu0 0.0
      %1950 = vmatpush.msra.mxu0 0.0
      %1951 = vmatpush.msra.mxu0 0.0
      %1952 = vmatpush.msra.mxu0 0.0
      %1953 = vmatpush.msra.mxu0 0.0
      %1954 = vmatpush.msra.mxu0 0.0
      %1955 = vmatpush.msra.mxu0 0.0
      %1956 = vmatpush.msra.mxu0 0.0
      %1957 = vmatpush.msra.mxu0 0.0
      %1958 = vmatpush.msra.mxu0 0.0
      %1959 = vmatpush.msra.mxu0 0.0
      %1960 = vmatpush.msra.mxu0 0.0
      %1961 = vmatpush.msra.mxu0 0.0
      %1962 = vmatpush.msra.mxu0 %v1495
      %1963 = vmatpush.msra.mxu0 %v1475
      %1964 = vmatmul.f32.gmra.mxu0 %v1946
      %v1965 = vpop.f32.mrf.mxu0
      %v1966 = vadd.f32 0.0, %v1965
      %1967 = vdwg.mxu0
      %1968 = vmatpush.msra.mxu0 0.0
      %1969 = vmatpush.msra.mxu0 0.0
      %1970 = vmatpush.msra.mxu0 0.0
      %1971 = vmatpush.msra.mxu0 0.0
      %1972 = vmatpush.msra.mxu0 0.0
      %1973 = vmatpush.msra.mxu0 0.0
      %1974 = vmatpush.msra.mxu0 0.0
      %1975 = vmatpush.msra.mxu0 0.0
      %1976 = vmatpush.msra.mxu0 0.0
      %1977 = vmatpush.msra.mxu0 0.0
      %1978 = vmatpush.msra.mxu0 0.0
      %1979 = vmatpush.msra.mxu0 0.0
      %1980 = vmatpush.msra.mxu0 0.0
      %1981 = vmatpush.msra.mxu0 0.0
      %1982 = vmatpush.msra.mxu0 %v1518
      %1983 = vmatpush.msra.mxu0 %v1477
      %1984 = vmatmul.f32.gmra.mxu0 %v1946
      %v1985 = vpop.f32.mrf.mxu0
      %v1986 = vadd.f32 0.0, %v1985
      %1987 = vdwg.mxu0
      %v1988 = vsub.f32 %v1966, %v1944
      %v1989 = vsub.f32 %v1986, %v1944
      %v1990 = vadd.f32 %v1988, %v1989
      %v1991 = vmul.f32 %v1989, 0.01
      %v1992 = vsub.f32 %v1930, %v1991
      %v1993 = vmax.f32 %v1992, -1.0
      %v1994 = vmin.f32 %v1993, 1.0
      %v1995 = vmul.f32 %v1988, 0.01
      %v1996 = vsub.f32 %v1934, %v1995
      %v1997 = vmax.f32 %v1996, -1.0
      %v1998 = vmin.f32 %v1997, 1.0
      %v1999 = vmul.f32 %v1990, 0.01
      %v2000 = vadd.f32 %v1944, %v1999
      %v2001 = vmul.f32 %v1944, 0.001
      %v2002 = vsub.f32 %v2000, %v2001
      %v2003 = vmul.f32 %v1994, %v1989
      %v2004 = vsub.f32 %v2002, %v2003
      %v2005 = vmul.f32 %v1998, %v1988
      %v2006 = vsub.f32 %v2004, %v2005
      %v2007 = vmax.f32 %v2006, -10.0
      %v2008 = vmin.f32 %v2007, 10.0
      %v2010 = vsel %vm1489, %v2008, 0
      %2012 = vmatpush.msra.mxu0 0.0
      %2013 = vmatpush.msra.mxu0 0.0
      %2014 = vmatpush.msra.mxu0 0.0
      %2015 = vmatpush.msra.mxu0 0.0
      %2016 = vmatpush.msra.mxu0 0.0
      %2017 = vmatpush.msra.mxu0 0.0
      %2018 = vmatpush.msra.mxu0 0.0
      %2019 = vmatpush.msra.mxu0 0.0
      %2020 = vmatpush.msra.mxu0 0.0
      %2021 = vmatpush.msra.mxu0 0.0
      %2022 = vmatpush.msra.mxu0 0.0
      %2023 = vmatpush.msra.mxu0 0.0
      %2024 = vmatpush.msra.mxu0 0.0
      %2025 = vmatpush.msra.mxu0 0.0
      %2026 = vmatpush.msra.mxu0 %v1495
      %2027 = vmatpush.msra.mxu0 %v1475
      %2028 = vmatmul.f32.gmra.mxu0 %v2010
      %v2029 = vpop.f32.mrf.mxu0
      %v2030 = vadd.f32 0.0, %v2029
      %2031 = vdwg.mxu0
      %2032 = vmatpush.msra.mxu0 0.0
      %2033 = vmatpush.msra.mxu0 0.0
      %2034 = vmatpush.msra.mxu0 0.0
      %2035 = vmatpush.msra.mxu0 0.0
      %2036 = vmatpush.msra.mxu0 0.0
      %2037 = vmatpush.msra.mxu0 0.0
      %2038 = vmatpush.msra.mxu0 0.0
      %2039 = vmatpush.msra.mxu0 0.0
      %2040 = vmatpush.msra.mxu0 0.0
      %2041 = vmatpush.msra.mxu0 0.0
      %2042 = vmatpush.msra.mxu0 0.0
      %2043 = vmatpush.msra.mxu0 0.0
      %2044 = vmatpush.msra.mxu0 0.0
      %2045 = vmatpush.msra.mxu0 0.0
      %2046 = vmatpush.msra.mxu0 %v1518
      %2047 = vmatpush.msra.mxu0 %v1477
      %2048 = vmatmul.f32.gmra.mxu0 %v2010
      %v2049 = vpop.f32.mrf.mxu0
      %v2050 = vadd.f32 0.0, %v2049
      %2051 = vdwg.mxu0
      %v2052 = vsub.f32 %v2030, %v2008
      %v2053 = vsub.f32 %v2050, %v2008
      %v2054 = vadd.f32 %v2052, %v2053
      %v2055 = vmul.f32 %v2053, 0.01
      %v2056 = vsub.f32 %v1994, %v2055
      %v2057 = vmax.f32 %v2056, -1.0
      %v2058 = vmin.f32 %v2057, 1.0
      %v2059 = vmul.f32 %v2052, 0.01
      %v2060 = vsub.f32 %v1998, %v2059
      %v2061 = vmax.f32 %v2060, -1.0
      %v2062 = vmin.f32 %v2061, 1.0
      %v2063 = vmul.f32 %v2054, 0.01
      %v2064 = vadd.f32 %v2008, %v2063
      %v2065 = vmul.f32 %v2008, 0.001
      %v2066 = vsub.f32 %v2064, %v2065
      %v2067 = vmul.f32 %v2058, %v2053
      %v2068 = vsub.f32 %v2066, %v2067
      %v2069 = vmul.f32 %v2062, %v2052
      %v2070 = vsub.f32 %v2068, %v2069
      %v2071 = vmax.f32 %v2070, -10.0
      %v2072 = vmin.f32 %v2071, 10.0
      %v2074 = vsel %vm1489, %v2072, 0
      %2076 = vmatpush.msra.mxu0 0.0
      %2077 = vmatpush.msra.mxu0 0.0
      %2078 = vmatpush.msra.mxu0 0.0
      %2079 = vmatpush.msra.mxu0 0.0
      %2080 = vmatpush.msra.mxu0 0.0
      %2081 = vmatpush.msra.mxu0 0.0
      %2082 = vmatpush.msra.mxu0 0.0
      %2083 = vmatpush.msra.mxu0 0.0
      %2084 = vmatpush.msra.mxu0 0.0
      %2085 = vmatpush.msra.mxu0 0.0
      %2086 = vmatpush.msra.mxu0 0.0
      %2087 = vmatpush.msra.mxu0 0.0
      %2088 = vmatpush.msra.mxu0 0.0
      %2089 = vmatpush.msra.mxu0 0.0
      %2090 = vmatpush.msra.mxu0 %v1495
      %2091 = vmatpush.msra.mxu0 %v1475
      %2092 = vmatmul.f32.gmra.mxu0 %v2074
      %v2093 = vpop.f32.mrf.mxu0
      %v2094 = vadd.f32 0.0, %v2093
      %2095 = vdwg.mxu0
      %2096 = vmatpush.msra.mxu0 0.0
      %2097 = vmatpush.msra.mxu0 0.0
      %2098 = vmatpush.msra.mxu0 0.0
      %2099 = vmatpush.msra.mxu0 0.0
      %2100 = vmatpush.msra.mxu0 0.0
      %2101 = vmatpush.msra.mxu0 0.0
      %2102 = vmatpush.msra.mxu0 0.0
      %2103 = vmatpush.msra.mxu0 0.0
      %2104 = vmatpush.msra.mxu0 0.0
      %2105 = vmatpush.msra.mxu0 0.0
      %2106 = vmatpush.msra.mxu0 0.0
      %2107 = vmatpush.msra.mxu0 0.0
      %2108 = vmatpush.msra.mxu0 0.0
      %2109 = vmatpush.msra.mxu0 0.0
      %2110 = vmatpush.msra.mxu0 %v1518
      %2111 = vmatpush.msra.mxu0 %v1477
      %2112 = vmatmul.f32.gmra.mxu0 %v2074
      %v2113 = vpop.f32.mrf.mxu0
      %v2114 = vadd.f32 0.0, %v2113
      %2115 = vdwg.mxu0
      %v2116 = vsub.f32 %v2094, %v2072
      %v2117 = vsub.f32 %v2114, %v2072
      %v2118 = vadd.f32 %v2116, %v2117
      %v2119 = vmul.f32 %v2117, 0.01
      %v2120 = vsub.f32 %v2058, %v2119
      %v2121 = vmax.f32 %v2120, -1.0
      %v2122 = vmin.f32 %v2121, 1.0
      %v2123 = vmul.f32 %v2116, 0.01
      %v2124 = vsub.f32 %v2062, %v2123
      %v2125 = vmax.f32 %v2124, -1.0
      %v2126 = vmin.f32 %v2125, 1.0
      %v2127 = vmul.f32 %v2118, 0.01
      %v2128 = vadd.f32 %v2072, %v2127
      %v2129 = vmul.f32 %v2072, 0.001
      %v2130 = vsub.f32 %v2128, %v2129
      %v2131 = vmul.f32 %v2122, %v2117
      %v2132 = vsub.f32 %v2130, %v2131
      %v2133 = vmul.f32 %v2126, %v2116
      %v2134 = vsub.f32 %v2132, %v2133
      %v2135 = vmax.f32 %v2134, -10.0
      %v2136 = vmin.f32 %v2135, 10.0
      %vm2137 = vcmask 73728
      %2138 = vst.msk [vmem:[#allocation12] sm:$0x1] %vm2137, %v2122
      %2139 = vst.msk [vmem:[#allocation12 + $0x1] sm:$0x1] %vm2137, %v2126
      %s2140 = scalar_lea.vmem [#allocation6], %s1480
      %2141 = vst.msk [vmem:[%s2140] sm:$0x1] %vm2137, %v2136
    $region64: #{fully_fluid_network.1} parent=1 // loop_footer
      %s1484 = sadd.s32 1, %s1480
    $region65: #{fully_fluid_network.1} parent=1 // loop_footer_branch
      %1479 = sbr.rel target = $region61
    $region66: #{fully_fluid_network.1} parent=1 // loop_exit
      _
    %v2142 = vld [vmem:[#allocation6] sm:$0x3]
    %v2143 = vsel %vm1471, %v2142, -inf
    %2144 = vmax.xlane.f32.xlu0 %v2143
    %v2145 = vpop.xlane.xlu0 %2144
    %v2146 = vsub.f32 %v2142, %v2145
    %v2147 = vmul.f32 %v2146, 1.442695
    %v2148 = vpow.pop %v2147
    %v2149 = vsel %vm1471, %v2148, 0.0
    %2150 = vadd.xlane.f32.xlu0 %v2149
    %v2151 = vpop.xlane.xlu0 %2150
    %v2152 = vlog2.pop %v2151
    %v2153 = vmul.f32 %v2152, 0.6931472
    %v2154 = vsub.f32 %v2146, %v2153
    %2155 = vst.msk [vmem:[#allocation7] sm:$0x3] %vm1471, %v2154
    // Predicated region
    $region67: #{fully_fluid_network.1} parent=1 // pred_check
      _
    $region68: #{fully_fluid_network.1} parent=1 // pred_check_branch
      %2157 = sbr.rel (0) target = $region70
    $region69: #{fully_fluid_network.1} parent=1 // pred_region
      %2159 = vsyncadd [#allocation8], 0
      %s2161 = sshll.u32 [#allocation7], 4
      %s2162 = int_to_ptr.vmem [resolvable:$true] %s2161
      %s2163 = sshll.u32 %s11, 4
      %s2164 = int_to_ptr.hbm [resolvable:$true] %s2163
      %2166 = dma.vmem_to_hbm [thread:$0]  %s2162, 32, %s2164, [#allocation8]
    $region70: #{fully_fluid_network.1} parent=1 // pred_fallthru
      _
    // Predicated region
    $region71: #{fully_fluid_network.1} parent=1 // pred_check
      _
    $region72: #{fully_fluid_network.1} parent=1 // pred_check_branch
      %2168 = sbr.rel (0) target = $region74
    $region73: #{fully_fluid_network.1} parent=1 // pred_region
      %2170 = vsyncadd [#allocation10], 0
      %s2172 = sshll.u32 [#allocation9], 4
      %s2173 = int_to_ptr.vmem [resolvable:$true] %s2172
      %s2174 = sshll.u32 %s12, 4
      %s2175 = int_to_ptr.hbm [resolvable:$true] %s2174
      %2177 = dma.vmem_to_hbm [thread:$0]  %s2173, 32, %s2175, [#allocation10]
    $region74: #{fully_fluid_network.1} parent=1 // pred_fallthru
      _
    // Predicated region
    $region75: #{fully_fluid_network.1} parent=1 // pred_check
      _
    $region76: #{fully_fluid_network.1} parent=1 // pred_check_branch
      %2179 = sbr.rel (0) target = $region78
    $region77: #{fully_fluid_network.1} parent=1 // pred_region
      %2181 = vsyncadd [#allocation10], 0
      %s2183 = sshll.u32 [#allocation11], 4
      %s2184 = int_to_ptr.vmem [resolvable:$true] %s2183
      %s2185 = sshll.u32 %s13, 4
      %s2186 = int_to_ptr.hbm [resolvable:$true] %s2185
      %2188 = dma.vmem_to_hbm [thread:$0]  %s2184, 32, %s2186, [#allocation10]
    $region78: #{fully_fluid_network.1} parent=1 // pred_fallthru
      _
    // Predicated region
    $region79: #{fully_fluid_network.1} parent=1 // pred_check
      _
    $region80: #{fully_fluid_network.1} parent=1 // pred_check_branch
      %2190 = sbr.rel (0) target = $region82
    $region81: #{fully_fluid_network.1} parent=1 // pred_region
      %2192 = vsyncadd [#allocation13], 0
      %s2194 = sshll.u32 [#allocation12], 4
      %s2195 = int_to_ptr.vmem [resolvable:$true] %s2194
      %s2196 = sshll.u32 %s14, 4
      %s2197 = int_to_ptr.hbm [resolvable:$true] %s2196
      %2199 = dma.vmem_to_hbm [thread:$0]  %s2195, 32, %s2197, [#allocation13]
    $region82: #{fully_fluid_network.1} parent=1 // pred_fallthru
      _
    // Predicated region
    $region83: #{fully_fluid_network.1} parent=1 // pred_check
      _
    $region84: #{fully_fluid_network.1} parent=1 // pred_check_branch
      %2201 = sbr.rel (0) target = $region86
    $region85: #{fully_fluid_network.1} parent=1 // pred_region
      %2203 = dma.done [#allocation8], 32
    $region86: #{fully_fluid_network.1} parent=1 // pred_fallthru
      _
    // Predicated region
    $region87: #{fully_fluid_network.1} parent=1 // pred_check
      _
    $region88: #{fully_fluid_network.1} parent=1 // pred_check_branch
      %2205 = sbr.rel (0) target = $region90
    $region89: #{fully_fluid_network.1} parent=1 // pred_region
      %2207 = dma.done [#allocation10], 32
    $region90: #{fully_fluid_network.1} parent=1 // pred_fallthru
      _
    // Predicated region
    $region91: #{fully_fluid_network.1} parent=1 // pred_check
      _
    $region92: #{fully_fluid_network.1} parent=1 // pred_check_branch
      %2209 = sbr.rel (0) target = $region94
    $region93: #{fully_fluid_network.1} parent=1 // pred_region
      %2211 = dma.done [#allocation10], 32
    $region94: #{fully_fluid_network.1} parent=1 // pred_fallthru
      _
    // Predicated region
    $region95: #{fully_fluid_network.1} parent=1 // pred_check
      _
    $region96: #{fully_fluid_network.1} parent=1 // pred_check_branch
      %2213 = sbr.rel (0) target = $region98
    $region97: #{fully_fluid_network.1} parent=1 // pred_region
      %2215 = dma.done [#allocation13], 32
    $region98: #{fully_fluid_network.1} parent=1 // pred_fallthru
      _
    %2216 = vsyncpa [#allocation8], 1
    %2217 = vsyncpa [#allocation10], 1
    %2218 = vsyncpa [#allocation13], 1

</llo_original>
